<compile_context>
chip_gen: v7x
topology: tpu7x:2x2x1
jax: 0.10.0
libtpu: 0.0.40
codegen_flags: <defaults>
</compile_context>

<pallas_src>
import functools

import jax
import jax.numpy as jnp
from jax import lax
from jax.experimental import pallas as pl
from jax.experimental.pallas import tpu as pltpu


def _attention_core(get_q, get_k, get_v, wo_ref, bo_ref, out_ref, acc_ref,
                    *, num_heads, head_dim, exp_dtype):
    """Per-query-tile attention.

    get_q/get_k/get_v(lo, hi) return the (rows, head_dim) slice of the
    projected Q/K/V for head columns [lo, hi).  They slice *Refs*, so only one
    head's (rows, Dh) block is ever loaded into vregs at a time.
    """
    for h in range(num_heads):
        lo = h * head_dim
        hi = lo + head_dim
        qh = get_q(lo, hi)                                   # (Tq, Dh)
        kh = get_k(lo, hi)                                   # (S,  Dh)
        vh = get_v(lo, hi)                                   # (S,  Dh)

        # scores = qh @ kh^T, contracting the last dims (MXU-native, no
        # transposed tile is materialized).
        s = lax.dot_general(qh, kh,
                            dimension_numbers=(((1,), (1,)), ((), ())),
                            preferred_element_type=jnp.float32)   # (Tq, S) f32

        # Numerically-stable softmax; 1/sqrt(Dh) is folded into Wq/bq already.
        # exp runs in exp_dtype (bf16 for 16-bit inputs -> 2x EUP throughput on
        # v6e/v7x); row max / row sum / reciprocal stay in f32.
        s = s - jnp.max(s, axis=-1, keepdims=True)
        p = jnp.exp(s.astype(exp_dtype))
        denom = jnp.sum(p, axis=-1, keepdims=True, dtype=jnp.float32)
        inv = pl.reciprocal(denom, approx=True)              # EUP slot
        inv = inv * (2.0 - denom * inv)                      # one Newton step
        p = (p * inv.astype(exp_dtype)).astype(vh.dtype)

        # Write this head's output straight into its lane slice of the
        # accumulator slab (bounds live ranges to one head, no concat copies).
        acc_ref[:, lo:hi] = jnp.dot(p, vh, preferred_element_type=jnp.float32)

    out = jnp.dot(acc_ref[...].astype(wo_ref.dtype), wo_ref[...],
                  preferred_element_type=jnp.float32) + bo_ref[0]
    out_ref[0] = out.astype(out_ref.dtype)


def _project_rows_loop(dst_ref, src_ref, w_ref, b_ref, *, proj_chunk):
    """Chunked y = x @ W + b over the row axis, written into dst_ref.

    Chunking bounds the f32 matmul temporary to (proj_chunk, width) instead of
    materializing a full (S, width) f32 slab at the qi == 0 step.
    """
    n_chunks = dst_ref.shape[0] // proj_chunk

    def body(c, carry):
        start = pl.multiple_of(c * proj_chunk, proj_chunk)
        rows = pl.ds(start, proj_chunk)
        dst_ref[rows, :] = (
            jnp.dot(src_ref[0, rows, :], w_ref[...],
                    preferred_element_type=jnp.float32)
            + b_ref[0]).astype(dst_ref.dtype)
        return carry

    lax.fori_loop(0, n_chunks, body, 0)


def _mha_cross_kernel(q_ref, k_ref, v_ref,
                      wq_ref, bq_ref, wk_ref, bk_ref, wv_ref, bv_ref,
                      wo_ref, bo_ref,
                      out_ref,
                      kproj_ref, vproj_ref, qproj_ref, acc_ref,
                      *, num_heads, head_dim, proj_chunk, exp_dtype):
    qi = pl.program_id(1)

    # K / V projections computed once per batch element and cached in VMEM.
    @pl.when(qi == 0)
    def _():
        _project_rows_loop(kproj_ref, k_ref, wk_ref, bk_ref,
                           proj_chunk=proj_chunk)
        _project_rows_loop(vproj_ref, v_ref, wv_ref, bv_ref,
                           proj_chunk=proj_chunk)

    # Q projection for this query tile (Wq/bq pre-scaled by 1/sqrt(Dh)),
    # stored in a small VMEM scratch so per-head reads slice a Ref, not a value.
    qproj_ref[...] = (
        jnp.dot(q_ref[0], wq_ref[...], preferred_element_type=jnp.float32)
        + bq_ref[0]).astype(qproj_ref.dtype)

    _attention_core(
        lambda lo, hi: qproj_ref[:, lo:hi],
        lambda lo, hi: kproj_ref[:, lo:hi],
        lambda lo, hi: vproj_ref[:, lo:hi],
        wo_ref, bo_ref, out_ref, acc_ref,
        num_heads=num_heads, head_dim=head_dim, exp_dtype=exp_dtype)


def _mha_self_kernel(x_ref, wqkv_ref, bqkv_ref, wo_ref, bo_ref,
                     out_ref,
                     qkv_ref, acc_ref,
                     *, num_heads, head_dim, block_q, proj_chunk, exp_dtype):
    qi = pl.program_id(1)
    E = num_heads * head_dim

    # Fused QKV projection: (chunk, E) x (E, 3E) matmuls, once per batch elem.
    @pl.when(qi == 0)
    def _():
        _project_rows_loop(qkv_ref, x_ref, wqkv_ref, bqkv_ref,
                           proj_chunk=proj_chunk)

    start = pl.multiple_of(qi * block_q, block_q)
    q_rows = pl.ds(start, block_q)

    _attention_core(
        lambda lo, hi: qkv_ref[q_rows, lo:hi],               # Q: tile rows only
        lambda lo, hi: qkv_ref[:, E + lo:E + hi],
        lambda lo, hi: qkv_ref[:, 2 * E + lo:2 * E + hi],
        wo_ref, bo_ref, out_ref, acc_ref,
        num_heads=num_heads, head_dim=head_dim, exp_dtype=exp_dtype)


def _vmem_limit_bytes():
    # v5e/v6e have 128 MiB physical VMEM, v7x has 64 MiB; the default scoped
    # limit needlessly throttles the resident K/V caches.  Leave ~12.5%
    # headroom for compiler-internal scratch.
    try:
        cap = int(pltpu.get_tpu_info().vmem_capacity_bytes)
    except Exception:  # interpret mode / API drift: stay conservative.
        cap = 64 * 1024 * 1024
    return (min(cap, 128 * 1024 * 1024) * 7) // 8


def multi_head_attention(query, key, value, params, *, num_heads,
                         block_q=256, self_attention=None, cache_dtype=None):
    """query: [B, Sq, E]; key/value: [B, Sk, E].  params: pre-transposed weights.

    If ``self_attention=True`` the key/value arguments are assumed identical to
    ``query`` and ignored (single activation DMA + fused (E, 3E) QKV matmul).
    Pass the flag explicitly under jit — the identity-based autodetection only
    works for eager calls.
    """
    B, Sq, E = query.shape
    assert key.shape == value.shape and key.shape[0] == B and key.shape[2] == E
    Sk = key.shape[1]
    head_dim = E // num_heads
    assert head_dim * num_heads == E, "embedding_dim must be divisible by num_heads"
    scaling = float(head_dim) ** (-0.5)

    block_q = min(block_q, Sq)
    assert Sq % block_q == 0, "Sq must be divisible by the query tile size"
    assert block_q % 8 == 0 or block_q == Sq, "query tile must be 8-aligned"
    nq = Sq // block_q
    proj_chunk = 512 if Sk % 512 == 0 else Sk

    cdt = jnp.dtype(cache_dtype) if cache_dtype is not None else query.dtype
    exp_dtype = (cdt if (jnp.issubdtype(cdt, jnp.floating)
                         and jnp.dtype(cdt).itemsize <= 2) else jnp.float32)

    if self_attention is None:
        self_attention = (query is key) and (key is value)
    if self_attention:
        assert Sq == Sk

    # Fold the 1/sqrt(Dh) scaling into the query projection (wrapper-side, free).
    wq = (params["wq"] * scaling).astype(params["wq"].dtype)
    bq = (params["bq"] * scaling).astype(params["bq"].dtype)

    cparams = pltpu.CompilerParams(
        dimension_semantics=("parallel", "arbitrary"),
        vmem_limit_bytes=_vmem_limit_bytes())
    out_shape = jax.ShapeDtypeStruct((B, Sq, E), query.dtype)

    def build_and_call(single_buffer):
        def const_spec(shape, index_map):
            # Blocks fetched once (or once per batch) don't need double buffers.
            if single_buffer:
                return pl.BlockSpec(shape, index_map,
                                    pipeline_mode=pl.Buffered(1))
            return pl.BlockSpec(shape, index_map)

        q_tile = pl.BlockSpec((1, block_q, E), lambda b, qi: (b, qi, 0))
        out_spec = pl.BlockSpec((1, block_q, E), lambda b, qi: (b, qi, 0))
        kv_slab = const_spec((1, Sk, E), lambda b, qi: (b, 0, 0))
        w_spec = const_spec((E, E), lambda b, qi: (0, 0))
        b_spec = const_spec((1, E), lambda b, qi: (0, 0))

        if self_attention:
            wqkv = jnp.concatenate([wq, params["wk"], params["wv"]], axis=1)
            bqkv = jnp.concatenate([bq, params["bk"], params["bv"]], axis=1)
            kernel = functools.partial(
                _mha_self_kernel, num_heads=num_heads, head_dim=head_dim,
                block_q=block_q, proj_chunk=proj_chunk, exp_dtype=exp_dtype)
            x_slab = const_spec((1, Sq, E), lambda b, qi: (b, 0, 0))
            return pl.pallas_call(
                kernel,
                out_shape=out_shape,
                grid_spec=pltpu.PrefetchScalarGridSpec(
                    num_scalar_prefetch=0,
                    grid=(B, nq),
                    in_specs=[x_slab,
                              const_spec((E, 3 * E), lambda b, qi: (0, 0)),
                              const_spec((1, 3 * E), lambda b, qi: (0, 0)),
                              w_spec, b_spec],
                    out_specs=out_spec,
                    scratch_shapes=[pltpu.VMEM((Sq, 3 * E), cdt),      # QKV cache
                                    pltpu.VMEM((block_q, E), jnp.float32)]),
                compiler_params=cparams,
            )(query, wqkv, bqkv, params["wo"], params["bo"])

        kernel = functools.partial(
            _mha_cross_kernel, num_heads=num_heads, head_dim=head_dim,
            proj_chunk=proj_chunk, exp_dtype=exp_dtype)
        return pl.pallas_call(
            kernel,
            out_shape=out_shape,
            grid_spec=pltpu.PrefetchScalarGridSpec(
                num_scalar_prefetch=0,
                grid=(B, nq),
                in_specs=[q_tile, kv_slab, kv_slab,
                          w_spec, b_spec,   # q proj (pre-scaled)
                          w_spec, b_spec,   # k proj
                          w_spec, b_spec,   # v proj
                          w_spec, b_spec],  # out proj
                out_specs=out_spec,
                scratch_shapes=[pltpu.VMEM((Sk, E), cdt),              # K cache
                                pltpu.VMEM((Sk, E), cdt),              # V cache
                                pltpu.VMEM((block_q, E), cdt),         # Q tile proj
                                pltpu.VMEM((block_q, E), jnp.float32)]),  # head acc
            compiler_params=cparams,
        )(query, key, value,
          wq, bq, params["wk"], params["bk"], params["wv"], params["bv"],
          params["wo"], params["bo"])

    try:
        return build_and_call(True)
    except Exception:
        # Fallback for jax versions where pipeline_mode=pl.Buffered(1) is not
        # supported on pallas_call BlockSpecs.
        return build_and_call(False)


def _reference_mha(query, key, value, params, *, num_heads):
    """Pure-JAX reference mirroring the PyTorch forward pass."""
    B, Sq, E = query.shape
    Dh = E // num_heads
    scaling = float(Dh) ** (-0.5)

    def proj(x, w, b):
        return x @ w + b[0]

    def split_heads(x):
        b, s, _ = x.shape
        return x.reshape(b, s, num_heads, Dh).transpose(0, 2, 1, 3)

    q = split_heads(proj(query, params["wq"], params["bq"]))
    k = split_heads(proj(key, params["wk"], params["bk"]))
    v = split_heads(proj(value, params["wv"], params["bv"]))

    scores = jnp.einsum("bhqd,bhkd->bhqk", q, k) * scaling
    attn_w = jax.nn.softmax(scores, axis=-1)
    attn = jnp.einsum("bhqk,bhkd->bhqd", attn_w, v)
    attn = attn.transpose(0, 2, 1, 3).reshape(B, Sq, E)
    return attn @ params["wo"] + params["bo"][0]


if __name__ == "__main__":
    B, S, E = 2, 8, 32
    num_heads = 4

    key0 = jax.random.PRNGKey(0)
    keys = jax.random.split(key0, 11)

    # Deterministic synthetic parameters. Weights are stored as [E_in, E_out]
    # (pre-transposed relative to torch.nn.Linear's [out, in] convention).
    scale = 1.0 / jnp.sqrt(E)
    params = {
        "wq": jax.random.normal(keys[0], (E, E), jnp.float32) * scale,
        "bq": jax.random.normal(keys[1], (1, E), jnp.float32) * 0.1,
        "wk": jax.random.normal(keys[2], (E, E), jnp.float32) * scale,
        "bk": jax.random.normal(keys[3], (1, E), jnp.float32) * 0.1,
        "wv": jax.random.normal(keys[4], (E, E), jnp.float32) * scale,
        "bv": jax.random.normal(keys[5], (1, E), jnp.float32) * 0.1,
        "wo": jax.random.normal(keys[6], (E, E), jnp.float32) * scale,
        "bo": jax.random.normal(keys[7], (1, E), jnp.float32) * 0.1,
    }

    query = jax.random.normal(keys[8], (B, S, E), jnp.float32)
    key_in = jax.random.normal(keys[9], (B, S, E), jnp.float32)
    value = jax.random.normal(keys[10], (B, S, E), jnp.float32)

    # 1) General cross-attention path (distinct q / k / v).
    out = multi_head_attention(query, key_in, value, params, num_heads=num_heads)
    out = jax.block_until_ready(out)
    ref = _reference_mha(query, key_in, value, params, num_heads=num_heads)
    assert out.shape == (B, S, E)
    assert jnp.allclose(out, ref, atol=2e-4, rtol=2e-4), \
        "cross-attn mismatch vs JAX reference"

    # 2) Self-attention fast path (explicit flag -> fused QKV, single DMA).
    out_self = multi_head_attention(query, query, query, params,
                                    num_heads=num_heads, self_attention=True)
    out_self = jax.block_until_ready(out_self)
    ref_self = _reference_mha(query, query, query, params, num_heads=num_heads)
    assert jnp.allclose(out_self, ref_self, atol=2e-4, rtol=2e-4), \
        "self-attn mismatch vs JAX reference"

    print("KERNEL_OK")
</pallas_src>

<mosaic_0001>
module attributes {stable_mosaic.version = 11 : i64} {
  func.func @_mha_cross_kernel(%arg0: i32, %arg1: i32, %arg2: memref<1x8x32xf32, #tpu.memory_space<vmem>>, %arg3: memref<1x8x32xf32, #tpu.memory_space<vmem>>, %arg4: memref<1x8x32xf32, #tpu.memory_space<vmem>>, %arg5: memref<32x32xf32, #tpu.memory_space<vmem>>, %arg6: memref<1x32xf32, #tpu.memory_space<vmem>>, %arg7: memref<32x32xf32, #tpu.memory_space<vmem>>, %arg8: memref<1x32xf32, #tpu.memory_space<vmem>>, %arg9: memref<32x32xf32, #tpu.memory_space<vmem>>, %arg10: memref<1x32xf32, #tpu.memory_space<vmem>>, %arg11: memref<32x32xf32, #tpu.memory_space<vmem>>, %arg12: memref<1x32xf32, #tpu.memory_space<vmem>>, %arg13: memref<1x8x32xf32, #tpu.memory_space<vmem>>, %arg14: memref<8x32xf32, #tpu.memory_space<vmem>>, %arg15: memref<8x32xf32, #tpu.memory_space<vmem>>, %arg16: memref<8x32xf32, #tpu.memory_space<vmem>>, %arg17: memref<8x32xf32, #tpu.memory_space<vmem>>) attributes {dimension_semantics = [#tpu.dimension_semantics<parallel>, #tpu.dimension_semantics<arbitrary>], iteration_bounds = array<i64: 2, 1>, scalar_prefetch = 0 : i64, scratch_operands = 4 : i64, tpu.core_type = #tpu.core_type<tc>, window_params = [{transform_indices = @transform_0, window_bounds = array<i64: 1, 8, 32>}, {pipeline_mode = #tpu.pipeline_mode<synchronous>, transform_indices = @transform_1, window_bounds = array<i64: 1, 8, 32>}, {pipeline_mode = #tpu.pipeline_mode<synchronous>, transform_indices = @transform_2, window_bounds = array<i64: 1, 8, 32>}, {pipeline_mode = #tpu.pipeline_mode<synchronous>, transform_indices = @transform_3, window_bounds = array<i64: 32, 32>}, {pipeline_mode = #tpu.pipeline_mode<synchronous>, transform_indices = @transform_4, window_bounds = array<i64: 1, 32>}, {pipeline_mode = #tpu.pipeline_mode<synchronous>, transform_indices = @transform_5, window_bounds = array<i64: 32, 32>}, {pipeline_mode = #tpu.pipeline_mode<synchronous>, transform_indices = @transform_6, window_bounds = array<i64: 1, 32>}, {pipeline_mode = #tpu.pipeline_mode<synchronous>, transform_indices = @transform_7, window_bounds = array<i64: 32, 32>}, {pipeline_mode = #tpu.pipeline_mode<synchronous>, transform_indices = @transform_8, window_bounds = array<i64: 1, 32>}, {pipeline_mode = #tpu.pipeline_mode<synchronous>, transform_indices = @transform_9, window_bounds = array<i64: 32, 32>}, {pipeline_mode = #tpu.pipeline_mode<synchronous>, transform_indices = @transform_10, window_bounds = array<i64: 1, 32>}, {transform_indices = @transform_11, window_bounds = array<i64: 1, 8, 32>}]} {
    %c0_i32 = arith.constant 0 : i32
    %0 = arith.cmpi eq, %arg1, %c0_i32 : i32
    %1 = arith.extui %0 : i1 to i32
    %c0_i32_0 = arith.constant 0 : i32
    %2 = arith.cmpi ne, %1, %c0_i32_0 : i32
    scf.if %2 {
      %c0_i32_68 = arith.constant 0 : i32
      %c8_i32 = arith.constant 8 : i32
      %104 = arith.muli %c0_i32_68, %c8_i32 : i32
      %105 = tpu.assume_multiple %104, 8 : i32
      %c0_69 = arith.constant 0 : index
      %106 = arith.index_cast %105 : i32 to index
      %c0_70 = arith.constant 0 : index
      %107 = vector.load %arg3[%c0_69, %106, %c0_70] : memref<1x8x32xf32, #tpu.memory_space<vmem>>, vector<1x8x32xf32>
      %108 = vector.shape_cast %107 : vector<1x8x32xf32> to vector<8x32xf32>
      %c0_71 = arith.constant 0 : index
      %c0_72 = arith.constant 0 : index
      %109 = vector.load %arg7[%c0_71, %c0_72] : memref<32x32xf32, #tpu.memory_space<vmem>>, vector<32x32xf32>
      %cst_73 = arith.constant dense<0.000000e+00> : vector<8x32xf32>
      %110 = tpu.matmul %108, %109, %cst_73 {dimension_numbers = #tpu.dot_dimension_numbers<[1], [0], [0], [1], [0, 0, 1, 1], [], []>} : vector<8x32xf32>, vector<32x32xf32>, vector<8x32xf32> -> vector<8x32xf32>
      %c0_74 = arith.constant 0 : index
      %c0_75 = arith.constant 0 : index
      %111 = vector.load %arg8[%c0_74, %c0_75] : memref<1x32xf32, #tpu.memory_space<vmem>>, vector<1x32xf32>
      %112 = vector.shape_cast %111 : vector<1x32xf32> to vector<32xf32>
      %113 = vector.shape_cast %112 : vector<32xf32> to vector<1x32xf32>
      %114 = vector.broadcast %113 : vector<1x32xf32> to vector<8x32xf32>
      %115 = arith.addf %110, %114 : vector<8x32xf32>
      %116 = arith.index_cast %105 : i32 to index
      %c0_76 = arith.constant 0 : index
      %117 = vector.load %arg14[%116, %c0_76] : memref<8x32xf32, #tpu.memory_space<vmem>>, vector<8x32xf32>
      tpu.vector_store %arg14[%116, %c0_76], %115 {strides = array<i32>} : memref<8x32xf32, #tpu.memory_space<vmem>>, vector<8x32xf32>,
      %c1_i32 = arith.constant 1 : i32
      %c0_i32_77 = arith.constant 0 : i32
      %c8_i32_78 = arith.constant 8 : i32
      %118 = arith.muli %c0_i32_77, %c8_i32_78 : i32
      %119 = tpu.assume_multiple %118, 8 : i32
      %c0_79 = arith.constant 0 : index
      %120 = arith.index_cast %119 : i32 to index
      %c0_80 = arith.constant 0 : index
      %121 = vector.load %arg4[%c0_79, %120, %c0_80] : memref<1x8x32xf32, #tpu.memory_space<vmem>>, vector<1x8x32xf32>
      %122 = vector.shape_cast %121 : vector<1x8x32xf32> to vector<8x32xf32>
      %c0_81 = arith.constant 0 : index
      %c0_82 = arith.constant 0 : index
      %123 = vector.load %arg9[%c0_81, %c0_82] : memref<32x32xf32, #tpu.memory_space<vmem>>, vector<32x32xf32>
      %cst_83 = arith.constant dense<0.000000e+00> : vector<8x32xf32>
      %124 = tpu.matmul %122, %123, %cst_83 {dimension_numbers = #tpu.dot_dimension_numbers<[1], [0], [0], [1], [0, 0, 1, 1], [], []>} : vector<8x32xf32>, vector<32x32xf32>, vector<8x32xf32> -> vector<8x32xf32>
      %c0_84 = arith.constant 0 : index
      %c0_85 = arith.constant 0 : index
      %125 = vector.load %arg10[%c0_84, %c0_85] : memref<1x32xf32, #tpu.memory_space<vmem>>, vector<1x32xf32>
      %126 = vector.shape_cast %125 : vector<1x32xf32> to vector<32xf32>
      %127 = vector.shape_cast %126 : vector<32xf32> to vector<1x32xf32>
      %128 = vector.broadcast %127 : vector<1x32xf32> to vector<8x32xf32>
      %129 = arith.addf %124, %128 : vector<8x32xf32>
      %130 = arith.index_cast %119 : i32 to index
      %c0_86 = arith.constant 0 : index
      %131 = vector.load %arg15[%130, %c0_86] : memref<8x32xf32, #tpu.memory_space<vmem>>, vector<8x32xf32>
      tpu.vector_store %arg15[%130, %c0_86], %129 {strides = array<i32>} : memref<8x32xf32, #tpu.memory_space<vmem>>, vector<8x32xf32>,
      %c1_i32_87 = arith.constant 1 : i32
    } else {
    }
    %c0 = arith.constant 0 : index
    %c0_1 = arith.constant 0 : index
    %c0_2 = arith.constant 0 : index
    %3 = vector.load %arg2[%c0, %c0_1, %c0_2] : memref<1x8x32xf32, #tpu.memory_space<vmem>>, vector<1x8x32xf32>
    %4 = vector.shape_cast %3 : vector<1x8x32xf32> to vector<8x32xf32>
    %c0_3 = arith.constant 0 : index
    %c0_4 = arith.constant 0 : index
    %5 = vector.load %arg5[%c0_3, %c0_4] : memref<32x32xf32, #tpu.memory_space<vmem>>, vector<32x32xf32>
    %cst = arith.constant dense<0.000000e+00> : vector<8x32xf32>
    %6 = tpu.matmul %4, %5, %cst {dimension_numbers = #tpu.dot_dimension_numbers<[1], [0], [0], [1], [0, 0, 1, 1], [], []>} : vector<8x32xf32>, vector<32x32xf32>, vector<8x32xf32> -> vector<8x32xf32>
    %c0_5 = arith.constant 0 : index
    %c0_6 = arith.constant 0 : index
    %7 = vector.load %arg6[%c0_5, %c0_6] : memref<1x32xf32, #tpu.memory_space<vmem>>, vector<1x32xf32>
    %8 = vector.shape_cast %7 : vector<1x32xf32> to vector<32xf32>
    %9 = vector.shape_cast %8 : vector<32xf32> to vector<1x32xf32>
    %10 = vector.broadcast %9 : vector<1x32xf32> to vector<8x32xf32>
    %11 = arith.addf %6, %10 : vector<8x32xf32>
    %c0_7 = arith.constant 0 : index
    %c0_8 = arith.constant 0 : index
    %12 = vector.load %arg16[%c0_7, %c0_8] : memref<8x32xf32, #tpu.memory_space<vmem>>, vector<8x32xf32>
    tpu.vector_store %arg16[%c0_7, %c0_8], %11 {strides = array<i32>} : memref<8x32xf32, #tpu.memory_space<vmem>>, vector<8x32xf32>,
    %c0_9 = arith.constant 0 : index
    %c0_10 = arith.constant 0 : index
    %13 = vector.load %arg16[%c0_9, %c0_10] : memref<8x32xf32, #tpu.memory_space<vmem>>, vector<8x8xf32>
    %c0_11 = arith.constant 0 : index
    %c0_12 = arith.constant 0 : index
    %14 = vector.load %arg14[%c0_11, %c0_12] : memref<8x32xf32, #tpu.memory_space<vmem>>, vector<8x8xf32>
    %c0_13 = arith.constant 0 : index
    %c0_14 = arith.constant 0 : index
    %15 = vector.load %arg15[%c0_13, %c0_14] : memref<8x32xf32, #tpu.memory_space<vmem>>, vector<8x8xf32>
    %cst_15 = arith.constant dense<0.000000e+00> : vector<8x8xf32>
    %16 = tpu.matmul %13, %14, %cst_15 {dimension_numbers = #tpu.dot_dimension_numbers<[1], [1], [0], [0], [0, 0, 1, 0], [], []>} : vector<8x8xf32>, vector<8x8xf32>, vector<8x8xf32> -> vector<8x8xf32>
    %cst_16 = arith.constant dense<0xFF800000> : vector<8xf32>
    %17 = vector.multi_reduction <maximumf>, %16, %cst_16 [1] : vector<8x8xf32> to vector<8xf32>
    %18 = vector.shape_cast %17 : vector<8xf32> to vector<8x1xf32>
    %19 = vector.broadcast %18 : vector<8x1xf32> to vector<8x8xf32>
    %20 = arith.subf %16, %19 : vector<8x8xf32>
    %21 = math.exp %20 : vector<8x8xf32>
    %cst_17 = arith.constant dense<0.000000e+00> : vector<8xf32>
    %22 = vector.multi_reduction <add>, %21, %cst_17 [1] : vector<8x8xf32> to vector<8xf32>
    %23 = vector.shape_cast %22 : vector<8xf32> to vector<8x1xf32>
    %24 = tpu.reciprocal %23 {approx = true} : vector<8x1xf32> -> vector<8x1xf32>
    %25 = arith.mulf %23, %24 : vector<8x1xf32>
    %cst_18 = arith.constant 2.000000e+00 : f32
    %26 = vector.broadcast %cst_18 : f32 to vector<8x1xf32>
    %27 = arith.subf %26, %25 : vector<8x1xf32>
    %28 = arith.mulf %24, %27 : vector<8x1xf32>
    %29 = vector.broadcast %28 : vector<8x1xf32> to vector<8x8xf32>
    %30 = arith.mulf %21, %29 : vector<8x8xf32>
    %cst_19 = arith.constant dense<0.000000e+00> : vector<8x8xf32>
    %31 = tpu.matmul %30, %15, %cst_19 {dimension_numbers = #tpu.dot_dimension_numbers<[1], [0], [0], [1], [0, 0, 1, 1], [], []>} : vector<8x8xf32>, vector<8x8xf32>, vector<8x8xf32> -> vector<8x8xf32>
    %c0_20 = arith.constant 0 : index
    %c0_21 = arith.constant 0 : index
    %32 = vector.load %arg17[%c0_20, %c0_21] : memref<8x32xf32, #tpu.memory_space<vmem>>, vector<8x8xf32>
    tpu.vector_store %arg17[%c0_20, %c0_21], %31 {strides = array<i32>} : memref<8x32xf32, #tpu.memory_space<vmem>>, vector<8x8xf32>,
    %c0_22 = arith.constant 0 : index
    %c8 = arith.constant 8 : index
    %33 = vector.load %arg16[%c0_22, %c8] : memref<8x32xf32, #tpu.memory_space<vmem>>, vector<8x8xf32>
    %c0_23 = arith.constant 0 : index
    %c8_24 = arith.constant 8 : index
    %34 = vector.load %arg14[%c0_23, %c8_24] : memref<8x32xf32, #tpu.memory_space<vmem>>, vector<8x8xf32>
    %c0_25 = arith.constant 0 : index
    %c8_26 = arith.constant 8 : index
    %35 = vector.load %arg15[%c0_25, %c8_26] : memref<8x32xf32, #tpu.memory_space<vmem>>, vector<8x8xf32>
    %cst_27 = arith.constant dense<0.000000e+00> : vector<8x8xf32>
    %36 = tpu.matmul %33, %34, %cst_27 {dimension_numbers = #tpu.dot_dimension_numbers<[1], [1], [0], [0], [0, 0, 1, 0], [], []>} : vector<8x8xf32>, vector<8x8xf32>, vector<8x8xf32> -> vector<8x8xf32>
    %cst_28 = arith.constant dense<0xFF800000> : vector<8xf32>
    %37 = vector.multi_reduction <maximumf>, %36, %cst_28 [1] : vector<8x8xf32> to vector<8xf32>
    %38 = vector.shape_cast %37 : vector<8xf32> to vector<8x1xf32>
    %39 = vector.broadcast %38 : vector<8x1xf32> to vector<8x8xf32>
    %40 = arith.subf %36, %39 : vector<8x8xf32>
    %41 = math.exp %40 : vector<8x8xf32>
    %cst_29 = arith.constant dense<0.000000e+00> : vector<8xf32>
    %42 = vector.multi_reduction <add>, %41, %cst_29 [1] : vector<8x8xf32> to vector<8xf32>
    %43 = vector.shape_cast %42 : vector<8xf32> to vector<8x1xf32>
    %44 = tpu.reciprocal %43 {approx = true} : vector<8x1xf32> -> vector<8x1xf32>
    %45 = arith.mulf %43, %44 : vector<8x1xf32>
    %cst_30 = arith.constant 2.000000e+00 : f32
    %46 = vector.broadcast %cst_30 : f32 to vector<8x1xf32>
    %47 = arith.subf %46, %45 : vector<8x1xf32>
    %48 = arith.mulf %44, %47 : vector<8x1xf32>
    %49 = vector.broadcast %48 : vector<8x1xf32> to vector<8x8xf32>
    %50 = arith.mulf %41, %49 : vector<8x8xf32>
    %cst_31 = arith.constant dense<0.000000e+00> : vector<8x8xf32>
    %51 = tpu.matmul %50, %35, %cst_31 {dimension_numbers = #tpu.dot_dimension_numbers<[1], [0], [0], [1], [0, 0, 1, 1], [], []>} : vector<8x8xf32>, vector<8x8xf32>, vector<8x8xf32> -> vector<8x8xf32>
    %c0_32 = arith.constant 0 : index
    %c8_33 = arith.constant 8 : index
    %52 = vector.load %arg17[%c0_32, %c8_33] : memref<8x32xf32, #tpu.memory_space<vmem>>, vector<8x8xf32>
    tpu.vector_store %arg17[%c0_32, %c8_33], %51 {strides = array<i32>} : memref<8x32xf32, #tpu.memory_space<vmem>>, vector<8x8xf32>,
    %c0_34 = arith.constant 0 : index
    %c16 = arith.constant 16 : index
    %53 = vector.load %arg16[%c0_34, %c16] : memref<8x32xf32, #tpu.memory_space<vmem>>, vector<8x8xf32>
    %c0_35 = arith.constant 0 : index
    %c16_36 = arith.constant 16 : index
    %54 = vector.load %arg14[%c0_35, %c16_36] : memref<8x32xf32, #tpu.memory_space<vmem>>, vector<8x8xf32>
    %c0_37 = arith.constant 0 : index
    %c16_38 = arith.constant 16 : index
    %55 = vector.load %arg15[%c0_37, %c16_38] : memref<8x32xf32, #tpu.memory_space<vmem>>, vector<8x8xf32>
    %cst_39 = arith.constant dense<0.000000e+00> : vector<8x8xf32>
    %56 = tpu.matmul %53, %54, %cst_39 {dimension_numbers = #tpu.dot_dimension_numbers<[1], [1], [0], [0], [0, 0, 1, 0], [], []>} : vector<8x8xf32>, vector<8x8xf32>, vector<8x8xf32> -> vector<8x8xf32>
    %cst_40 = arith.constant dense<0xFF800000> : vector<8xf32>
    %57 = vector.multi_reduction <maximumf>, %56, %cst_40 [1] : vector<8x8xf32> to vector<8xf32>
    %58 = vector.shape_cast %57 : vector<8xf32> to vector<8x1xf32>
    %59 = vector.broadcast %58 : vector<8x1xf32> to vector<8x8xf32>
    %60 = arith.subf %56, %59 : vector<8x8xf32>
    %61 = math.exp %60 : vector<8x8xf32>
    %cst_41 = arith.constant dense<0.000000e+00> : vector<8xf32>
    %62 = vector.multi_reduction <add>, %61, %cst_41 [1] : vector<8x8xf32> to vector<8xf32>
    %63 = vector.shape_cast %62 : vector<8xf32> to vector<8x1xf32>
    %64 = tpu.reciprocal %63 {approx = true} : vector<8x1xf32> -> vector<8x1xf32>
    %65 = arith.mulf %63, %64 : vector<8x1xf32>
    %cst_42 = arith.constant 2.000000e+00 : f32
    %66 = vector.broadcast %cst_42 : f32 to vector<8x1xf32>
    %67 = arith.subf %66, %65 : vector<8x1xf32>
    %68 = arith.mulf %64, %67 : vector<8x1xf32>
    %69 = vector.broadcast %68 : vector<8x1xf32> to vector<8x8xf32>
    %70 = arith.mulf %61, %69 : vector<8x8xf32>
    %cst_43 = arith.constant dense<0.000000e+00> : vector<8x8xf32>
    %71 = tpu.matmul %70, %55, %cst_43 {dimension_numbers = #tpu.dot_dimension_numbers<[1], [0], [0], [1], [0, 0, 1, 1], [], []>} : vector<8x8xf32>, vector<8x8xf32>, vector<8x8xf32> -> vector<8x8xf32>
    %c0_44 = arith.constant 0 : index
    %c16_45 = arith.constant 16 : index
    %72 = vector.load %arg17[%c0_44, %c16_45] : memref<8x32xf32, #tpu.memory_space<vmem>>, vector<8x8xf32>
    tpu.vector_store %arg17[%c0_44, %c16_45], %71 {strides = array<i32>} : memref<8x32xf32, #tpu.memory_space<vmem>>, vector<8x8xf32>,
    %c0_46 = arith.constant 0 : index
    %c24 = arith.constant 24 : index
    %73 = vector.load %arg16[%c0_46, %c24] : memref<8x32xf32, #tpu.memory_space<vmem>>, vector<8x8xf32>
    %c0_47 = arith.constant 0 : index
    %c24_48 = arith.constant 24 : index
    %74 = vector.load %arg14[%c0_47, %c24_48] : memref<8x32xf32, #tpu.memory_space<vmem>>, vector<8x8xf32>
    %c0_49 = arith.constant 0 : index
    %c24_50 = arith.constant 24 : index
    %75 = vector.load %arg15[%c0_49, %c24_50] : memref<8x32xf32, #tpu.memory_space<vmem>>, vector<8x8xf32>
    %cst_51 = arith.constant dense<0.000000e+00> : vector<8x8xf32>
    %76 = tpu.matmul %73, %74, %cst_51 {dimension_numbers = #tpu.dot_dimension_numbers<[1], [1], [0], [0], [0, 0, 1, 0], [], []>} : vector<8x8xf32>, vector<8x8xf32>, vector<8x8xf32> -> vector<8x8xf32>
    %cst_52 = arith.constant dense<0xFF800000> : vector<8xf32>
    %77 = vector.multi_reduction <maximumf>, %76, %cst_52 [1] : vector<8x8xf32> to vector<8xf32>
    %78 = vector.shape_cast %77 : vector<8xf32> to vector<8x1xf32>
    %79 = vector.broadcast %78 : vector<8x1xf32> to vector<8x8xf32>
    %80 = arith.subf %76, %79 : vector<8x8xf32>
    %81 = math.exp %80 : vector<8x8xf32>
    %cst_53 = arith.constant dense<0.000000e+00> : vector<8xf32>
    %82 = vector.multi_reduction <add>, %81, %cst_53 [1] : vector<8x8xf32> to vector<8xf32>
    %83 = vector.shape_cast %82 : vector<8xf32> to vector<8x1xf32>
    %84 = tpu.reciprocal %83 {approx = true} : vector<8x1xf32> -> vector<8x1xf32>
    %85 = arith.mulf %83, %84 : vector<8x1xf32>
    %cst_54 = arith.constant 2.000000e+00 : f32
    %86 = vector.broadcast %cst_54 : f32 to vector<8x1xf32>
    %87 = arith.subf %86, %85 : vector<8x1xf32>
    %88 = arith.mulf %84, %87 : vector<8x1xf32>
    %89 = vector.broadcast %88 : vector<8x1xf32> to vector<8x8xf32>
    %90 = arith.mulf %81, %89 : vector<8x8xf32>
    %cst_55 = arith.constant dense<0.000000e+00> : vector<8x8xf32>
    %91 = tpu.matmul %90, %75, %cst_55 {dimension_numbers = #tpu.dot_dimension_numbers<[1], [0], [0], [1], [0, 0, 1, 1], [], []>} : vector<8x8xf32>, vector<8x8xf32>, vector<8x8xf32> -> vector<8x8xf32>
    %c0_56 = arith.constant 0 : index
    %c24_57 = arith.constant 24 : index
    %92 = vector.load %arg17[%c0_56, %c24_57] : memref<8x32xf32, #tpu.memory_space<vmem>>, vector<8x8xf32>
    tpu.vector_store %arg17[%c0_56, %c24_57], %91 {strides = array<i32>} : memref<8x32xf32, #tpu.memory_space<vmem>>, vector<8x8xf32>,
    %c0_58 = arith.constant 0 : index
    %c0_59 = arith.constant 0 : index
    %93 = vector.load %arg17[%c0_58, %c0_59] : memref<8x32xf32, #tpu.memory_space<vmem>>, vector<8x32xf32>
    %c0_60 = arith.constant 0 : index
    %c0_61 = arith.constant 0 : index
    %94 = vector.load %arg11[%c0_60, %c0_61] : memref<32x32xf32, #tpu.memory_space<vmem>>, vector<32x32xf32>
    %cst_62 = arith.constant dense<0.000000e+00> : vector<8x32xf32>
    %95 = tpu.matmul %93, %94, %cst_62 {dimension_numbers = #tpu.dot_dimension_numbers<[1], [0], [0], [1], [0, 0, 1, 1], [], []>} : vector<8x32xf32>, vector<32x32xf32>, vector<8x32xf32> -> vector<8x32xf32>
    %c0_63 = arith.constant 0 : index
    %c0_64 = arith.constant 0 : index
    %96 = vector.load %arg12[%c0_63, %c0_64] : memref<1x32xf32, #tpu.memory_space<vmem>>, vector<1x32xf32>
    %97 = vector.shape_cast %96 : vector<1x32xf32> to vector<32xf32>
    %98 = vector.shape_cast %97 : vector<32xf32> to vector<1x32xf32>
    %99 = vector.broadcast %98 : vector<1x32xf32> to vector<8x32xf32>
    %100 = arith.addf %95, %99 : vector<8x32xf32>
    %c0_65 = arith.constant 0 : index
    %c0_66 = arith.constant 0 : index
    %c0_67 = arith.constant 0 : index
    %101 = vector.load %arg13[%c0_65, %c0_66, %c0_67] : memref<1x8x32xf32, #tpu.memory_space<vmem>>, vector<1x8x32xf32>
    %102 = vector.shape_cast %101 : vector<1x8x32xf32> to vector<8x32xf32>
    %103 = vector.shape_cast %100 : vector<8x32xf32> to vector<1x8x32xf32>
    tpu.vector_store %arg13[%c0_65, %c0_66, %c0_67], %103 {strides = array<i32>} : memref<1x8x32xf32, #tpu.memory_space<vmem>>, vector<1x8x32xf32>,
    return
  }
  func.func @transform_0(%arg0: i32, %arg1: i32) -> (i32, i32, i32) {
    %c0_i32 = arith.constant 0 : i32
    %c0_i32_0 = arith.constant 0 : i32
    return %arg0, %arg1, %c0_i32 : i32, i32, i32
  }
  func.func @transform_1(%arg0: i32, %arg1: i32) -> (i32, i32, i32) {
    %c0_i32 = arith.constant 0 : i32
    %c0_i32_0 = arith.constant 0 : i32
    %c0_i32_1 = arith.constant 0 : i32
    return %arg0, %c0_i32, %c0_i32_0 : i32, i32, i32
  }
  func.func @transform_2(%arg0: i32, %arg1: i32) -> (i32, i32, i32) {
    %c0_i32 = arith.constant 0 : i32
    %c0_i32_0 = arith.constant 0 : i32
    %c0_i32_1 = arith.constant 0 : i32
    return %arg0, %c0_i32, %c0_i32_0 : i32, i32, i32
  }
  func.func @transform_3(%arg0: i32, %arg1: i32) -> (i32, i32) {
    %c0_i32 = arith.constant 0 : i32
    %c0_i32_0 = arith.constant 0 : i32
    %c0_i32_1 = arith.constant 0 : i32
    return %c0_i32, %c0_i32_0 : i32, i32
  }
  func.func @transform_4(%arg0: i32, %arg1: i32) -> (i32, i32) {
    %c0_i32 = arith.constant 0 : i32
    %c0_i32_0 = arith.constant 0 : i32
    %c0_i32_1 = arith.constant 0 : i32
    return %c0_i32, %c0_i32_0 : i32, i32
  }
  func.func @transform_5(%arg0: i32, %arg1: i32) -> (i32, i32) {
    %c0_i32 = arith.constant 0 : i32
    %c0_i32_0 = arith.constant 0 : i32
    %c0_i32_1 = arith.constant 0 : i32
    return %c0_i32, %c0_i32_0 : i32, i32
  }
  func.func @transform_6(%arg0: i32, %arg1: i32) -> (i32, i32) {
    %c0_i32 = arith.constant 0 : i32
    %c0_i32_0 = arith.constant 0 : i32
    %c0_i32_1 = arith.constant 0 : i32
    return %c0_i32, %c0_i32_0 : i32, i32
  }
  func.func @transform_7(%arg0: i32, %arg1: i32) -> (i32, i32) {
    %c0_i32 = arith.constant 0 : i32
    %c0_i32_0 = arith.constant 0 : i32
    %c0_i32_1 = arith.constant 0 : i32
    return %c0_i32, %c0_i32_0 : i32, i32
  }
  func.func @transform_8(%arg0: i32, %arg1: i32) -> (i32, i32) {
    %c0_i32 = arith.constant 0 : i32
    %c0_i32_0 = arith.constant 0 : i32
    %c0_i32_1 = arith.constant 0 : i32
    return %c0_i32, %c0_i32_0 : i32, i32
  }
  func.func @transform_9(%arg0: i32, %arg1: i32) -> (i32, i32) {
    %c0_i32 = arith.constant 0 : i32
    %c0_i32_0 = arith.constant 0 : i32
    %c0_i32_1 = arith.constant 0 : i32
    return %c0_i32, %c0_i32_0 : i32, i32
  }
  func.func @transform_10(%arg0: i32, %arg1: i32) -> (i32, i32) {
    %c0_i32 = arith.constant 0 : i32
    %c0_i32_0 = arith.constant 0 : i32
    %c0_i32_1 = arith.constant 0 : i32
    return %c0_i32, %c0_i32_0 : i32, i32
  }
  func.func @transform_11(%arg0: i32, %arg1: i32) -> (i32, i32, i32) {
    %c0_i32 = arith.constant 0 : i32
    %c0_i32_0 = arith.constant 0 : i32
    return %arg0, %arg1, %c0_i32 : i32, i32, i32
  }
}

module attributes {stable_mosaic.version = 11 : i64} {
  func.func @_mha_cross_kernel(%arg0: i32, %arg1: i32, %arg2: memref<1x8x32xf32, #tpu.memory_space<vmem>>, %arg3: memref<1x8x32xf32, #tpu.memory_space<vmem>>, %arg4: memref<1x8x32xf32, #tpu.memory_space<vmem>>, %arg5: memref<32x32xf32, #tpu.memory_space<vmem>>, %arg6: memref<1x32xf32, #tpu.memory_space<vmem>>, %arg7: memref<32x32xf32, #tpu.memory_space<vmem>>, %arg8: memref<1x32xf32, #tpu.memory_space<vmem>>, %arg9: memref<32x32xf32, #tpu.memory_space<vmem>>, %arg10: memref<1x32xf32, #tpu.memory_space<vmem>>, %arg11: memref<32x32xf32, #tpu.memory_space<vmem>>, %arg12: memref<1x32xf32, #tpu.memory_space<vmem>>, %arg13: memref<1x8x32xf32, #tpu.memory_space<vmem>>, %arg14: memref<8x32xf32, #tpu.memory_space<vmem>>, %arg15: memref<8x32xf32, #tpu.memory_space<vmem>>, %arg16: memref<8x32xf32, #tpu.memory_space<vmem>>, %arg17: memref<8x32xf32, #tpu.memory_space<vmem>>) attributes {dimension_semantics = [#tpu.dimension_semantics<parallel>, #tpu.dimension_semantics<arbitrary>], iteration_bounds = array<i64: 2, 1>, scalar_prefetch = 0 : i64, scratch_operands = 4 : i64, tpu.core_type = #tpu.core_type<tc>, window_params = [{transform_indices = @transform_0, window_bounds = array<i64: 1, 8, 32>}, {transform_indices = @transform_1, window_bounds = array<i64: 1, 8, 32>}, {transform_indices = @transform_2, window_bounds = array<i64: 1, 8, 32>}, {pipeline_mode = #tpu.pipeline_mode<synchronous>, transform_indices = @transform_3, window_bounds = array<i64: 32, 32>}, {pipeline_mode = #tpu.pipeline_mode<synchronous>, transform_indices = @transform_4, window_bounds = array<i64: 1, 32>}, {pipeline_mode = #tpu.pipeline_mode<synchronous>, transform_indices = @transform_5, window_bounds = array<i64: 32, 32>}, {pipeline_mode = #tpu.pipeline_mode<synchronous>, transform_indices = @transform_6, window_bounds = array<i64: 1, 32>}, {pipeline_mode = #tpu.pipeline_mode<synchronous>, transform_indices = @transform_7, window_bounds = array<i64: 32, 32>}, {pipeline_mode = #tpu.pipeline_mode<synchronous>, transform_indices = @transform_8, window_bounds = array<i64: 1, 32>}, {pipeline_mode = #tpu.pipeline_mode<synchronous>, transform_indices = @transform_9, window_bounds = array<i64: 32, 32>}, {pipeline_mode = #tpu.pipeline_mode<synchronous>, transform_indices = @transform_10, window_bounds = array<i64: 1, 32>}, {transform_indices = @transform_11, window_bounds = array<i64: 1, 8, 32>}]} {
    %c0_i32 = arith.constant 0 : i32
    %0 = arith.cmpi eq, %arg1, %c0_i32 : i32
    %1 = arith.extui %0 : i1 to i32
    %c0_i32_0 = arith.constant 0 : i32
    %2 = arith.cmpi ne, %1, %c0_i32_0 : i32
    scf.if %2 {
      %c0_i32_68 = arith.constant 0 : i32
      %c8_i32 = arith.constant 8 : i32
      %104 = arith.muli %c0_i32_68, %c8_i32 : i32
      %105 = tpu.assume_multiple %104, 8 : i32
      %c0_69 = arith.constant 0 : index
      %106 = arith.index_cast %105 : i32 to index
      %c0_70 = arith.constant 0 : index
      %107 = vector.load %arg3[%c0_69, %106, %c0_70] : memref<1x8x32xf32, #tpu.memory_space<vmem>>, vector<1x8x32xf32>
      %108 = vector.shape_cast %107 : vector<1x8x32xf32> to vector<8x32xf32>
      %c0_71 = arith.constant 0 : index
      %c0_72 = arith.constant 0 : index
      %109 = vector.load %arg7[%c0_71, %c0_72] : memref<32x32xf32, #tpu.memory_space<vmem>>, vector<32x32xf32>
      %cst_73 = arith.constant dense<0.000000e+00> : vector<8x32xf32>
      %110 = tpu.matmul %108, %109, %cst_73 {dimension_numbers = #tpu.dot_dimension_numbers<[1], [0], [0], [1], [0, 0, 1, 1], [], []>} : vector<8x32xf32>, vector<32x32xf32>, vector<8x32xf32> -> vector<8x32xf32>
      %c0_74 = arith.constant 0 : index
      %c0_75 = arith.constant 0 : index
      %111 = vector.load %arg8[%c0_74, %c0_75] : memref<1x32xf32, #tpu.memory_space<vmem>>, vector<1x32xf32>
      %112 = vector.shape_cast %111 : vector<1x32xf32> to vector<32xf32>
      %113 = vector.shape_cast %112 : vector<32xf32> to vector<1x32xf32>
      %114 = vector.broadcast %113 : vector<1x32xf32> to vector<8x32xf32>
      %115 = arith.addf %110, %114 : vector<8x32xf32>
      %116 = arith.index_cast %105 : i32 to index
      %c0_76 = arith.constant 0 : index
      %117 = vector.load %arg14[%116, %c0_76] : memref<8x32xf32, #tpu.memory_space<vmem>>, vector<8x32xf32>
      tpu.vector_store %arg14[%116, %c0_76], %115 {strides = array<i32>} : memref<8x32xf32, #tpu.memory_space<vmem>>, vector<8x32xf32>,
      %c1_i32 = arith.constant 1 : i32
      %c0_i32_77 = arith.constant 0 : i32
      %c8_i32_78 = arith.constant 8 : i32
      %118 = arith.muli %c0_i32_77, %c8_i32_78 : i32
      %119 = tpu.assume_multiple %118, 8 : i32
      %c0_79 = arith.constant 0 : index
      %120 = arith.index_cast %119 : i32 to index
      %c0_80 = arith.constant 0 : index
      %121 = vector.load %arg4[%c0_79, %120, %c0_80] : memref<1x8x32xf32, #tpu.memory_space<vmem>>, vector<1x8x32xf32>
      %122 = vector.shape_cast %121 : vector<1x8x32xf32> to vector<8x32xf32>
      %c0_81 = arith.constant 0 : index
      %c0_82 = arith.constant 0 : index
      %123 = vector.load %arg9[%c0_81, %c0_82] : memref<32x32xf32, #tpu.memory_space<vmem>>, vector<32x32xf32>
      %cst_83 = arith.constant dense<0.000000e+00> : vector<8x32xf32>
      %124 = tpu.matmul %122, %123, %cst_83 {dimension_numbers = #tpu.dot_dimension_numbers<[1], [0], [0], [1], [0, 0, 1, 1], [], []>} : vector<8x32xf32>, vector<32x32xf32>, vector<8x32xf32> -> vector<8x32xf32>
      %c0_84 = arith.constant 0 : index
      %c0_85 = arith.constant 0 : index
      %125 = vector.load %arg10[%c0_84, %c0_85] : memref<1x32xf32, #tpu.memory_space<vmem>>, vector<1x32xf32>
      %126 = vector.shape_cast %125 : vector<1x32xf32> to vector<32xf32>
      %127 = vector.shape_cast %126 : vector<32xf32> to vector<1x32xf32>
      %128 = vector.broadcast %127 : vector<1x32xf32> to vector<8x32xf32>
      %129 = arith.addf %124, %128 : vector<8x32xf32>
      %130 = arith.index_cast %119 : i32 to index
      %c0_86 = arith.constant 0 : index
      %131 = vector.load %arg15[%130, %c0_86] : memref<8x32xf32, #tpu.memory_space<vmem>>, vector<8x32xf32>
      tpu.vector_store %arg15[%130, %c0_86], %129 {strides = array<i32>} : memref<8x32xf32, #tpu.memory_space<vmem>>, vector<8x32xf32>,
      %c1_i32_87 = arith.constant 1 : i32
    } else {
    }
    %c0 = arith.constant 0 : index
    %c0_1 = arith.constant 0 : index
    %c0_2 = arith.constant 0 : index
    %3 = vector.load %arg2[%c0, %c0_1, %c0_2] : memref<1x8x32xf32, #tpu.memory_space<vmem>>, vector<1x8x32xf32>
    %4 = vector.shape_cast %3 : vector<1x8x32xf32> to vector<8x32xf32>
    %c0_3 = arith.constant 0 : index
    %c0_4 = arith.constant 0 : index
    %5 = vector.load %arg5[%c0_3, %c0_4] : memref<32x32xf32, #tpu.memory_space<vmem>>, vector<32x32xf32>
    %cst = arith.constant dense<0.000000e+00> : vector<8x32xf32>
    %6 = tpu.matmul %4, %5, %cst {dimension_numbers = #tpu.dot_dimension_numbers<[1], [0], [0], [1], [0, 0, 1, 1], [], []>} : vector<8x32xf32>, vector<32x32xf32>, vector<8x32xf32> -> vector<8x32xf32>
    %c0_5 = arith.constant 0 : index
    %c0_6 = arith.constant 0 : index
    %7 = vector.load %arg6[%c0_5, %c0_6] : memref<1x32xf32, #tpu.memory_space<vmem>>, vector<1x32xf32>
    %8 = vector.shape_cast %7 : vector<1x32xf32> to vector<32xf32>
    %9 = vector.shape_cast %8 : vector<32xf32> to vector<1x32xf32>
    %10 = vector.broadcast %9 : vector<1x32xf32> to vector<8x32xf32>
    %11 = arith.addf %6, %10 : vector<8x32xf32>
    %c0_7 = arith.constant 0 : index
    %c0_8 = arith.constant 0 : index
    %12 = vector.load %arg16[%c0_7, %c0_8] : memref<8x32xf32, #tpu.memory_space<vmem>>, vector<8x32xf32>
    tpu.vector_store %arg16[%c0_7, %c0_8], %11 {strides = array<i32>} : memref<8x32xf32, #tpu.memory_space<vmem>>, vector<8x32xf32>,
    %c0_9 = arith.constant 0 : index
    %c0_10 = arith.constant 0 : index
    %13 = vector.load %arg16[%c0_9, %c0_10] : memref<8x32xf32, #tpu.memory_space<vmem>>, vector<8x8xf32>
    %c0_11 = arith.constant 0 : index
    %c0_12 = arith.constant 0 : index
    %14 = vector.load %arg14[%c0_11, %c0_12] : memref<8x32xf32, #tpu.memory_space<vmem>>, vector<8x8xf32>
    %c0_13 = arith.constant 0 : index
    %c0_14 = arith.constant 0 : index
    %15 = vector.load %arg15[%c0_13, %c0_14] : memref<8x32xf32, #tpu.memory_space<vmem>>, vector<8x8xf32>
    %cst_15 = arith.constant dense<0.000000e+00> : vector<8x8xf32>
    %16 = tpu.matmul %13, %14, %cst_15 {dimension_numbers = #tpu.dot_dimension_numbers<[1], [1], [0], [0], [0, 0, 1, 0], [], []>} : vector<8x8xf32>, vector<8x8xf32>, vector<8x8xf32> -> vector<8x8xf32>
    %cst_16 = arith.constant dense<0xFF800000> : vector<8xf32>
    %17 = vector.multi_reduction <maximumf>, %16, %cst_16 [1] : vector<8x8xf32> to vector<8xf32>
    %18 = vector.shape_cast %17 : vector<8xf32> to vector<8x1xf32>
    %19 = vector.broadcast %18 : vector<8x1xf32> to vector<8x8xf32>
    %20 = arith.subf %16, %19 : vector<8x8xf32>
    %21 = math.exp %20 : vector<8x8xf32>
    %cst_17 = arith.constant dense<0.000000e+00> : vector<8xf32>
    %22 = vector.multi_reduction <add>, %21, %cst_17 [1] : vector<8x8xf32> to vector<8xf32>
    %23 = vector.shape_cast %22 : vector<8xf32> to vector<8x1xf32>
    %24 = tpu.reciprocal %23 {approx = true} : vector<8x1xf32> -> vector<8x1xf32>
    %25 = arith.mulf %23, %24 : vector<8x1xf32>
    %cst_18 = arith.constant 2.000000e+00 : f32
    %26 = vector.broadcast %cst_18 : f32 to vector<8x1xf32>
    %27 = arith.subf %26, %25 : vector<8x1xf32>
    %28 = arith.mulf %24, %27 : vector<8x1xf32>
    %29 = vector.broadcast %28 : vector<8x1xf32> to vector<8x8xf32>
    %30 = arith.mulf %21, %29 : vector<8x8xf32>
    %cst_19 = arith.constant dense<0.000000e+00> : vector<8x8xf32>
    %31 = tpu.matmul %30, %15, %cst_19 {dimension_numbers = #tpu.dot_dimension_numbers<[1], [0], [0], [1], [0, 0, 1, 1], [], []>} : vector<8x8xf32>, vector<8x8xf32>, vector<8x8xf32> -> vector<8x8xf32>
    %c0_20 = arith.constant 0 : index
    %c0_21 = arith.constant 0 : index
    %32 = vector.load %arg17[%c0_20, %c0_21] : memref<8x32xf32, #tpu.memory_space<vmem>>, vector<8x8xf32>
    tpu.vector_store %arg17[%c0_20, %c0_21], %31 {strides = array<i32>} : memref<8x32xf32, #tpu.memory_space<vmem>>, vector<8x8xf32>,
    %c0_22 = arith.constant 0 : index
    %c8 = arith.constant 8 : index
    %33 = vector.load %arg16[%c0_22, %c8] : memref<8x32xf32, #tpu.memory_space<vmem>>, vector<8x8xf32>
    %c0_23 = arith.constant 0 : index
    %c8_24 = arith.constant 8 : index
    %34 = vector.load %arg14[%c0_23, %c8_24] : memref<8x32xf32, #tpu.memory_space<vmem>>, vector<8x8xf32>
    %c0_25 = arith.constant 0 : index
    %c8_26 = arith.constant 8 : index
    %35 = vector.load %arg15[%c0_25, %c8_26] : memref<8x32xf32, #tpu.memory_space<vmem>>, vector<8x8xf32>
    %cst_27 = arith.constant dense<0.000000e+00> : vector<8x8xf32>
    %36 = tpu.matmul %33, %34, %cst_27 {dimension_numbers = #tpu.dot_dimension_numbers<[1], [1], [0], [0], [0, 0, 1, 0], [], []>} : vector<8x8xf32>, vector<8x8xf32>, vector<8x8xf32> -> vector<8x8xf32>
    %cst_28 = arith.constant dense<0xFF800000> : vector<8xf32>
    %37 = vector.multi_reduction <maximumf>, %36, %cst_28 [1] : vector<8x8xf32> to vector<8xf32>
    %38 = vector.shape_cast %37 : vector<8xf32> to vector<8x1xf32>
    %39 = vector.broadcast %38 : vector<8x1xf32> to vector<8x8xf32>
    %40 = arith.subf %36, %39 : vector<8x8xf32>
    %41 = math.exp %40 : vector<8x8xf32>
    %cst_29 = arith.constant dense<0.000000e+00> : vector<8xf32>
    %42 = vector.multi_reduction <add>, %41, %cst_29 [1] : vector<8x8xf32> to vector<8xf32>
    %43 = vector.shape_cast %42 : vector<8xf32> to vector<8x1xf32>
    %44 = tpu.reciprocal %43 {approx = true} : vector<8x1xf32> -> vector<8x1xf32>
    %45 = arith.mulf %43, %44 : vector<8x1xf32>
    %cst_30 = arith.constant 2.000000e+00 : f32
    %46 = vector.broadcast %cst_30 : f32 to vector<8x1xf32>
    %47 = arith.subf %46, %45 : vector<8x1xf32>
    %48 = arith.mulf %44, %47 : vector<8x1xf32>
    %49 = vector.broadcast %48 : vector<8x1xf32> to vector<8x8xf32>
    %50 = arith.mulf %41, %49 : vector<8x8xf32>
    %cst_31 = arith.constant dense<0.000000e+00> : vector<8x8xf32>
    %51 = tpu.matmul %50, %35, %cst_31 {dimension_numbers = #tpu.dot_dimension_numbers<[1], [0], [0], [1], [0, 0, 1, 1], [], []>} : vector<8x8xf32>, vector<8x8xf32>, vector<8x8xf32> -> vector<8x8xf32>
    %c0_32 = arith.constant 0 : index
    %c8_33 = arith.constant 8 : index
    %52 = vector.load %arg17[%c0_32, %c8_33] : memref<8x32xf32, #tpu.memory_space<vmem>>, vector<8x8xf32>
    tpu.vector_store %arg17[%c0_32, %c8_33], %51 {strides = array<i32>} : memref<8x32xf32, #tpu.memory_space<vmem>>, vector<8x8xf32>,
    %c0_34 = arith.constant 0 : index
    %c16 = arith.constant 16 : index
    %53 = vector.load %arg16[%c0_34, %c16] : memref<8x32xf32, #tpu.memory_space<vmem>>, vector<8x8xf32>
    %c0_35 = arith.constant 0 : index
    %c16_36 = arith.constant 16 : index
    %54 = vector.load %arg14[%c0_35, %c16_36] : memref<8x32xf32, #tpu.memory_space<vmem>>, vector<8x8xf32>
    %c0_37 = arith.constant 0 : index
    %c16_38 = arith.constant 16 : index
    %55 = vector.load %arg15[%c0_37, %c16_38] : memref<8x32xf32, #tpu.memory_space<vmem>>, vector<8x8xf32>
    %cst_39 = arith.constant dense<0.000000e+00> : vector<8x8xf32>
    %56 = tpu.matmul %53, %54, %cst_39 {dimension_numbers = #tpu.dot_dimension_numbers<[1], [1], [0], [0], [0, 0, 1, 0], [], []>} : vector<8x8xf32>, vector<8x8xf32>, vector<8x8xf32> -> vector<8x8xf32>
    %cst_40 = arith.constant dense<0xFF800000> : vector<8xf32>
    %57 = vector.multi_reduction <maximumf>, %56, %cst_40 [1] : vector<8x8xf32> to vector<8xf32>
    %58 = vector.shape_cast %57 : vector<8xf32> to vector<8x1xf32>
    %59 = vector.broadcast %58 : vector<8x1xf32> to vector<8x8xf32>
    %60 = arith.subf %56, %59 : vector<8x8xf32>
    %61 = math.exp %60 : vector<8x8xf32>
    %cst_41 = arith.constant dense<0.000000e+00> : vector<8xf32>
    %62 = vector.multi_reduction <add>, %61, %cst_41 [1] : vector<8x8xf32> to vector<8xf32>
    %63 = vector.shape_cast %62 : vector<8xf32> to vector<8x1xf32>
    %64 = tpu.reciprocal %63 {approx = true} : vector<8x1xf32> -> vector<8x1xf32>
    %65 = arith.mulf %63, %64 : vector<8x1xf32>
    %cst_42 = arith.constant 2.000000e+00 : f32
    %66 = vector.broadcast %cst_42 : f32 to vector<8x1xf32>
    %67 = arith.subf %66, %65 : vector<8x1xf32>
    %68 = arith.mulf %64, %67 : vector<8x1xf32>
    %69 = vector.broadcast %68 : vector<8x1xf32> to vector<8x8xf32>
    %70 = arith.mulf %61, %69 : vector<8x8xf32>
    %cst_43 = arith.constant dense<0.000000e+00> : vector<8x8xf32>
    %71 = tpu.matmul %70, %55, %cst_43 {dimension_numbers = #tpu.dot_dimension_numbers<[1], [0], [0], [1], [0, 0, 1, 1], [], []>} : vector<8x8xf32>, vector<8x8xf32>, vector<8x8xf32> -> vector<8x8xf32>
    %c0_44 = arith.constant 0 : index
    %c16_45 = arith.constant 16 : index
    %72 = vector.load %arg17[%c0_44, %c16_45] : memref<8x32xf32, #tpu.memory_space<vmem>>, vector<8x8xf32>
    tpu.vector_store %arg17[%c0_44, %c16_45], %71 {strides = array<i32>} : memref<8x32xf32, #tpu.memory_space<vmem>>, vector<8x8xf32>,
    %c0_46 = arith.constant 0 : index
    %c24 = arith.constant 24 : index
    %73 = vector.load %arg16[%c0_46, %c24] : memref<8x32xf32, #tpu.memory_space<vmem>>, vector<8x8xf32>
    %c0_47 = arith.constant 0 : index
    %c24_48 = arith.constant 24 : index
    %74 = vector.load %arg14[%c0_47, %c24_48] : memref<8x32xf32, #tpu.memory_space<vmem>>, vector<8x8xf32>
    %c0_49 = arith.constant 0 : index
    %c24_50 = arith.constant 24 : index
    %75 = vector.load %arg15[%c0_49, %c24_50] : memref<8x32xf32, #tpu.memory_space<vmem>>, vector<8x8xf32>
    %cst_51 = arith.constant dense<0.000000e+00> : vector<8x8xf32>
    %76 = tpu.matmul %73, %74, %cst_51 {dimension_numbers = #tpu.dot_dimension_numbers<[1], [1], [0], [0], [0, 0, 1, 0], [], []>} : vector<8x8xf32>, vector<8x8xf32>, vector<8x8xf32> -> vector<8x8xf32>
    %cst_52 = arith.constant dense<0xFF800000> : vector<8xf32>
    %77 = vector.multi_reduction <maximumf>, %76, %cst_52 [1] : vector<8x8xf32> to vector<8xf32>
    %78 = vector.shape_cast %77 : vector<8xf32> to vector<8x1xf32>
    %79 = vector.broadcast %78 : vector<8x1xf32> to vector<8x8xf32>
    %80 = arith.subf %76, %79 : vector<8x8xf32>
    %81 = math.exp %80 : vector<8x8xf32>
    %cst_53 = arith.constant dense<0.000000e+00> : vector<8xf32>
    %82 = vector.multi_reduction <add>, %81, %cst_53 [1] : vector<8x8xf32> to vector<8xf32>
    %83 = vector.shape_cast %82 : vector<8xf32> to vector<8x1xf32>
    %84 = tpu.reciprocal %83 {approx = true} : vector<8x1xf32> -> vector<8x1xf32>
    %85 = arith.mulf %83, %84 : vector<8x1xf32>
    %cst_54 = arith.constant 2.000000e+00 : f32
    %86 = vector.broadcast %cst_54 : f32 to vector<8x1xf32>
    %87 = arith.subf %86, %85 : vector<8x1xf32>
    %88 = arith.mulf %84, %87 : vector<8x1xf32>
    %89 = vector.broadcast %88 : vector<8x1xf32> to vector<8x8xf32>
    %90 = arith.mulf %81, %89 : vector<8x8xf32>
    %cst_55 = arith.constant dense<0.000000e+00> : vector<8x8xf32>
    %91 = tpu.matmul %90, %75, %cst_55 {dimension_numbers = #tpu.dot_dimension_numbers<[1], [0], [0], [1], [0, 0, 1, 1], [], []>} : vector<8x8xf32>, vector<8x8xf32>, vector<8x8xf32> -> vector<8x8xf32>
    %c0_56 = arith.constant 0 : index
    %c24_57 = arith.constant 24 : index
    %92 = vector.load %arg17[%c0_56, %c24_57] : memref<8x32xf32, #tpu.memory_space<vmem>>, vector<8x8xf32>
    tpu.vector_store %arg17[%c0_56, %c24_57], %91 {strides = array<i32>} : memref<8x32xf32, #tpu.memory_space<vmem>>, vector<8x8xf32>,
    %c0_58 = arith.constant 0 : index
    %c0_59 = arith.constant 0 : index
    %93 = vector.load %arg17[%c0_58, %c0_59] : memref<8x32xf32, #tpu.memory_space<vmem>>, vector<8x32xf32>
    %c0_60 = arith.constant 0 : index
    %c0_61 = arith.constant 0 : index
    %94 = vector.load %arg11[%c0_60, %c0_61] : memref<32x32xf32, #tpu.memory_space<vmem>>, vector<32x32xf32>
    %cst_62 = arith.constant dense<0.000000e+00> : vector<8x32xf32>
    %95 = tpu.matmul %93, %94, %cst_62 {dimension_numbers = #tpu.dot_dimension_numbers<[1], [0], [0], [1], [0, 0, 1, 1], [], []>} : vector<8x32xf32>, vector<32x32xf32>, vector<8x32xf32> -> vector<8x32xf32>
    %c0_63 = arith.constant 0 : index
    %c0_64 = arith.constant 0 : index
    %96 = vector.load %arg12[%c0_63, %c0_64] : memref<1x32xf32, #tpu.memory_space<vmem>>, vector<1x32xf32>
    %97 = vector.shape_cast %96 : vector<1x32xf32> to vector<32xf32>
    %98 = vector.shape_cast %97 : vector<32xf32> to vector<1x32xf32>
    %99 = vector.broadcast %98 : vector<1x32xf32> to vector<8x32xf32>
    %100 = arith.addf %95, %99 : vector<8x32xf32>
    %c0_65 = arith.constant 0 : index
    %c0_66 = arith.constant 0 : index
    %c0_67 = arith.constant 0 : index
    %101 = vector.load %arg13[%c0_65, %c0_66, %c0_67] : memref<1x8x32xf32, #tpu.memory_space<vmem>>, vector<1x8x32xf32>
    %102 = vector.shape_cast %101 : vector<1x8x32xf32> to vector<8x32xf32>
    %103 = vector.shape_cast %100 : vector<8x32xf32> to vector<1x8x32xf32>
    tpu.vector_store %arg13[%c0_65, %c0_66, %c0_67], %103 {strides = array<i32>} : memref<1x8x32xf32, #tpu.memory_space<vmem>>, vector<1x8x32xf32>,
    return
  }
  func.func @transform_0(%arg0: i32, %arg1: i32) -> (i32, i32, i32) {
    %c0_i32 = arith.constant 0 : i32
    %c0_i32_0 = arith.constant 0 : i32
    return %arg0, %arg1, %c0_i32 : i32, i32, i32
  }
  func.func @transform_1(%arg0: i32, %arg1: i32) -> (i32, i32, i32) {
    %c0_i32 = arith.constant 0 : i32
    %c0_i32_0 = arith.constant 0 : i32
    %c0_i32_1 = arith.constant 0 : i32
    return %arg0, %c0_i32, %c0_i32_0 : i32, i32, i32
  }
  func.func @transform_2(%arg0: i32, %arg1: i32) -> (i32, i32, i32) {
    %c0_i32 = arith.constant 0 : i32
    %c0_i32_0 = arith.constant 0 : i32
    %c0_i32_1 = arith.constant 0 : i32
    return %arg0, %c0_i32, %c0_i32_0 : i32, i32, i32
  }
  func.func @transform_3(%arg0: i32, %arg1: i32) -> (i32, i32) {
    %c0_i32 = arith.constant 0 : i32
    %c0_i32_0 = arith.constant 0 : i32
    %c0_i32_1 = arith.constant 0 : i32
    return %c0_i32, %c0_i32_0 : i32, i32
  }
  func.func @transform_4(%arg0: i32, %arg1: i32) -> (i32, i32) {
    %c0_i32 = arith.constant 0 : i32
    %c0_i32_0 = arith.constant 0 : i32
    %c0_i32_1 = arith.constant 0 : i32
    return %c0_i32, %c0_i32_0 : i32, i32
  }
  func.func @transform_5(%arg0: i32, %arg1: i32) -> (i32, i32) {
    %c0_i32 = arith.constant 0 : i32
    %c0_i32_0 = arith.constant 0 : i32
    %c0_i32_1 = arith.constant 0 : i32
    return %c0_i32, %c0_i32_0 : i32, i32
  }
  func.func @transform_6(%arg0: i32, %arg1: i32) -> (i32, i32) {
    %c0_i32 = arith.constant 0 : i32
    %c0_i32_0 = arith.constant 0 : i32
    %c0_i32_1 = arith.constant 0 : i32
    return %c0_i32, %c0_i32_0 : i32, i32
  }
  func.func @transform_7(%arg0: i32, %arg1: i32) -> (i32, i32) {
    %c0_i32 = arith.constant 0 : i32
    %c0_i32_0 = arith.constant 0 : i32
    %c0_i32_1 = arith.constant 0 : i32
    return %c0_i32, %c0_i32_0 : i32, i32
  }
  func.func @transform_8(%arg0: i32, %arg1: i32) -> (i32, i32) {
    %c0_i32 = arith.constant 0 : i32
    %c0_i32_0 = arith.constant 0 : i32
    %c0_i32_1 = arith.constant 0 : i32
    return %c0_i32, %c0_i32_0 : i32, i32
  }
  func.func @transform_9(%arg0: i32, %arg1: i32) -> (i32, i32) {
    %c0_i32 = arith.constant 0 : i32
    %c0_i32_0 = arith.constant 0 : i32
    %c0_i32_1 = arith.constant 0 : i32
    return %c0_i32, %c0_i32_0 : i32, i32
  }
  func.func @transform_10(%arg0: i32, %arg1: i32) -> (i32, i32) {
    %c0_i32 = arith.constant 0 : i32
    %c0_i32_0 = arith.constant 0 : i32
    %c0_i32_1 = arith.constant 0 : i32
    return %c0_i32, %c0_i32_0 : i32, i32
  }
  func.func @transform_11(%arg0: i32, %arg1: i32) -> (i32, i32, i32) {
    %c0_i32 = arith.constant 0 : i32
    %c0_i32_0 = arith.constant 0 : i32
    return %arg0, %arg1, %c0_i32 : i32, i32, i32
  }
}

</mosaic_0001>

<llo_original>
// kernel: tpu_custom_call.1
$region0: #{tpu_custom_call.1}
  #allocation0 [shape = 'u32[]', space=smem, size = 0x4, offset = 0x4, fixed_abs, tag = 'smem constant byte address 0x4 - core index']
  #allocation1 [shape = 'u32[144,128]{1,0:T(1,128)}', space=vmem, size = 0x12000, scoped, tag = 'internal scratch']
  #allocation2 [shape = 'f32[8,32]{1,0:T(8,128)}', space=vmem, size = 0x1000, scoped, tag = 'scratch operand']
  #allocation3 [shape = 'f32[8,32]{1,0:T(8,128)}', space=vmem, size = 0x1000, scoped, tag = 'scratch operand']
  #allocation4 [shape = 'f32[8,32]{1,0:T(8,128)}', space=vmem, size = 0x1000, scoped, tag = 'scratch operand']
  #allocation5 [shape = 'f32[8,32]{1,0:T(8,128)}', space=vmem, size = 0x1000, scoped, tag = 'scratch operand']
  %s0 = inlined_call_operand.hbm [shape: f32[2,8,32], index: 0, kind: input, shape index: {}]
  %s1 = inlined_call_operand.hbm [shape: f32[2,8,32], index: 1, kind: input, shape index: {}]
  %s2 = inlined_call_operand.hbm [shape: f32[2,8,32], index: 2, kind: input, shape index: {}]
  %s3 = inlined_call_operand.hbm [shape: f32[32,32], index: 3, kind: input, shape index: {}]
  %s4 = inlined_call_operand.vmem [shape: f32[1,32], index: 4, kind: input, shape index: {}]
  %s5 = inlined_call_operand.hbm [shape: f32[32,32], index: 5, kind: input, shape index: {}]
  %s6 = inlined_call_operand.vmem [shape: f32[1,32], index: 6, kind: input, shape index: {}]
  %s7 = inlined_call_operand.hbm [shape: f32[32,32], index: 7, kind: input, shape index: {}]
  %s8 = inlined_call_operand.hbm [shape: f32[1,32], index: 8, kind: input, shape index: {}]
  %s9 = inlined_call_operand.vmem [shape: f32[32,32], index: 9, kind: input, shape index: {}]
  %s10 = inlined_call_operand.vmem [shape: f32[1,32], index: 10, kind: input, shape index: {}]
  %s11 = inlined_call_operand.hbm [shape: f32[2,8,32], index: 11, kind: output, shape index: {}]
  %s12 = sld [smem:[#allocation0]]
  $region109: #{tpu_custom_call.1} parent=0
    _
  %s14 = ssub.s32 1, %s12
  %s15 = scalar_select 0, %s14, %s12
  $region1: #{tpu_custom_call.1} parent=0
    #allocation6 [shape = 'u8[8192]{0}', space=vmem, size = 0x2000, scoped, tag = 'input window, operand 0']
    #allocation7 [shape = 's32[2]{0}', space=sflag, size = 0x8, scoped, tag = 'scoped memory for tpu_custom_call.1']
    #allocation8 [shape = 's32[2]{0}', space=sflag, size = 0x8, scoped, tag = 'scoped memory for tpu_custom_call.1']
    #allocation9 [shape = 'u8[4096]{0}', space=vmem, size = 0x1000, scoped, tag = 'input window, operand 1, single buffered']
    #allocation10 [shape = 's32[1]{0}', space=sflag, size = 0x4, scoped, tag = 'scoped memory for tpu_custom_call.1']
    #allocation11 [shape = 'u8[4096]{0}', space=vmem, size = 0x1000, scoped, tag = 'input window, operand 2, single buffered']
    #allocation12 [shape = 'u8[16384]{0}', space=vmem, size = 0x4000, scoped, tag = 'input window, operand 3, single buffered']
    #allocation13 [shape = 's32[1]{0}', space=sflag, size = 0x4, scoped, tag = 'scoped memory for tpu_custom_call.1']
    #allocation14 [shape = 'u8[16384]{0}', space=vmem, size = 0x4000, scoped, tag = 'input window, operand 5, single buffered']
    #allocation15 [shape = 'u8[16384]{0}', space=vmem, size = 0x4000, scoped, tag = 'input window, operand 7, single buffered']
    #allocation16 [shape = 's32[1]{0}', space=sflag, size = 0x4, scoped, tag = 'scoped memory for tpu_custom_call.1']
    #allocation17 [shape = 'u8[512]{0}', space=vmem, size = 0x400, scoped, tag = 'input window, operand 8, single buffered']
    #allocation18 [shape = 'u8[8192]{0}', space=vmem, size = 0x2000, scoped, tag = 'output window, operand 0']
    %16 = vsyncpa [#allocation7], 0
    %s17 = scalar_lea.sflag [#allocation7], 1
    %18 = vsyncpa %s17, 0
    %19 = vsyncpa [#allocation10], 0
    %20 = vsyncpa [#allocation13], 0
    %21 = vsyncpa [#allocation16], 0
    %22 = vsyncpa [#allocation8], 0
    %s23 = scalar_lea.sflag [#allocation8], 1
    %24 = vsyncpa %s23, 0
    loop: start=0, step=1, limit=4
    $region2: #{tpu_custom_call.1} parent=1 // loop_pre_header
      _
    $region3: #{tpu_custom_call.1} parent=1 // loop_header
      %s26 = sphi 0, %s30
      %p27 = scmp.ge.s32.totalorder %s26, 4
      %s33 = sphi 0, %s45
      %s34 = sphi 0, %s41
      %s35 = sphi 0, %s33
      %s36 = sphi 0, %s34
      %s37 = sphi 0, %s35
      %s38 = sphi 0, %s36
      %s50 = sphi 0, %s52
      %s53 = sphi 0, %s50
      %s54 = sphi 0, %s53
      %s70 = sphi 0, %s54
      %s76 = sphi 0, %s78
      %s79 = sphi 0, %s76
      %s80 = sphi 0, %s79
      %s96 = sphi 0, %s80
      %s102 = sphi 0, %s104
      %s105 = sphi 0, %s102
      %s106 = sphi 0, %s105
      %s122 = sphi 0, %s106
      %s126 = sphi 0, %s126
      %s128 = sphi 0, %s126
      %s129 = sphi 0, %s128
      %s143 = sphi 0, %s129
      %s147 = sphi 0, %s147
      %s149 = sphi 0, %s147
      %s150 = sphi 0, %s149
      %s164 = sphi 0, %s150
      %s168 = sphi 0, %s168
      %s170 = sphi 0, %s168
      %s171 = sphi 0, %s170
      %s185 = sphi 0, %s171
      %s189 = sphi 0, %s189
      %s191 = sphi 0, %s189
      %s192 = sphi 0, %s191
      %s206 = sphi 0, %s192
      %s210 = sphi 0, %s210
      %s212 = sphi 0, %s210
      %s213 = sphi 0, %s212
      %s227 = sphi 0, %s213
      %s231 = sphi 0, %s231
      %s233 = sphi 0, %s231
      %s234 = sphi 0, %s233
      %s248 = sphi 0, %s234
      %s252 = sphi 0, %s252
      %s254 = sphi 0, %s252
      %s255 = sphi 0, %s254
      %s269 = sphi 0, %s255
      %s273 = sphi 0, %s273
      %s275 = sphi 0, %s273
      %s276 = sphi 0, %s275
      %s290 = sphi 0, %s276
      %s298 = sphi 0, %s300
      %s301 = sphi 0, %s298
      %s302 = sphi 0, %s301
      %s318 = sphi 0, %s302
    $region4: #{tpu_custom_call.1} parent=1 // loop_header_branch
      %29 = sbr.rel (%p27) target = $region8
    $region5: #{tpu_custom_call.1} parent=1 // loop_body
      %s31 = ssub.s32 %s26, 1
      %s32 = ssub.s32 %s26, 2
      %s39 = sadd.s32 1, %s34
      %p40 = scmp.ge.s32.totalorder %s39, 1
      %s41 = scalar_select %p40, 0, %s39
      %s42 = sadd.s32 1, %s33
      %s43 = scalar_select %p40, %s42, %s33
      %p44 = scmp.ge.s32.totalorder %s43, 2
      %s45 = scalar_select %p44, 0, %s43
      %s46 = ssub.s32 %s33, %s45
      %s47 = ssub.s32 %s34, %s41
      %s48 = sor.u32 %s46, %s47
      %p49 = scmp.eq.s32.totalorder %s48, 0
      %s51 = sadd.s32 %s50, 1
      %s52 = scalar_select %p49, %s50, %s51
      %p55 = pneg %p49
      %p56 = scmp.eq.s32.totalorder %s26, 1
      %p57 = por %p55, %p56
      %p58 = scmp.ne.s32.totalorder %s50, %s53
      %p59 = scmp.eq.s32.totalorder %s26, 0
      %p60 = por %p58, %p59
      %p61 = scmp.ne.s32.totalorder %s50, %s53
      %p62 = scmp.eq.s32.totalorder %s31, 1
      %p63 = por %p61, %p62
      %p64 = scmp.ne.s32.totalorder %s53, %s54
      %p65 = scmp.eq.s32.totalorder %s31, 0
      %p66 = por %p64, %p65
      %p67 = scmp.ne.s32.totalorder %s53, %s54
      %p68 = scmp.eq.s32.totalorder %s32, 1
      %p69 = por %p67, %p68
      %p71 = scmp.ne.s32.totalorder %s54, %s70
      %p72 = scmp.eq.s32.totalorder %s32, 0
      %p73 = por %p71, %p72
      %s74 = ssub.s32 %s33, %s45
      %p75 = scmp.eq.s32.totalorder %s74, 0
      %s77 = sadd.s32 %s76, 1
      %s78 = scalar_select %p75, %s76, %s77
      %p81 = pneg %p75
      %p82 = scmp.eq.s32.totalorder %s26, 1
      %p83 = por %p81, %p82
      %p84 = scmp.ne.s32.totalorder %s76, %s79
      %p85 = scmp.eq.s32.totalorder %s26, 0
      %p86 = por %p84, %p85
      %p87 = scmp.ne.s32.totalorder %s76, %s79
      %p88 = scmp.eq.s32.totalorder %s31, 1
      %p89 = por %p87, %p88
      %p90 = scmp.ne.s32.totalorder %s79, %s80
      %p91 = scmp.eq.s32.totalorder %s31, 0
      %p92 = por %p90, %p91
      %p93 = scmp.ne.s32.totalorder %s79, %s80
      %p94 = scmp.eq.s32.totalorder %s32, 1
      %p95 = por %p93, %p94
      %p97 = scmp.ne.s32.totalorder %s80, %s96
      %p98 = scmp.eq.s32.totalorder %s32, 0
      %p99 = por %p97, %p98
      %s100 = ssub.s32 %s33, %s45
      %p101 = scmp.eq.s32.totalorder %s100, 0
      %s103 = sadd.s32 %s102, 1
      %s104 = scalar_select %p101, %s102, %s103
      %p107 = pneg %p101
      %p108 = scmp.eq.s32.totalorder %s26, 1
      %p109 = por %p107, %p108
      %p110 = scmp.ne.s32.totalorder %s102, %s105
      %p111 = scmp.eq.s32.totalorder %s26, 0
      %p112 = por %p110, %p111
      %p113 = scmp.ne.s32.totalorder %s102, %s105
      %p114 = scmp.eq.s32.totalorder %s31, 1
      %p115 = por %p113, %p114
      %p116 = scmp.ne.s32.totalorder %s105, %s106
      %p117 = scmp.eq.s32.totalorder %s31, 0
      %p118 = por %p116, %p117
      %p119 = scmp.ne.s32.totalorder %s105, %s106
      %p120 = scmp.eq.s32.totalorder %s32, 1
      %p121 = por %p119, %p120
      %p123 = scmp.ne.s32.totalorder %s106, %s122
      %p124 = scmp.eq.s32.totalorder %s32, 0
      %p125 = por %p123, %p124
      %s127 = sadd.s32 %s126, 1
      %p130 = scmp.eq.s32.totalorder %s26, 1
      %p131 = scmp.ne.s32.totalorder %s126, %s128
      %p132 = scmp.eq.s32.totalorder %s26, 0
      %p133 = por %p131, %p132
      %p134 = scmp.ne.s32.totalorder %s126, %s128
      %p135 = scmp.eq.s32.totalorder %s31, 1
      %p136 = por %p134, %p135
      %p137 = scmp.ne.s32.totalorder %s128, %s129
      %p138 = scmp.eq.s32.totalorder %s31, 0
      %p139 = por %p137, %p138
      %p140 = scmp.ne.s32.totalorder %s128, %s129
      %p141 = scmp.eq.s32.totalorder %s32, 1
      %p142 = por %p140, %p141
      %p144 = scmp.ne.s32.totalorder %s129, %s143
      %p145 = scmp.eq.s32.totalorder %s32, 0
      %p146 = por %p144, %p145
      %s148 = sadd.s32 %s147, 1
      %p151 = scmp.eq.s32.totalorder %s26, 1
      %p152 = scmp.ne.s32.totalorder %s147, %s149
      %p153 = scmp.eq.s32.totalorder %s26, 0
      %p154 = por %p152, %p153
      %p155 = scmp.ne.s32.totalorder %s147, %s149
      %p156 = scmp.eq.s32.totalorder %s31, 1
      %p157 = por %p155, %p156
      %p158 = scmp.ne.s32.totalorder %s149, %s150
      %p159 = scmp.eq.s32.totalorder %s31, 0
      %p160 = por %p158, %p159
      %p161 = scmp.ne.s32.totalorder %s149, %s150
      %p162 = scmp.eq.s32.totalorder %s32, 1
      %p163 = por %p161, %p162
      %p165 = scmp.ne.s32.totalorder %s150, %s164
      %p166 = scmp.eq.s32.totalorder %s32, 0
      %p167 = por %p165, %p166
      %s169 = sadd.s32 %s168, 1
      %p172 = scmp.eq.s32.totalorder %s26, 1
      %p173 = scmp.ne.s32.totalorder %s168, %s170
      %p174 = scmp.eq.s32.totalorder %s26, 0
      %p175 = por %p173, %p174
      %p176 = scmp.ne.s32.totalorder %s168, %s170
      %p177 = scmp.eq.s32.totalorder %s31, 1
      %p178 = por %p176, %p177
      %p179 = scmp.ne.s32.totalorder %s170, %s171
      %p180 = scmp.eq.s32.totalorder %s31, 0
      %p181 = por %p179, %p180
      %p182 = scmp.ne.s32.totalorder %s170, %s171
      %p183 = scmp.eq.s32.totalorder %s32, 1
      %p184 = por %p182, %p183
      %p186 = scmp.ne.s32.totalorder %s171, %s185
      %p187 = scmp.eq.s32.totalorder %s32, 0
      %p188 = por %p186, %p187
      %s190 = sadd.s32 %s189, 1
      %p193 = scmp.eq.s32.totalorder %s26, 1
      %p194 = scmp.ne.s32.totalorder %s189, %s191
      %p195 = scmp.eq.s32.totalorder %s26, 0
      %p196 = por %p194, %p195
      %p197 = scmp.ne.s32.totalorder %s189, %s191
      %p198 = scmp.eq.s32.totalorder %s31, 1
      %p199 = por %p197, %p198
      %p200 = scmp.ne.s32.totalorder %s191, %s192
      %p201 = scmp.eq.s32.totalorder %s31, 0
      %p202 = por %p200, %p201
      %p203 = scmp.ne.s32.totalorder %s191, %s192
      %p204 = scmp.eq.s32.totalorder %s32, 1
      %p205 = por %p203, %p204
      %p207 = scmp.ne.s32.totalorder %s192, %s206
      %p208 = scmp.eq.s32.totalorder %s32, 0
      %p209 = por %p207, %p208
      %s211 = sadd.s32 %s210, 1
      %p214 = scmp.eq.s32.totalorder %s26, 1
      %p215 = scmp.ne.s32.totalorder %s210, %s212
      %p216 = scmp.eq.s32.totalorder %s26, 0
      %p217 = por %p215, %p216
      %p218 = scmp.ne.s32.totalorder %s210, %s212
      %p219 = scmp.eq.s32.totalorder %s31, 1
      %p220 = por %p218, %p219
      %p221 = scmp.ne.s32.totalorder %s212, %s213
      %p222 = scmp.eq.s32.totalorder %s31, 0
      %p223 = por %p221, %p222
      %p224 = scmp.ne.s32.totalorder %s212, %s213
      %p225 = scmp.eq.s32.totalorder %s32, 1
      %p226 = por %p224, %p225
      %p228 = scmp.ne.s32.totalorder %s213, %s227
      %p229 = scmp.eq.s32.totalorder %s32, 0
      %p230 = por %p228, %p229
      %s232 = sadd.s32 %s231, 1
      %p235 = scmp.eq.s32.totalorder %s26, 1
      %p236 = scmp.ne.s32.totalorder %s231, %s233
      %p237 = scmp.eq.s32.totalorder %s26, 0
      %p238 = por %p236, %p237
      %p239 = scmp.ne.s32.totalorder %s231, %s233
      %p240 = scmp.eq.s32.totalorder %s31, 1
      %p241 = por %p239, %p240
      %p242 = scmp.ne.s32.totalorder %s233, %s234
      %p243 = scmp.eq.s32.totalorder %s31, 0
      %p244 = por %p242, %p243
      %p245 = scmp.ne.s32.totalorder %s233, %s234
      %p246 = scmp.eq.s32.totalorder %s32, 1
      %p247 = por %p245, %p246
      %p249 = scmp.ne.s32.totalorder %s234, %s248
      %p250 = scmp.eq.s32.totalorder %s32, 0
      %p251 = por %p249, %p250
      %s253 = sadd.s32 %s252, 1
      %p256 = scmp.eq.s32.totalorder %s26, 1
      %p257 = scmp.ne.s32.totalorder %s252, %s254
      %p258 = scmp.eq.s32.totalorder %s26, 0
      %p259 = por %p257, %p258
      %p260 = scmp.ne.s32.totalorder %s252, %s254
      %p261 = scmp.eq.s32.totalorder %s31, 1
      %p262 = por %p260, %p261
      %p263 = scmp.ne.s32.totalorder %s254, %s255
      %p264 = scmp.eq.s32.totalorder %s31, 0
      %p265 = por %p263, %p264
      %p266 = scmp.ne.s32.totalorder %s254, %s255
      %p267 = scmp.eq.s32.totalorder %s32, 1
      %p268 = por %p266, %p267
      %p270 = scmp.ne.s32.totalorder %s255, %s269
      %p271 = scmp.eq.s32.totalorder %s32, 0
      %p272 = por %p270, %p271
      %s274 = sadd.s32 %s273, 1
      %p277 = scmp.eq.s32.totalorder %s26, 1
      %p278 = scmp.ne.s32.totalorder %s273, %s275
      %p279 = scmp.eq.s32.totalorder %s26, 0
      %p280 = por %p278, %p279
      %p281 = scmp.ne.s32.totalorder %s273, %s275
      %p282 = scmp.eq.s32.totalorder %s31, 1
      %p283 = por %p281, %p282
      %p284 = scmp.ne.s32.totalorder %s275, %s276
      %p285 = scmp.eq.s32.totalorder %s31, 0
      %p286 = por %p284, %p285
      %p287 = scmp.ne.s32.totalorder %s275, %s276
      %p288 = scmp.eq.s32.totalorder %s32, 1
      %p289 = por %p287, %p288
      %p291 = scmp.ne.s32.totalorder %s276, %s290
      %p292 = scmp.eq.s32.totalorder %s32, 0
      %p293 = por %p291, %p292
      %s294 = ssub.s32 %s33, %s45
      %s295 = ssub.s32 %s34, %s41
      %s296 = sor.u32 %s294, %s295
      %p297 = scmp.eq.s32.totalorder %s296, 0
      %s299 = sadd.s32 %s298, 1
      %s300 = scalar_select %p297, %s298, %s299
      %p303 = pneg %p297
      %p304 = scmp.eq.s32.totalorder %s26, 1
      %p305 = por %p303, %p304
      %p306 = scmp.ne.s32.totalorder %s298, %s301
      %p307 = scmp.eq.s32.totalorder %s26, 0
      %p308 = por %p306, %p307
      %p309 = scmp.ne.s32.totalorder %s298, %s301
      %p310 = scmp.eq.s32.totalorder %s31, 1
      %p311 = por %p309, %p310
      %p312 = scmp.ne.s32.totalorder %s301, %s302
      %p313 = scmp.eq.s32.totalorder %s31, 0
      %p314 = por %p312, %p313
      %p315 = scmp.ne.s32.totalorder %s301, %s302
      %p316 = scmp.eq.s32.totalorder %s32, 1
      %p317 = por %p315, %p316
      %p319 = scmp.ne.s32.totalorder %s302, %s318
      %p320 = scmp.eq.s32.totalorder %s32, 0
      %p321 = por %p319, %p320
      %p322 = scmp.le.s32.totalorder 1, %s26
      %p323 = scmp.lt.s32.totalorder %s26, 3
      %p324 = pnand %p322, %p323
      %p325 = pneg %p324
      // Predicated region
      $region9: #{tpu_custom_call.1} parent=5 // pred_check
        _
      $region10: #{tpu_custom_call.1} parent=5 // pred_check_branch
        %327 = sbr.rel (%p324) target = $region12
      $region11: #{tpu_custom_call.1} parent=5 // pred_region
        %s328 = ssub.s32 %s26, 1
        // Predicated region
        $region13: #{tpu_custom_call.1} parent=11 // pred_check
          %p329 = pneg %p92
        $region14: #{tpu_custom_call.1} parent=11 // pred_check_branch
          %331 = sbr.rel (%p329) target = $region16
        $region15: #{tpu_custom_call.1} parent=11 // pred_region
          %s333 = ssub.s32 128, 128
          %334 = vsyncadd [#allocation10], %s333
          %s335 = smul.addr %s35, 128
          %s336 = scalar_lea.hbm %s1, %s335
          %s338 = sshll.u32 [#allocation9], 4
          %s339 = int_to_ptr.vmem [resolvable:$true] %s338
          %341 = dma.hbm_to_vmem [thread:$0]  %s336, 128, %s339, [#allocation10]
        $region16: #{tpu_custom_call.1} parent=11 // pred_fallthru
          _
        // Predicated region
        $region17: #{tpu_custom_call.1} parent=11 // pred_check
          %p342 = pneg %p118
        $region18: #{tpu_custom_call.1} parent=11 // pred_check_branch
          %344 = sbr.rel (%p342) target = $region20
        $region19: #{tpu_custom_call.1} parent=11 // pred_region
          %s346 = ssub.s32 128, 128
          %347 = vsyncadd [#allocation10], %s346
          %s348 = smul.addr %s35, 128
          %s349 = scalar_lea.hbm %s2, %s348
          %s351 = sshll.u32 [#allocation11], 4
          %s352 = int_to_ptr.vmem [resolvable:$true] %s351
          %354 = dma.hbm_to_vmem [thread:$0]  %s349, 128, %s352, [#allocation10]
        $region20: #{tpu_custom_call.1} parent=11 // pred_fallthru
          _
        // Predicated region
        $region21: #{tpu_custom_call.1} parent=11 // pred_check
          %p355 = pneg %p139
        $region22: #{tpu_custom_call.1} parent=11 // pred_check_branch
          %357 = sbr.rel (%p355) target = $region24
        $region23: #{tpu_custom_call.1} parent=11 // pred_region
          %s359 = ssub.s32 512, 512
          %360 = vsyncadd [#allocation13], %s359
          %s361 = sshll.u32 [#allocation12], 4
          %s362 = int_to_ptr.vmem [resolvable:$true] %s361
          %367 = dma.hbm_to_vmem [thread:$0]  %s3, 512, %s362, [#allocation13], 128, 128, 8
        $region24: #{tpu_custom_call.1} parent=11 // pred_fallthru
          _
        // Predicated region
        $region25: #{tpu_custom_call.1} parent=11 // pred_check
          %p368 = pneg %p160
        $region26: #{tpu_custom_call.1} parent=11 // pred_check_branch
          %370 = sbr.rel (%p368) target = $region28
        $region27: #{tpu_custom_call.1} parent=11 // pred_region
          _
        $region28: #{tpu_custom_call.1} parent=11 // pred_fallthru
          _
        // Predicated region
        $region29: #{tpu_custom_call.1} parent=11 // pred_check
          %p371 = pneg %p181
        $region30: #{tpu_custom_call.1} parent=11 // pred_check_branch
          %373 = sbr.rel (%p371) target = $region32
        $region31: #{tpu_custom_call.1} parent=11 // pred_region
          %s375 = ssub.s32 512, 512
          %376 = vsyncadd [#allocation13], %s375
          %s377 = sshll.u32 [#allocation14], 4
          %s378 = int_to_ptr.vmem [resolvable:$true] %s377
          %383 = dma.hbm_to_vmem [thread:$0]  %s5, 512, %s378, [#allocation13], 128, 128, 8
        $region32: #{tpu_custom_call.1} parent=11 // pred_fallthru
          _
        // Predicated region
        $region33: #{tpu_custom_call.1} parent=11 // pred_check
          %p384 = pneg %p202
        $region34: #{tpu_custom_call.1} parent=11 // pred_check_branch
          %386 = sbr.rel (%p384) target = $region36
        $region35: #{tpu_custom_call.1} parent=11 // pred_region
          _
        $region36: #{tpu_custom_call.1} parent=11 // pred_fallthru
          _
        // Predicated region
        $region37: #{tpu_custom_call.1} parent=11 // pred_check
          %p387 = pneg %p223
        $region38: #{tpu_custom_call.1} parent=11 // pred_check_branch
          %389 = sbr.rel (%p387) target = $region40
        $region39: #{tpu_custom_call.1} parent=11 // pred_region
          %s391 = ssub.s32 512, 512
          %392 = vsyncadd [#allocation16], %s391
          %s393 = sshll.u32 [#allocation15], 4
          %s394 = int_to_ptr.vmem [resolvable:$true] %s393
          %399 = dma.hbm_to_vmem [thread:$0]  %s7, 512, %s394, [#allocation16], 128, 128, 8
        $region40: #{tpu_custom_call.1} parent=11 // pred_fallthru
          _
        // Predicated region
        $region41: #{tpu_custom_call.1} parent=11 // pred_check
          %p400 = pneg %p244
        $region42: #{tpu_custom_call.1} parent=11 // pred_check_branch
          %402 = sbr.rel (%p400) target = $region44
        $region43: #{tpu_custom_call.1} parent=11 // pred_region
          %s404 = ssub.s32 16, 16
          %405 = vsyncadd [#allocation16], %s404
          %s407 = sshll.u32 [#allocation17], 4
          %s408 = int_to_ptr.vmem [resolvable:$true] %s407
          %410 = dma.hbm_to_vmem [thread:$0]  %s8, 16, %s408, [#allocation16]
        $region44: #{tpu_custom_call.1} parent=11 // pred_fallthru
          _
        // Predicated region
        $region45: #{tpu_custom_call.1} parent=11 // pred_check
          %p411 = pneg %p265
        $region46: #{tpu_custom_call.1} parent=11 // pred_check_branch
          %413 = sbr.rel (%p411) target = $region48
        $region47: #{tpu_custom_call.1} parent=11 // pred_region
          _
        $region48: #{tpu_custom_call.1} parent=11 // pred_fallthru
          _
        // Predicated region
        $region49: #{tpu_custom_call.1} parent=11 // pred_check
          %p414 = pneg %p286
        $region50: #{tpu_custom_call.1} parent=11 // pred_check_branch
          %416 = sbr.rel (%p414) target = $region52
        $region51: #{tpu_custom_call.1} parent=11 // pred_region
          _
        $region52: #{tpu_custom_call.1} parent=11 // pred_fallthru
          _
      $region12: #{tpu_custom_call.1} parent=5 // pred_fallthru
        _
      %p417 = scmp.lt.s32.totalorder %s26, 2
      // Predicated region
      $region53: #{tpu_custom_call.1} parent=5 // pred_check
        %p418 = pneg %p417
      $region54: #{tpu_custom_call.1} parent=5 // pred_check_branch
        %420 = sbr.rel (%p418) target = $region56
      $region55: #{tpu_custom_call.1} parent=5 // pred_region
        // Predicated region
        $region57: #{tpu_custom_call.1} parent=55 // pred_check
          %p421 = pneg %p60
        $region58: #{tpu_custom_call.1} parent=55 // pred_check_branch
          %423 = sbr.rel (%p421) target = $region60
        $region59: #{tpu_custom_call.1} parent=55 // pred_region
          %s424 = sand.u32 %s50, 1
          %s425 = scalar_lea.sflag [#allocation7], %s424
          %s426 = sand.u32 %s50, 1
          %s427 = smul.addr %s426, 8
          %s428 = scalar_lea.vmem [#allocation6], %s427
          %s430 = ssub.s32 128, 128
          %431 = vsyncadd %s425, %s430
          %s432 = sadd.s32 %s34, %s33
          %s433 = smul.addr %s432, 128
          %s434 = scalar_lea.hbm %s0, %s433
          %s436 = sshll.u32 %s428, 4
          %s437 = int_to_ptr.vmem [resolvable:$true] %s436
          %439 = dma.hbm_to_vmem [thread:$0]  %s434, 128, %s437, %s425
        $region60: #{tpu_custom_call.1} parent=55 // pred_fallthru
          _
      $region56: #{tpu_custom_call.1} parent=5 // pred_fallthru
        _
      %p440 = scmp.le.s32.totalorder 1, %s26
      %p441 = scmp.lt.s32.totalorder %s26, 3
      %p442 = pnand %p440, %p441
      %p443 = pneg %p442
      // Predicated region
      $region61: #{tpu_custom_call.1} parent=5 // pred_check
        _
      $region62: #{tpu_custom_call.1} parent=5 // pred_check_branch
        %445 = sbr.rel (%p442) target = $region64
      $region63: #{tpu_custom_call.1} parent=5 // pred_region
        %s446 = ssub.s32 %s26, 1
        %s447 = sand.u32 %s53, 1
        %s448 = scalar_lea.sflag [#allocation7], %s447
        %s449 = sand.u32 %s53, 1
        %s450 = smul.addr %s449, 8
        %s451 = scalar_lea.vmem [#allocation6], %s450
        // Predicated region
        $region65: #{tpu_custom_call.1} parent=63 // pred_check
          %p452 = pneg %p66
        $region66: #{tpu_custom_call.1} parent=63 // pred_check_branch
          %454 = sbr.rel (%p452) target = $region68
        $region67: #{tpu_custom_call.1} parent=63 // pred_region
          %455 = dma.done %s448, 128
        $region68: #{tpu_custom_call.1} parent=63 // pred_fallthru
          _
        // Predicated region
        $region69: #{tpu_custom_call.1} parent=63 // pred_check
          %p456 = pneg %p92
        $region70: #{tpu_custom_call.1} parent=63 // pred_check_branch
          %458 = sbr.rel (%p456) target = $region72
        $region71: #{tpu_custom_call.1} parent=63 // pred_region
          %459 = dma.done [#allocation10], 128
        $region72: #{tpu_custom_call.1} parent=63 // pred_fallthru
          _
        // Predicated region
        $region73: #{tpu_custom_call.1} parent=63 // pred_check
          %p460 = pneg %p118
        $region74: #{tpu_custom_call.1} parent=63 // pred_check_branch
          %462 = sbr.rel (%p460) target = $region76
        $region75: #{tpu_custom_call.1} parent=63 // pred_region
          %463 = dma.done [#allocation10], 128
        $region76: #{tpu_custom_call.1} parent=63 // pred_fallthru
          _
        // Predicated region
        $region77: #{tpu_custom_call.1} parent=63 // pred_check
          %p464 = pneg %p139
        $region78: #{tpu_custom_call.1} parent=63 // pred_check_branch
          %466 = sbr.rel (%p464) target = $region80
        $region79: #{tpu_custom_call.1} parent=63 // pred_region
          %467 = dma.done [#allocation13], 512
        $region80: #{tpu_custom_call.1} parent=63 // pred_fallthru
          _
        // Predicated region
        $region81: #{tpu_custom_call.1} parent=63 // pred_check
          %p468 = pneg %p181
        $region82: #{tpu_custom_call.1} parent=63 // pred_check_branch
          %470 = sbr.rel (%p468) target = $region84
        $region83: #{tpu_custom_call.1} parent=63 // pred_region
          %471 = dma.done [#allocation13], 512
        $region84: #{tpu_custom_call.1} parent=63 // pred_fallthru
          _
        // Predicated region
        $region85: #{tpu_custom_call.1} parent=63 // pred_check
          %p472 = pneg %p223
        $region86: #{tpu_custom_call.1} parent=63 // pred_check_branch
          %474 = sbr.rel (%p472) target = $region88
        $region87: #{tpu_custom_call.1} parent=63 // pred_region
          %475 = dma.done [#allocation16], 512
        $region88: #{tpu_custom_call.1} parent=63 // pred_fallthru
          _
        // Predicated region
        $region89: #{tpu_custom_call.1} parent=63 // pred_check
          %p476 = pneg %p244
        $region90: #{tpu_custom_call.1} parent=63 // pred_check_branch
          %478 = sbr.rel (%p476) target = $region92
        $region91: #{tpu_custom_call.1} parent=63 // pred_region
          %479 = dma.done [#allocation16], 16
        $region92: #{tpu_custom_call.1} parent=63 // pred_fallthru
          _
        %s480 = sand.u32 %s53, 1
        %s481 = scalar_lea.sflag [#allocation7], %s480
        %s482 = sand.u32 %s53, 1
        %s483 = smul.addr %s482, 8
        %s484 = scalar_lea.vmem [#allocation6], %s483
        %p485 = pneg %p66
        %p486 = pneg %p63
        %p487 = pneg %p92
        %p488 = pneg %p89
        %p489 = pneg %p118
        %p490 = pneg %p115
        %p491 = pneg %p139
        %p492 = pneg %p136
        %p493 = pneg %p160
        %p494 = pneg %p157
        %p495 = pneg %p181
        %p496 = pneg %p178
        %p497 = pneg %p202
        %p498 = pneg %p199
        %p499 = pneg %p223
        %p500 = pneg %p220
        %p501 = pneg %p244
        %p502 = pneg %p241
        %p503 = pneg %p265
        %p504 = pneg %p262
        %p505 = pneg %p286
        %p506 = pneg %p283
        %p507 = pneg %p314
        %p508 = pneg %p311
        %s509 = sand.u32 %s301, 1
        %s510 = scalar_lea.sflag [#allocation8], %s509
        %s511 = sand.u32 %s301, 1
        %s512 = smul.addr %s511, 8
        %s513 = scalar_lea.vmem [#allocation18], %s512
        %p514 = scmp.eq.s32.totalorder %s36, 0
        // Predicated region
        $region93: #{tpu_custom_call.1} parent=63 // pred_check
          %p515 = pneg %p514
        $region94: #{tpu_custom_call.1} parent=63 // pred_check_branch
          %517 = sbr.rel (%p515) target = $region96
        $region95: #{tpu_custom_call.1} parent=63 // pred_region
          %v518 = vld [vmem:[#allocation9] sm:$0xff]
          %v519 = vld [vmem:[#allocation14] sm:$0xff]
          %v520 = vld [vmem:[#allocation14 + $0x8] sm:$0xff]
          %v521 = vld [vmem:[#allocation14 + $0x10] sm:$0xff]
          %v522 = vld [vmem:[#allocation14 + $0x18] sm:$0xff]
          %v523 = vld [vmem:[%s6] sm:$0x1]
          %v525 = vlaneseq
          %v526 = vshrl.u32 %v525, 7
          %v527 = vsub.s32 0, %v526
          %v528 = vrot.slane %v523, %v527
          %vm530 = vcmask 261120
          %v532 = vsel %vm530, %v518, 0
          %534 = vmatprep.subr.mxu0 0.0
          %535 = vmatpush1.msra.mxu0 %v519
          %536 = vmatprep.subr.mxu0 0.0
          %537 = vmatpush1.msra.mxu0 %v520
          %538 = vmatprep.subr.mxu0 0.0
          %539 = vmatpush1.msra.mxu0 %v521
          %540 = vmatprep.subr.mxu0 0.0
          %541 = vmatpush1.msra.mxu0 %v522
          %542 = vmatprep.subr.mxu0 0.0
          %543 = vmatpush1.msra.mxu0 0.0
          %544 = vmatprep.subr.mxu0 0.0
          %545 = vmatpush1.msra.mxu0 0.0
          %546 = vmatprep.subr.mxu0 0.0
          %547 = vmatpush1.msra.mxu0 0.0
          %548 = vmatprep.subr.mxu0 0.0
          %549 = vmatpush1.msra.mxu0 0.0
          %550 = vmatprep.subr.mxu0 0.0
          %551 = vmatpush1.msra.mxu0 0.0
          %552 = vmatprep.subr.mxu0 0.0
          %553 = vmatpush1.msra.mxu0 0.0
          %554 = vmatprep.subr.mxu0 0.0
          %555 = vmatpush1.msra.mxu0 0.0
          %556 = vmatprep.subr.mxu0 0.0
          %557 = vmatpush1.msra.mxu0 0.0
          %558 = vmatprep.subr.mxu0 0.0
          %559 = vmatpush1.msra.mxu0 0.0
          %560 = vmatprep.subr.mxu0 0.0
          %561 = vmatpush1.msra.mxu0 0.0
          %562 = vmatprep.subr.mxu0 0.0
          %563 = vmatpush1.msra.mxu0 0.0
          %564 = vmatprep.subr.mxu0 0.0
          %565 = vmatpush1.msra.mxu0 0.0
          %566 = vmatprep.subr.mxu0 0.0
          %567 = vmatpush1.msra.mxu0 0.0
          %568 = vmatprep.subr.mxu0 0.0
          %569 = vmatpush1.msra.mxu0 0.0
          %570 = vmatprep.subr.mxu0 0.0
          %571 = vmatpush1.msra.mxu0 0.0
          %572 = vmatprep.subr.mxu0 0.0
          %573 = vmatpush1.msra.mxu0 0.0
          %574 = vmatprep.subr.mxu0 0.0
          %575 = vmatpush1.msra.mxu0 0.0
          %576 = vmatprep.subr.mxu0 0.0
          %577 = vmatpush1.msra.mxu0 0.0
          %578 = vmatprep.subr.mxu0 0.0
          %579 = vmatpush1.msra.mxu0 0.0
          %580 = vmatprep.subr.mxu0 0.0
          %581 = vmatpush1.msra.mxu0 0.0
          %582 = vmatprep.subr.mxu0 0.0
          %583 = vmatpush1.msra.mxu0 0.0
          %584 = vmatprep.subr.mxu0 0.0
          %585 = vmatpush1.msra.mxu0 0.0
          %586 = vmatprep.subr.mxu0 0.0
          %587 = vmatpush1.msra.mxu0 0.0
          %588 = vmatprep.subr.mxu0 0.0
          %589 = vmatpush1.msra.mxu0 0.0
          %590 = vmatprep.subr.mxu0 0.0
          %591 = vmatpush1.msra.mxu0 0.0
          %592 = vmatprep.subr.mxu0 0.0
          %593 = vmatpush1.msra.mxu0 0.0
          %594 = vmatprep.subr.mxu0 0.0
          %595 = vmatpush1.msra.mxu0 0.0
          %596 = vmatprep.subr.mxu0 0.0
          %597 = vmatpush1.msra.mxu0 0.0
          %598 = vmatprep.mubr.f32.mxu0 0.0
          %599 = vmatmul.mubr.f32.gmra.mrb[0].mxu0 %v532
          %v600 = vpop.f32.mrb[0].mxu0
          %v601 = vadd.f32 %v528, %v600
          %v602 = vpop.f32.mrb[0].mxu0
          %603 = vdwg.mxu0
          %604 = vst.msk [vmem:[#allocation2] sm:$0xff] %vm530, %v601
          %v605 = vld [vmem:[#allocation11] sm:$0xff]
          %v606 = vld [vmem:[#allocation15] sm:$0xff]
          %v607 = vld [vmem:[#allocation15 + $0x8] sm:$0xff]
          %v608 = vld [vmem:[#allocation15 + $0x10] sm:$0xff]
          %v609 = vld [vmem:[#allocation15 + $0x18] sm:$0xff]
          %v610 = vld [vmem:[#allocation17] sm:$0x1]
          %v612 = vlaneseq
          %v613 = vshrl.u32 %v612, 7
          %v614 = vsub.s32 0, %v613
          %v615 = vrot.slane %v610, %v614
          %v618 = vsel %vm530, %v605, 0
          %620 = vmatprep.subr.mxu0 0.0
          %621 = vmatpush1.msra.mxu0 %v606
          %622 = vmatprep.subr.mxu0 0.0
          %623 = vmatpush1.msra.mxu0 %v607
          %624 = vmatprep.subr.mxu0 0.0
          %625 = vmatpush1.msra.mxu0 %v608
          %626 = vmatprep.subr.mxu0 0.0
          %627 = vmatpush1.msra.mxu0 %v609
          %628 = vmatprep.subr.mxu0 0.0
          %629 = vmatpush1.msra.mxu0 0.0
          %630 = vmatprep.subr.mxu0 0.0
          %631 = vmatpush1.msra.mxu0 0.0
          %632 = vmatprep.subr.mxu0 0.0
          %633 = vmatpush1.msra.mxu0 0.0
          %634 = vmatprep.subr.mxu0 0.0
          %635 = vmatpush1.msra.mxu0 0.0
          %636 = vmatprep.subr.mxu0 0.0
          %637 = vmatpush1.msra.mxu0 0.0
          %638 = vmatprep.subr.mxu0 0.0
          %639 = vmatpush1.msra.mxu0 0.0
          %640 = vmatprep.subr.mxu0 0.0
          %641 = vmatpush1.msra.mxu0 0.0
          %642 = vmatprep.subr.mxu0 0.0
          %643 = vmatpush1.msra.mxu0 0.0
          %644 = vmatprep.subr.mxu0 0.0
          %645 = vmatpush1.msra.mxu0 0.0
          %646 = vmatprep.subr.mxu0 0.0
          %647 = vmatpush1.msra.mxu0 0.0
          %648 = vmatprep.subr.mxu0 0.0
          %649 = vmatpush1.msra.mxu0 0.0
          %650 = vmatprep.subr.mxu0 0.0
          %651 = vmatpush1.msra.mxu0 0.0
          %652 = vmatprep.subr.mxu0 0.0
          %653 = vmatpush1.msra.mxu0 0.0
          %654 = vmatprep.subr.mxu0 0.0
          %655 = vmatpush1.msra.mxu0 0.0
          %656 = vmatprep.subr.mxu0 0.0
          %657 = vmatpush1.msra.mxu0 0.0
          %658 = vmatprep.subr.mxu0 0.0
          %659 = vmatpush1.msra.mxu0 0.0
          %660 = vmatprep.subr.mxu0 0.0
          %661 = vmatpush1.msra.mxu0 0.0
          %662 = vmatprep.subr.mxu0 0.0
          %663 = vmatpush1.msra.mxu0 0.0
          %664 = vmatprep.subr.mxu0 0.0
          %665 = vmatpush1.msra.mxu0 0.0
          %666 = vmatprep.subr.mxu0 0.0
          %667 = vmatpush1.msra.mxu0 0.0
          %668 = vmatprep.subr.mxu0 0.0
          %669 = vmatpush1.msra.mxu0 0.0
          %670 = vmatprep.subr.mxu0 0.0
          %671 = vmatpush1.msra.mxu0 0.0
          %672 = vmatprep.subr.mxu0 0.0
          %673 = vmatpush1.msra.mxu0 0.0
          %674 = vmatprep.subr.mxu0 0.0
          %675 = vmatpush1.msra.mxu0 0.0
          %676 = vmatprep.subr.mxu0 0.0
          %677 = vmatpush1.msra.mxu0 0.0
          %678 = vmatprep.subr.mxu0 0.0
          %679 = vmatpush1.msra.mxu0 0.0
          %680 = vmatprep.subr.mxu0 0.0
          %681 = vmatpush1.msra.mxu0 0.0
          %682 = vmatprep.subr.mxu0 0.0
          %683 = vmatpush1.msra.mxu0 0.0
          %684 = vmatprep.mubr.f32.mxu0 0.0
          %685 = vmatmul.mubr.f32.gmra.mrb[0].mxu0 %v618
          %v686 = vpop.f32.mrb[0].mxu0
          %v687 = vadd.f32 %v615, %v686
          %v688 = vpop.f32.mrb[0].mxu0
          %689 = vdwg.mxu0
          %690 = vst.msk [vmem:[#allocation3] sm:$0xff] %vm530, %v687
        $region96: #{tpu_custom_call.1} parent=63 // pred_fallthru
          _
        %v691 = vld [vmem:[%s451] sm:$0xff]
        %v692 = vld [vmem:[#allocation12] sm:$0xff]
        %v693 = vld [vmem:[#allocation12 + $0x8] sm:$0xff]
        %v694 = vld [vmem:[#allocation12 + $0x10] sm:$0xff]
        %v695 = vld [vmem:[#allocation12 + $0x18] sm:$0xff]
        %v696 = vld [vmem:[%s4] sm:$0x1]
        %v698 = vlaneseq
        %v699 = vshrl.u32 %v698, 7
        %v700 = vsub.s32 0, %v699
        %v701 = vrot.slane %v696, %v700
        %vm703 = vcmask 261120
        %v705 = vsel %vm703, %v691, 0
        %707 = vmatprep.subr.mxu0 0.0
        %708 = vmatpush1.msra.mxu0 %v692
        %709 = vmatprep.subr.mxu0 0.0
        %710 = vmatpush1.msra.mxu0 %v693
        %711 = vmatprep.subr.mxu0 0.0
        %712 = vmatpush1.msra.mxu0 %v694
        %713 = vmatprep.subr.mxu0 0.0
        %714 = vmatpush1.msra.mxu0 %v695
        %715 = vmatprep.subr.mxu0 0.0
        %716 = vmatpush1.msra.mxu0 0.0
        %717 = vmatprep.subr.mxu0 0.0
        %718 = vmatpush1.msra.mxu0 0.0
        %719 = vmatprep.subr.mxu0 0.0
        %720 = vmatpush1.msra.mxu0 0.0
        %721 = vmatprep.subr.mxu0 0.0
        %722 = vmatpush1.msra.mxu0 0.0
        %723 = vmatprep.subr.mxu0 0.0
        %724 = vmatpush1.msra.mxu0 0.0
        %725 = vmatprep.subr.mxu0 0.0
        %726 = vmatpush1.msra.mxu0 0.0
        %727 = vmatprep.subr.mxu0 0.0
        %728 = vmatpush1.msra.mxu0 0.0
        %729 = vmatprep.subr.mxu0 0.0
        %730 = vmatpush1.msra.mxu0 0.0
        %731 = vmatprep.subr.mxu0 0.0
        %732 = vmatpush1.msra.mxu0 0.0
        %733 = vmatprep.subr.mxu0 0.0
        %734 = vmatpush1.msra.mxu0 0.0
        %735 = vmatprep.subr.mxu0 0.0
        %736 = vmatpush1.msra.mxu0 0.0
        %737 = vmatprep.subr.mxu0 0.0
        %738 = vmatpush1.msra.mxu0 0.0
        %739 = vmatprep.subr.mxu0 0.0
        %740 = vmatpush1.msra.mxu0 0.0
        %741 = vmatprep.subr.mxu0 0.0
        %742 = vmatpush1.msra.mxu0 0.0
        %743 = vmatprep.subr.mxu0 0.0
        %744 = vmatpush1.msra.mxu0 0.0
        %745 = vmatprep.subr.mxu0 0.0
        %746 = vmatpush1.msra.mxu0 0.0
        %747 = vmatprep.subr.mxu0 0.0
        %748 = vmatpush1.msra.mxu0 0.0
        %749 = vmatprep.subr.mxu0 0.0
        %750 = vmatpush1.msra.mxu0 0.0
        %751 = vmatprep.subr.mxu0 0.0
        %752 = vmatpush1.msra.mxu0 0.0
        %753 = vmatprep.subr.mxu0 0.0
        %754 = vmatpush1.msra.mxu0 0.0
        %755 = vmatprep.subr.mxu0 0.0
        %756 = vmatpush1.msra.mxu0 0.0
        %757 = vmatprep.subr.mxu0 0.0
        %758 = vmatpush1.msra.mxu0 0.0
        %759 = vmatprep.subr.mxu0 0.0
        %760 = vmatpush1.msra.mxu0 0.0
        %761 = vmatprep.subr.mxu0 0.0
        %762 = vmatpush1.msra.mxu0 0.0
        %763 = vmatprep.subr.mxu0 0.0
        %764 = vmatpush1.msra.mxu0 0.0
        %765 = vmatprep.subr.mxu0 0.0
        %766 = vmatpush1.msra.mxu0 0.0
        %767 = vmatprep.subr.mxu0 0.0
        %768 = vmatpush1.msra.mxu0 0.0
        %769 = vmatprep.subr.mxu0 0.0
        %770 = vmatpush1.msra.mxu0 0.0
        %771 = vmatprep.mubr.f32.mxu0 0.0
        %772 = vmatmul.mubr.f32.gmra.mrb[0].mxu0 %v705
        %v773 = vpop.f32.mrb[0].mxu0
        %v774 = vadd.f32 %v701, %v773
        %v775 = vpop.f32.mrb[0].mxu0
        %776 = vdwg.mxu0
        %777 = vst.msk [vmem:[#allocation4] sm:$0xff] %vm703, %v774
        %v778 = vld [vmem:[#allocation4] sm:$0xff]
        %v779 = vld [vmem:[#allocation2] sm:$0xff]
        %v780 = vld [vmem:[#allocation3] sm:$0xff]
        %vm781 = vcmask 64512
        %v783 = vsel %vm781, %v778, 0
        %v786 = vsel %vm781, %v779, 0
        %788 = vmatprep.subr.mxu0 0.0
        %789 = vmatpush1.xpose.msra.mxu0 %v786
        %790 = vmatprep.subr.mxu0 0.0
        %791 = vmatpush1.xpose.msra.mxu0 0.0
        %792 = vmatprep.subr.mxu0 0.0
        %793 = vmatpush1.xpose.msra.mxu0 0.0
        %794 = vmatprep.subr.mxu0 0.0
        %795 = vmatpush1.xpose.msra.mxu0 0.0
        %796 = vmatprep.subr.mxu0 0.0
        %797 = vmatpush1.xpose.msra.mxu0 0.0
        %798 = vmatprep.subr.mxu0 0.0
        %799 = vmatpush1.xpose.msra.mxu0 0.0
        %800 = vmatprep.subr.mxu0 0.0
        %801 = vmatpush1.xpose.msra.mxu0 0.0
        %802 = vmatprep.subr.mxu0 0.0
        %803 = vmatpush1.xpose.msra.mxu0 0.0
        %804 = vmatprep.subr.mxu0 0.0
        %805 = vmatpush1.xpose.msra.mxu0 0.0
        %806 = vmatprep.subr.mxu0 0.0
        %807 = vmatpush1.xpose.msra.mxu0 0.0
        %808 = vmatprep.subr.mxu0 0.0
        %809 = vmatpush1.xpose.msra.mxu0 0.0
        %810 = vmatprep.subr.mxu0 0.0
        %811 = vmatpush1.xpose.msra.mxu0 0.0
        %812 = vmatprep.subr.mxu0 0.0
        %813 = vmatpush1.xpose.msra.mxu0 0.0
        %814 = vmatprep.subr.mxu0 0.0
        %815 = vmatpush1.xpose.msra.mxu0 0.0
        %816 = vmatprep.subr.mxu0 0.0
        %817 = vmatpush1.xpose.msra.mxu0 0.0
        %818 = vmatprep.subr.mxu0 0.0
        %819 = vmatpush1.xpose.msra.mxu0 0.0
        %820 = vmatprep.subr.mxu0 0.0
        %821 = vmatpush1.xpose.msra.mxu0 0.0
        %822 = vmatprep.subr.mxu0 0.0
        %823 = vmatpush1.xpose.msra.mxu0 0.0
        %824 = vmatprep.subr.mxu0 0.0
        %825 = vmatpush1.xpose.msra.mxu0 0.0
        %826 = vmatprep.subr.mxu0 0.0
        %827 = vmatpush1.xpose.msra.mxu0 0.0
        %828 = vmatprep.subr.mxu0 0.0
        %829 = vmatpush1.xpose.msra.mxu0 0.0
        %830 = vmatprep.subr.mxu0 0.0
        %831 = vmatpush1.xpose.msra.mxu0 0.0
        %832 = vmatprep.subr.mxu0 0.0
        %833 = vmatpush1.xpose.msra.mxu0 0.0
        %834 = vmatprep.subr.mxu0 0.0
        %835 = vmatpush1.xpose.msra.mxu0 0.0
        %836 = vmatprep.subr.mxu0 0.0
        %837 = vmatpush1.xpose.msra.mxu0 0.0
        %838 = vmatprep.subr.mxu0 0.0
        %839 = vmatpush1.xpose.msra.mxu0 0.0
        %840 = vmatprep.subr.mxu0 0.0
        %841 = vmatpush1.xpose.msra.mxu0 0.0
        %842 = vmatprep.subr.mxu0 0.0
        %843 = vmatpush1.xpose.msra.mxu0 0.0
        %844 = vmatprep.subr.mxu0 0.0
        %845 = vmatpush1.xpose.msra.mxu0 0.0
        %846 = vmatprep.subr.mxu0 0.0
        %847 = vmatpush1.xpose.msra.mxu0 0.0
        %848 = vmatprep.subr.mxu0 0.0
        %849 = vmatpush1.xpose.msra.mxu0 0.0
        %850 = vmatprep.subr.mxu0 0.0
        %851 = vmatpush1.xpose.msra.mxu0 0.0
        %852 = vmatprep.mubr.f32.mxu0 0.0
        %853 = vmatmul.mubr.f32.gmra.mrb[0].mxu0 %v783
        %v854 = vpop.f32.mrb[0].mxu0
        %v855 = vadd.f32 0.0, %v854
        %v856 = vpop.f32.mrb[0].mxu0
        %857 = vdwg.mxu0
        %v858 = vsel %vm781, %v855, -inf
        %859 = vmax.xlane.f32.xlu0 %v858
        %v860 = vpop.xlane.xlu0 %859
        %v861 = vsub.f32 %v855, %v860
        %v862 = vmul.f32 %v861, 1.442695
        %v863 = vpow.pop %v862
        %v864 = vsel %vm781, %v863, 0.0
        %865 = vadd.xlane.f32.xlu0 %v864
        %v866 = vpop.xlane.xlu0 %865
        %v867 = vrcp.pop %v866
        %v868 = vmul.f32 %v866, %v867
        %v869 = vsub.f32 2.0, %v868
        %v870 = vmul.f32 %v867, %v869
        %v871 = vmul.f32 %v863, %v870
        %v873 = vsel %vm781, %v871, 0
        %875 = vmatprep.subr.mxu0 0.0
        %876 = vmatpush1.msra.mxu0 %v780
        %877 = vmatprep.subr.mxu0 0.0
        %878 = vmatpush1.msra.mxu0 0.0
        %879 = vmatprep.subr.mxu0 0.0
        %880 = vmatpush1.msra.mxu0 0.0
        %881 = vmatprep.subr.mxu0 0.0
        %882 = vmatpush1.msra.mxu0 0.0
        %883 = vmatprep.subr.mxu0 0.0
        %884 = vmatpush1.msra.mxu0 0.0
        %885 = vmatprep.subr.mxu0 0.0
        %886 = vmatpush1.msra.mxu0 0.0
        %887 = vmatprep.subr.mxu0 0.0
        %888 = vmatpush1.msra.mxu0 0.0
        %889 = vmatprep.subr.mxu0 0.0
        %890 = vmatpush1.msra.mxu0 0.0
        %891 = vmatprep.subr.mxu0 0.0
        %892 = vmatpush1.msra.mxu0 0.0
        %893 = vmatprep.subr.mxu0 0.0
        %894 = vmatpush1.msra.mxu0 0.0
        %895 = vmatprep.subr.mxu0 0.0
        %896 = vmatpush1.msra.mxu0 0.0
        %897 = vmatprep.subr.mxu0 0.0
        %898 = vmatpush1.msra.mxu0 0.0
        %899 = vmatprep.subr.mxu0 0.0
        %900 = vmatpush1.msra.mxu0 0.0
        %901 = vmatprep.subr.mxu0 0.0
        %902 = vmatpush1.msra.mxu0 0.0
        %903 = vmatprep.subr.mxu0 0.0
        %904 = vmatpush1.msra.mxu0 0.0
        %905 = vmatprep.subr.mxu0 0.0
        %906 = vmatpush1.msra.mxu0 0.0
        %907 = vmatprep.subr.mxu0 0.0
        %908 = vmatpush1.msra.mxu0 0.0
        %909 = vmatprep.subr.mxu0 0.0
        %910 = vmatpush1.msra.mxu0 0.0
        %911 = vmatprep.subr.mxu0 0.0
        %912 = vmatpush1.msra.mxu0 0.0
        %913 = vmatprep.subr.mxu0 0.0
        %914 = vmatpush1.msra.mxu0 0.0
        %915 = vmatprep.subr.mxu0 0.0
        %916 = vmatpush1.msra.mxu0 0.0
        %917 = vmatprep.subr.mxu0 0.0
        %918 = vmatpush1.msra.mxu0 0.0
        %919 = vmatprep.subr.mxu0 0.0
        %920 = vmatpush1.msra.mxu0 0.0
        %921 = vmatprep.subr.mxu0 0.0
        %922 = vmatpush1.msra.mxu0 0.0
        %923 = vmatprep.subr.mxu0 0.0
        %924 = vmatpush1.msra.mxu0 0.0
        %925 = vmatprep.subr.mxu0 0.0
        %926 = vmatpush1.msra.mxu0 0.0
        %927 = vmatprep.subr.mxu0 0.0
        %928 = vmatpush1.msra.mxu0 0.0
        %929 = vmatprep.subr.mxu0 0.0
        %930 = vmatpush1.msra.mxu0 0.0
        %931 = vmatprep.subr.mxu0 0.0
        %932 = vmatpush1.msra.mxu0 0.0
        %933 = vmatprep.subr.mxu0 0.0
        %934 = vmatpush1.msra.mxu0 0.0
        %935 = vmatprep.subr.mxu0 0.0
        %936 = vmatpush1.msra.mxu0 0.0
        %937 = vmatprep.subr.mxu0 0.0
        %938 = vmatpush1.msra.mxu0 0.0
        %939 = vmatprep.mubr.f32.mxu0 0.0
        %940 = vmatmul.mubr.f32.gmra.mrb[0].mxu0 %v873
        %v941 = vpop.f32.mrb[0].mxu0
        %v942 = vadd.f32 0.0, %v941
        %v943 = vpop.f32.mrb[0].mxu0
        %944 = vdwg.mxu0
        %945 = vst.msk [vmem:[#allocation5] sm:$0xff] %vm781, %v942
        %v946 = vld [vmem:[#allocation4] sm:$0xff]
        %v947 = vld [vmem:[#allocation2] sm:$0xff]
        %v948 = vld [vmem:[#allocation3] sm:$0xff]
        %950 = vrot.lane.b32.xlu0 %v946, 120
        %v951 = vpop.permute.xlu0 %950
        %953 = vrot.lane.b32.xlu0 %v947, 120
        %v954 = vpop.permute.xlu0 %953
        %v955 = vsel %vm781, %v951, 0
        %v957 = vsel %vm781, %v954, 0
        %959 = vmatprep.subr.mxu0 0.0
        %960 = vmatpush1.xpose.msra.mxu0 %v957
        %961 = vmatprep.subr.mxu0 0.0
        %962 = vmatpush1.xpose.msra.mxu0 0.0
        %963 = vmatprep.subr.mxu0 0.0
        %964 = vmatpush1.xpose.msra.mxu0 0.0
        %965 = vmatprep.subr.mxu0 0.0
        %966 = vmatpush1.xpose.msra.mxu0 0.0
        %967 = vmatprep.subr.mxu0 0.0
        %968 = vmatpush1.xpose.msra.mxu0 0.0
        %969 = vmatprep.subr.mxu0 0.0
        %970 = vmatpush1.xpose.msra.mxu0 0.0
        %971 = vmatprep.subr.mxu0 0.0
        %972 = vmatpush1.xpose.msra.mxu0 0.0
        %973 = vmatprep.subr.mxu0 0.0
        %974 = vmatpush1.xpose.msra.mxu0 0.0
        %975 = vmatprep.subr.mxu0 0.0
        %976 = vmatpush1.xpose.msra.mxu0 0.0
        %977 = vmatprep.subr.mxu0 0.0
        %978 = vmatpush1.xpose.msra.mxu0 0.0
        %979 = vmatprep.subr.mxu0 0.0
        %980 = vmatpush1.xpose.msra.mxu0 0.0
        %981 = vmatprep.subr.mxu0 0.0
        %982 = vmatpush1.xpose.msra.mxu0 0.0
        %983 = vmatprep.subr.mxu0 0.0
        %984 = vmatpush1.xpose.msra.mxu0 0.0
        %985 = vmatprep.subr.mxu0 0.0
        %986 = vmatpush1.xpose.msra.mxu0 0.0
        %987 = vmatprep.subr.mxu0 0.0
        %988 = vmatpush1.xpose.msra.mxu0 0.0
        %989 = vmatprep.subr.mxu0 0.0
        %990 = vmatpush1.xpose.msra.mxu0 0.0
        %991 = vmatprep.subr.mxu0 0.0
        %992 = vmatpush1.xpose.msra.mxu0 0.0
        %993 = vmatprep.subr.mxu0 0.0
        %994 = vmatpush1.xpose.msra.mxu0 0.0
        %995 = vmatprep.subr.mxu0 0.0
        %996 = vmatpush1.xpose.msra.mxu0 0.0
        %997 = vmatprep.subr.mxu0 0.0
        %998 = vmatpush1.xpose.msra.mxu0 0.0
        %999 = vmatprep.subr.mxu0 0.0
        %1000 = vmatpush1.xpose.msra.mxu0 0.0
        %1001 = vmatprep.subr.mxu0 0.0
        %1002 = vmatpush1.xpose.msra.mxu0 0.0
        %1003 = vmatprep.subr.mxu0 0.0
        %1004 = vmatpush1.xpose.msra.mxu0 0.0
        %1005 = vmatprep.subr.mxu0 0.0
        %1006 = vmatpush1.xpose.msra.mxu0 0.0
        %1007 = vmatprep.subr.mxu0 0.0
        %1008 = vmatpush1.xpose.msra.mxu0 0.0
        %1009 = vmatprep.subr.mxu0 0.0
        %1010 = vmatpush1.xpose.msra.mxu0 0.0
        %1011 = vmatprep.subr.mxu0 0.0
        %1012 = vmatpush1.xpose.msra.mxu0 0.0
        %1013 = vmatprep.subr.mxu0 0.0
        %1014 = vmatpush1.xpose.msra.mxu0 0.0
        %1015 = vmatprep.subr.mxu0 0.0
        %1016 = vmatpush1.xpose.msra.mxu0 0.0
        %1017 = vmatprep.subr.mxu0 0.0
        %1018 = vmatpush1.xpose.msra.mxu0 0.0
        %1019 = vmatprep.subr.mxu0 0.0
        %1020 = vmatpush1.xpose.msra.mxu0 0.0
        %1021 = vmatprep.subr.mxu0 0.0
        %1022 = vmatpush1.xpose.msra.mxu0 0.0
        %1023 = vmatprep.mubr.f32.mxu0 0.0
        %1024 = vmatmul.mubr.f32.gmra.mrb[0].mxu0 %v955
        %v1025 = vpop.f32.mrb[0].mxu0
        %v1026 = vadd.f32 0.0, %v1025
        %v1027 = vpop.f32.mrb[0].mxu0
        %1028 = vdwg.mxu0
        %v1029 = vsel %vm781, %v1026, -inf
        %1030 = vmax.xlane.f32.xlu0 %v1029
        %v1031 = vpop.xlane.xlu0 %1030
        %v1032 = vsub.f32 %v1026, %v1031
        %v1033 = vmul.f32 %v1032, 1.442695
        %v1034 = vpow.pop %v1033
        %v1035 = vsel %vm781, %v1034, 0.0
        %1036 = vadd.xlane.f32.xlu0 %v1035
        %v1037 = vpop.xlane.xlu0 %1036
        %v1038 = vrcp.pop %v1037
        %v1039 = vmul.f32 %v1037, %v1038
        %v1040 = vsub.f32 2.0, %v1039
        %v1041 = vmul.f32 %v1038, %v1040
        %v1042 = vmul.f32 %v1034, %v1041
        %1044 = vrot.lane.b32.xlu0 %v948, 120
        %v1045 = vpop.permute.xlu0 %1044
        %v1048 = vsel %vm781, %v1042, 0
        %1050 = vmatprep.subr.mxu0 0.0
        %1051 = vmatpush1.msra.mxu0 %v1045
        %1052 = vmatprep.subr.mxu0 0.0
        %1053 = vmatpush1.msra.mxu0 0.0
        %1054 = vmatprep.subr.mxu0 0.0
        %1055 = vmatpush1.msra.mxu0 0.0
        %1056 = vmatprep.subr.mxu0 0.0
        %1057 = vmatpush1.msra.mxu0 0.0
        %1058 = vmatprep.subr.mxu0 0.0
        %1059 = vmatpush1.msra.mxu0 0.0
        %1060 = vmatprep.subr.mxu0 0.0
        %1061 = vmatpush1.msra.mxu0 0.0
        %1062 = vmatprep.subr.mxu0 0.0
        %1063 = vmatpush1.msra.mxu0 0.0
        %1064 = vmatprep.subr.mxu0 0.0
        %1065 = vmatpush1.msra.mxu0 0.0
        %1066 = vmatprep.subr.mxu0 0.0
        %1067 = vmatpush1.msra.mxu0 0.0
        %1068 = vmatprep.subr.mxu0 0.0
        %1069 = vmatpush1.msra.mxu0 0.0
        %1070 = vmatprep.subr.mxu0 0.0
        %1071 = vmatpush1.msra.mxu0 0.0
        %1072 = vmatprep.subr.mxu0 0.0
        %1073 = vmatpush1.msra.mxu0 0.0
        %1074 = vmatprep.subr.mxu0 0.0
        %1075 = vmatpush1.msra.mxu0 0.0
        %1076 = vmatprep.subr.mxu0 0.0
        %1077 = vmatpush1.msra.mxu0 0.0
        %1078 = vmatprep.subr.mxu0 0.0
        %1079 = vmatpush1.msra.mxu0 0.0
        %1080 = vmatprep.subr.mxu0 0.0
        %1081 = vmatpush1.msra.mxu0 0.0
        %1082 = vmatprep.subr.mxu0 0.0
        %1083 = vmatpush1.msra.mxu0 0.0
        %1084 = vmatprep.subr.mxu0 0.0
        %1085 = vmatpush1.msra.mxu0 0.0
        %1086 = vmatprep.subr.mxu0 0.0
        %1087 = vmatpush1.msra.mxu0 0.0
        %1088 = vmatprep.subr.mxu0 0.0
        %1089 = vmatpush1.msra.mxu0 0.0
        %1090 = vmatprep.subr.mxu0 0.0
        %1091 = vmatpush1.msra.mxu0 0.0
        %1092 = vmatprep.subr.mxu0 0.0
        %1093 = vmatpush1.msra.mxu0 0.0
        %1094 = vmatprep.subr.mxu0 0.0
        %1095 = vmatpush1.msra.mxu0 0.0
        %1096 = vmatprep.subr.mxu0 0.0
        %1097 = vmatpush1.msra.mxu0 0.0
        %1098 = vmatprep.subr.mxu0 0.0
        %1099 = vmatpush1.msra.mxu0 0.0
        %1100 = vmatprep.subr.mxu0 0.0
        %1101 = vmatpush1.msra.mxu0 0.0
        %1102 = vmatprep.subr.mxu0 0.0
        %1103 = vmatpush1.msra.mxu0 0.0
        %1104 = vmatprep.subr.mxu0 0.0
        %1105 = vmatpush1.msra.mxu0 0.0
        %1106 = vmatprep.subr.mxu0 0.0
        %1107 = vmatpush1.msra.mxu0 0.0
        %1108 = vmatprep.subr.mxu0 0.0
        %1109 = vmatpush1.msra.mxu0 0.0
        %1110 = vmatprep.subr.mxu0 0.0
        %1111 = vmatpush1.msra.mxu0 0.0
        %1112 = vmatprep.subr.mxu0 0.0
        %1113 = vmatpush1.msra.mxu0 0.0
        %1114 = vmatprep.mubr.f32.mxu0 0.0
        %1115 = vmatmul.mubr.f32.gmra.mrb[0].mxu0 %v1048
        %v1116 = vpop.f32.mrb[0].mxu0
        %v1117 = vadd.f32 0.0, %v1116
        %v1118 = vpop.f32.mrb[0].mxu0
        %1119 = vdwg.mxu0
        %1121 = vrot.lane.b32.xlu0 %v1117, 8
        %v1122 = vpop.permute.xlu0 %1121
        %vm1124 = vcmask 130112
        %1125 = vst.msk [vmem:[#allocation5] sm:$0xff] %vm1124, %v1122
        %v1126 = vld [vmem:[#allocation4] sm:$0xff]
        %v1127 = vld [vmem:[#allocation2] sm:$0xff]
        %v1128 = vld [vmem:[#allocation3] sm:$0xff]
        %1130 = vrot.lane.b32.xlu0 %v1126, 112
        %v1131 = vpop.permute.xlu0 %1130
        %1133 = vrot.lane.b32.xlu0 %v1127, 112
        %v1134 = vpop.permute.xlu0 %1133
        %v1135 = vsel %vm781, %v1131, 0
        %v1137 = vsel %vm781, %v1134, 0
        %1139 = vmatprep.subr.mxu0 0.0
        %1140 = vmatpush1.xpose.msra.mxu0 %v1137
        %1141 = vmatprep.subr.mxu0 0.0
        %1142 = vmatpush1.xpose.msra.mxu0 0.0
        %1143 = vmatprep.subr.mxu0 0.0
        %1144 = vmatpush1.xpose.msra.mxu0 0.0
        %1145 = vmatprep.subr.mxu0 0.0
        %1146 = vmatpush1.xpose.msra.mxu0 0.0
        %1147 = vmatprep.subr.mxu0 0.0
        %1148 = vmatpush1.xpose.msra.mxu0 0.0
        %1149 = vmatprep.subr.mxu0 0.0
        %1150 = vmatpush1.xpose.msra.mxu0 0.0
        %1151 = vmatprep.subr.mxu0 0.0
        %1152 = vmatpush1.xpose.msra.mxu0 0.0
        %1153 = vmatprep.subr.mxu0 0.0
        %1154 = vmatpush1.xpose.msra.mxu0 0.0
        %1155 = vmatprep.subr.mxu0 0.0
        %1156 = vmatpush1.xpose.msra.mxu0 0.0
        %1157 = vmatprep.subr.mxu0 0.0
        %1158 = vmatpush1.xpose.msra.mxu0 0.0
        %1159 = vmatprep.subr.mxu0 0.0
        %1160 = vmatpush1.xpose.msra.mxu0 0.0
        %1161 = vmatprep.subr.mxu0 0.0
        %1162 = vmatpush1.xpose.msra.mxu0 0.0
        %1163 = vmatprep.subr.mxu0 0.0
        %1164 = vmatpush1.xpose.msra.mxu0 0.0
        %1165 = vmatprep.subr.mxu0 0.0
        %1166 = vmatpush1.xpose.msra.mxu0 0.0
        %1167 = vmatprep.subr.mxu0 0.0
        %1168 = vmatpush1.xpose.msra.mxu0 0.0
        %1169 = vmatprep.subr.mxu0 0.0
        %1170 = vmatpush1.xpose.msra.mxu0 0.0
        %1171 = vmatprep.subr.mxu0 0.0
        %1172 = vmatpush1.xpose.msra.mxu0 0.0
        %1173 = vmatprep.subr.mxu0 0.0
        %1174 = vmatpush1.xpose.msra.mxu0 0.0
        %1175 = vmatprep.subr.mxu0 0.0
        %1176 = vmatpush1.xpose.msra.mxu0 0.0
        %1177 = vmatprep.subr.mxu0 0.0
        %1178 = vmatpush1.xpose.msra.mxu0 0.0
        %1179 = vmatprep.subr.mxu0 0.0
        %1180 = vmatpush1.xpose.msra.mxu0 0.0
        %1181 = vmatprep.subr.mxu0 0.0
        %1182 = vmatpush1.xpose.msra.mxu0 0.0
        %1183 = vmatprep.subr.mxu0 0.0
        %1184 = vmatpush1.xpose.msra.mxu0 0.0
        %1185 = vmatprep.subr.mxu0 0.0
        %1186 = vmatpush1.xpose.msra.mxu0 0.0
        %1187 = vmatprep.subr.mxu0 0.0
        %1188 = vmatpush1.xpose.msra.mxu0 0.0
        %1189 = vmatprep.subr.mxu0 0.0
        %1190 = vmatpush1.xpose.msra.mxu0 0.0
        %1191 = vmatprep.subr.mxu0 0.0
        %1192 = vmatpush1.xpose.msra.mxu0 0.0
        %1193 = vmatprep.subr.mxu0 0.0
        %1194 = vmatpush1.xpose.msra.mxu0 0.0
        %1195 = vmatprep.subr.mxu0 0.0
        %1196 = vmatpush1.xpose.msra.mxu0 0.0
        %1197 = vmatprep.subr.mxu0 0.0
        %1198 = vmatpush1.xpose.msra.mxu0 0.0
        %1199 = vmatprep.subr.mxu0 0.0
        %1200 = vmatpush1.xpose.msra.mxu0 0.0
        %1201 = vmatprep.subr.mxu0 0.0
        %1202 = vmatpush1.xpose.msra.mxu0 0.0
        %1203 = vmatprep.mubr.f32.mxu0 0.0
        %1204 = vmatmul.mubr.f32.gmra.mrb[0].mxu0 %v1135
        %v1205 = vpop.f32.mrb[0].mxu0
        %v1206 = vadd.f32 0.0, %v1205
        %v1207 = vpop.f32.mrb[0].mxu0
        %1208 = vdwg.mxu0
        %v1209 = vsel %vm781, %v1206, -inf
        %1210 = vmax.xlane.f32.xlu0 %v1209
        %v1211 = vpop.xlane.xlu0 %1210
        %v1212 = vsub.f32 %v1206, %v1211
        %v1213 = vmul.f32 %v1212, 1.442695
        %v1214 = vpow.pop %v1213
        %v1215 = vsel %vm781, %v1214, 0.0
        %1216 = vadd.xlane.f32.xlu0 %v1215
        %v1217 = vpop.xlane.xlu0 %1216
        %v1218 = vrcp.pop %v1217
        %v1219 = vmul.f32 %v1217, %v1218
        %v1220 = vsub.f32 2.0, %v1219
        %v1221 = vmul.f32 %v1218, %v1220
        %v1222 = vmul.f32 %v1214, %v1221
        %1224 = vrot.lane.b32.xlu0 %v1128, 112
        %v1225 = vpop.permute.xlu0 %1224
        %v1228 = vsel %vm781, %v1222, 0
        %1230 = vmatprep.subr.mxu0 0.0
        %1231 = vmatpush1.msra.mxu0 %v1225
        %1232 = vmatprep.subr.mxu0 0.0
        %1233 = vmatpush1.msra.mxu0 0.0
        %1234 = vmatprep.subr.mxu0 0.0
        %1235 = vmatpush1.msra.mxu0 0.0
        %1236 = vmatprep.subr.mxu0 0.0
        %1237 = vmatpush1.msra.mxu0 0.0
        %1238 = vmatprep.subr.mxu0 0.0
        %1239 = vmatpush1.msra.mxu0 0.0
        %1240 = vmatprep.subr.mxu0 0.0
        %1241 = vmatpush1.msra.mxu0 0.0
        %1242 = vmatprep.subr.mxu0 0.0
        %1243 = vmatpush1.msra.mxu0 0.0
        %1244 = vmatprep.subr.mxu0 0.0
        %1245 = vmatpush1.msra.mxu0 0.0
        %1246 = vmatprep.subr.mxu0 0.0
        %1247 = vmatpush1.msra.mxu0 0.0
        %1248 = vmatprep.subr.mxu0 0.0
        %1249 = vmatpush1.msra.mxu0 0.0
        %1250 = vmatprep.subr.mxu0 0.0
        %1251 = vmatpush1.msra.mxu0 0.0
        %1252 = vmatprep.subr.mxu0 0.0
        %1253 = vmatpush1.msra.mxu0 0.0
        %1254 = vmatprep.subr.mxu0 0.0
        %1255 = vmatpush1.msra.mxu0 0.0
        %1256 = vmatprep.subr.mxu0 0.0
        %1257 = vmatpush1.msra.mxu0 0.0
        %1258 = vmatprep.subr.mxu0 0.0
        %1259 = vmatpush1.msra.mxu0 0.0
        %1260 = vmatprep.subr.mxu0 0.0
        %1261 = vmatpush1.msra.mxu0 0.0
        %1262 = vmatprep.subr.mxu0 0.0
        %1263 = vmatpush1.msra.mxu0 0.0
        %1264 = vmatprep.subr.mxu0 0.0
        %1265 = vmatpush1.msra.mxu0 0.0
        %1266 = vmatprep.subr.mxu0 0.0
        %1267 = vmatpush1.msra.mxu0 0.0
        %1268 = vmatprep.subr.mxu0 0.0
        %1269 = vmatpush1.msra.mxu0 0.0
        %1270 = vmatprep.subr.mxu0 0.0
        %1271 = vmatpush1.msra.mxu0 0.0
        %1272 = vmatprep.subr.mxu0 0.0
        %1273 = vmatpush1.msra.mxu0 0.0
        %1274 = vmatprep.subr.mxu0 0.0
        %1275 = vmatpush1.msra.mxu0 0.0
        %1276 = vmatprep.subr.mxu0 0.0
        %1277 = vmatpush1.msra.mxu0 0.0
        %1278 = vmatprep.subr.mxu0 0.0
        %1279 = vmatpush1.msra.mxu0 0.0
        %1280 = vmatprep.subr.mxu0 0.0
        %1281 = vmatpush1.msra.mxu0 0.0
        %1282 = vmatprep.subr.mxu0 0.0
        %1283 = vmatpush1.msra.mxu0 0.0
        %1284 = vmatprep.subr.mxu0 0.0
        %1285 = vmatpush1.msra.mxu0 0.0
        %1286 = vmatprep.subr.mxu0 0.0
        %1287 = vmatpush1.msra.mxu0 0.0
        %1288 = vmatprep.subr.mxu0 0.0
        %1289 = vmatpush1.msra.mxu0 0.0
        %1290 = vmatprep.subr.mxu0 0.0
        %1291 = vmatpush1.msra.mxu0 0.0
        %1292 = vmatprep.subr.mxu0 0.0
        %1293 = vmatpush1.msra.mxu0 0.0
        %1294 = vmatprep.mubr.f32.mxu0 0.0
        %1295 = vmatmul.mubr.f32.gmra.mrb[0].mxu0 %v1228
        %v1296 = vpop.f32.mrb[0].mxu0
        %v1297 = vadd.f32 0.0, %v1296
        %v1298 = vpop.f32.mrb[0].mxu0
        %1299 = vdwg.mxu0
        %1301 = vrot.lane.b32.xlu0 %v1297, 16
        %v1302 = vpop.permute.xlu0 %1301
        %vm1304 = vcmask 195712
        %1305 = vst.msk [vmem:[#allocation5] sm:$0xff] %vm1304, %v1302
        %v1306 = vld [vmem:[#allocation4] sm:$0xff]
        %v1307 = vld [vmem:[#allocation2] sm:$0xff]
        %v1308 = vld [vmem:[#allocation3] sm:$0xff]
        %1310 = vrot.lane.b32.xlu0 %v1306, 104
        %v1311 = vpop.permute.xlu0 %1310
        %1313 = vrot.lane.b32.xlu0 %v1307, 104
        %v1314 = vpop.permute.xlu0 %1313
        %v1315 = vsel %vm781, %v1311, 0
        %v1317 = vsel %vm781, %v1314, 0
        %1319 = vmatprep.subr.mxu0 0.0
        %1320 = vmatpush1.xpose.msra.mxu0 %v1317
        %1321 = vmatprep.subr.mxu0 0.0
        %1322 = vmatpush1.xpose.msra.mxu0 0.0
        %1323 = vmatprep.subr.mxu0 0.0
        %1324 = vmatpush1.xpose.msra.mxu0 0.0
        %1325 = vmatprep.subr.mxu0 0.0
        %1326 = vmatpush1.xpose.msra.mxu0 0.0
        %1327 = vmatprep.subr.mxu0 0.0
        %1328 = vmatpush1.xpose.msra.mxu0 0.0
        %1329 = vmatprep.subr.mxu0 0.0
        %1330 = vmatpush1.xpose.msra.mxu0 0.0
        %1331 = vmatprep.subr.mxu0 0.0
        %1332 = vmatpush1.xpose.msra.mxu0 0.0
        %1333 = vmatprep.subr.mxu0 0.0
        %1334 = vmatpush1.xpose.msra.mxu0 0.0
        %1335 = vmatprep.subr.mxu0 0.0
        %1336 = vmatpush1.xpose.msra.mxu0 0.0
        %1337 = vmatprep.subr.mxu0 0.0
        %1338 = vmatpush1.xpose.msra.mxu0 0.0
        %1339 = vmatprep.subr.mxu0 0.0
        %1340 = vmatpush1.xpose.msra.mxu0 0.0
        %1341 = vmatprep.subr.mxu0 0.0
        %1342 = vmatpush1.xpose.msra.mxu0 0.0
        %1343 = vmatprep.subr.mxu0 0.0
        %1344 = vmatpush1.xpose.msra.mxu0 0.0
        %1345 = vmatprep.subr.mxu0 0.0
        %1346 = vmatpush1.xpose.msra.mxu0 0.0
        %1347 = vmatprep.subr.mxu0 0.0
        %1348 = vmatpush1.xpose.msra.mxu0 0.0
        %1349 = vmatprep.subr.mxu0 0.0
        %1350 = vmatpush1.xpose.msra.mxu0 0.0
        %1351 = vmatprep.subr.mxu0 0.0
        %1352 = vmatpush1.xpose.msra.mxu0 0.0
        %1353 = vmatprep.subr.mxu0 0.0
        %1354 = vmatpush1.xpose.msra.mxu0 0.0
        %1355 = vmatprep.subr.mxu0 0.0
        %1356 = vmatpush1.xpose.msra.mxu0 0.0
        %1357 = vmatprep.subr.mxu0 0.0
        %1358 = vmatpush1.xpose.msra.mxu0 0.0
        %1359 = vmatprep.subr.mxu0 0.0
        %1360 = vmatpush1.xpose.msra.mxu0 0.0
        %1361 = vmatprep.subr.mxu0 0.0
        %1362 = vmatpush1.xpose.msra.mxu0 0.0
        %1363 = vmatprep.subr.mxu0 0.0
        %1364 = vmatpush1.xpose.msra.mxu0 0.0
        %1365 = vmatprep.subr.mxu0 0.0
        %1366 = vmatpush1.xpose.msra.mxu0 0.0
        %1367 = vmatprep.subr.mxu0 0.0
        %1368 = vmatpush1.xpose.msra.mxu0 0.0
        %1369 = vmatprep.subr.mxu0 0.0
        %1370 = vmatpush1.xpose.msra.mxu0 0.0
        %1371 = vmatprep.subr.mxu0 0.0
        %1372 = vmatpush1.xpose.msra.mxu0 0.0
        %1373 = vmatprep.subr.mxu0 0.0
        %1374 = vmatpush1.xpose.msra.mxu0 0.0
        %1375 = vmatprep.subr.mxu0 0.0
        %1376 = vmatpush1.xpose.msra.mxu0 0.0
        %1377 = vmatprep.subr.mxu0 0.0
        %1378 = vmatpush1.xpose.msra.mxu0 0.0
        %1379 = vmatprep.subr.mxu0 0.0
        %1380 = vmatpush1.xpose.msra.mxu0 0.0
        %1381 = vmatprep.subr.mxu0 0.0
        %1382 = vmatpush1.xpose.msra.mxu0 0.0
        %1383 = vmatprep.mubr.f32.mxu0 0.0
        %1384 = vmatmul.mubr.f32.gmra.mrb[0].mxu0 %v1315
        %v1385 = vpop.f32.mrb[0].mxu0
        %v1386 = vadd.f32 0.0, %v1385
        %v1387 = vpop.f32.mrb[0].mxu0
        %1388 = vdwg.mxu0
        %v1389 = vsel %vm781, %v1386, -inf
        %1390 = vmax.xlane.f32.xlu0 %v1389
        %v1391 = vpop.xlane.xlu0 %1390
        %v1392 = vsub.f32 %v1386, %v1391
        %v1393 = vmul.f32 %v1392, 1.442695
        %v1394 = vpow.pop %v1393
        %v1395 = vsel %vm781, %v1394, 0.0
        %1396 = vadd.xlane.f32.xlu0 %v1395
        %v1397 = vpop.xlane.xlu0 %1396
        %v1398 = vrcp.pop %v1397
        %v1399 = vmul.f32 %v1397, %v1398
        %v1400 = vsub.f32 2.0, %v1399
        %v1401 = vmul.f32 %v1398, %v1400
        %v1402 = vmul.f32 %v1394, %v1401
        %1404 = vrot.lane.b32.xlu0 %v1308, 104
        %v1405 = vpop.permute.xlu0 %1404
        %v1408 = vsel %vm781, %v1402, 0
        %1410 = vmatprep.subr.mxu0 0.0
        %1411 = vmatpush1.msra.mxu0 %v1405
        %1412 = vmatprep.subr.mxu0 0.0
        %1413 = vmatpush1.msra.mxu0 0.0
        %1414 = vmatprep.subr.mxu0 0.0
        %1415 = vmatpush1.msra.mxu0 0.0
        %1416 = vmatprep.subr.mxu0 0.0
        %1417 = vmatpush1.msra.mxu0 0.0
        %1418 = vmatprep.subr.mxu0 0.0
        %1419 = vmatpush1.msra.mxu0 0.0
        %1420 = vmatprep.subr.mxu0 0.0
        %1421 = vmatpush1.msra.mxu0 0.0
        %1422 = vmatprep.subr.mxu0 0.0
        %1423 = vmatpush1.msra.mxu0 0.0
        %1424 = vmatprep.subr.mxu0 0.0
        %1425 = vmatpush1.msra.mxu0 0.0
        %1426 = vmatprep.subr.mxu0 0.0
        %1427 = vmatpush1.msra.mxu0 0.0
        %1428 = vmatprep.subr.mxu0 0.0
        %1429 = vmatpush1.msra.mxu0 0.0
        %1430 = vmatprep.subr.mxu0 0.0
        %1431 = vmatpush1.msra.mxu0 0.0
        %1432 = vmatprep.subr.mxu0 0.0
        %1433 = vmatpush1.msra.mxu0 0.0
        %1434 = vmatprep.subr.mxu0 0.0
        %1435 = vmatpush1.msra.mxu0 0.0
        %1436 = vmatprep.subr.mxu0 0.0
        %1437 = vmatpush1.msra.mxu0 0.0
        %1438 = vmatprep.subr.mxu0 0.0
        %1439 = vmatpush1.msra.mxu0 0.0
        %1440 = vmatprep.subr.mxu0 0.0
        %1441 = vmatpush1.msra.mxu0 0.0
        %1442 = vmatprep.subr.mxu0 0.0
        %1443 = vmatpush1.msra.mxu0 0.0
        %1444 = vmatprep.subr.mxu0 0.0
        %1445 = vmatpush1.msra.mxu0 0.0
        %1446 = vmatprep.subr.mxu0 0.0
        %1447 = vmatpush1.msra.mxu0 0.0
        %1448 = vmatprep.subr.mxu0 0.0
        %1449 = vmatpush1.msra.mxu0 0.0
        %1450 = vmatprep.subr.mxu0 0.0
        %1451 = vmatpush1.msra.mxu0 0.0
        %1452 = vmatprep.subr.mxu0 0.0
        %1453 = vmatpush1.msra.mxu0 0.0
        %1454 = vmatprep.subr.mxu0 0.0
        %1455 = vmatpush1.msra.mxu0 0.0
        %1456 = vmatprep.subr.mxu0 0.0
        %1457 = vmatpush1.msra.mxu0 0.0
        %1458 = vmatprep.subr.mxu0 0.0
        %1459 = vmatpush1.msra.mxu0 0.0
        %1460 = vmatprep.subr.mxu0 0.0
        %1461 = vmatpush1.msra.mxu0 0.0
        %1462 = vmatprep.subr.mxu0 0.0
        %1463 = vmatpush1.msra.mxu0 0.0
        %1464 = vmatprep.subr.mxu0 0.0
        %1465 = vmatpush1.msra.mxu0 0.0
        %1466 = vmatprep.subr.mxu0 0.0
        %1467 = vmatpush1.msra.mxu0 0.0
        %1468 = vmatprep.subr.mxu0 0.0
        %1469 = vmatpush1.msra.mxu0 0.0
        %1470 = vmatprep.subr.mxu0 0.0
        %1471 = vmatpush1.msra.mxu0 0.0
        %1472 = vmatprep.subr.mxu0 0.0
        %1473 = vmatpush1.msra.mxu0 0.0
        %1474 = vmatprep.mubr.f32.mxu0 0.0
        %1475 = vmatmul.mubr.f32.gmra.mrb[0].mxu0 %v1408
        %v1476 = vpop.f32.mrb[0].mxu0
        %v1477 = vadd.f32 0.0, %v1476
        %v1478 = vpop.f32.mrb[0].mxu0
        %1479 = vdwg.mxu0
        %1481 = vrot.lane.b32.xlu0 %v1477, 24
        %v1482 = vpop.permute.xlu0 %1481
        %vm1484 = vcmask 261312
        %1485 = vst.msk [vmem:[#allocation5] sm:$0xff] %vm1484, %v1482
        %v1486 = vld [vmem:[#allocation5] sm:$0xff]
        %v1487 = vld [vmem:[%s9] sm:$0xff]
        %v1488 = vld [vmem:[%s9 + $0x8] sm:$0xff]
        %v1489 = vld [vmem:[%s9 + $0x10] sm:$0xff]
        %v1490 = vld [vmem:[%s9 + $0x18] sm:$0xff]
        %v1491 = vld [vmem:[%s10] sm:$0x1]
        %v1493 = vlaneseq
        %v1494 = vshrl.u32 %v1493, 7
        %v1495 = vsub.s32 0, %v1494
        %v1496 = vrot.slane %v1491, %v1495
        %v1499 = vsel %vm703, %v1486, 0
        %1501 = vmatprep.subr.mxu0 0.0
        %1502 = vmatpush1.msra.mxu0 %v1487
        %1503 = vmatprep.subr.mxu0 0.0
        %1504 = vmatpush1.msra.mxu0 %v1488
        %1505 = vmatprep.subr.mxu0 0.0
        %1506 = vmatpush1.msra.mxu0 %v1489
        %1507 = vmatprep.subr.mxu0 0.0
        %1508 = vmatpush1.msra.mxu0 %v1490
        %1509 = vmatprep.subr.mxu0 0.0
        %1510 = vmatpush1.msra.mxu0 0.0
        %1511 = vmatprep.subr.mxu0 0.0
        %1512 = vmatpush1.msra.mxu0 0.0
        %1513 = vmatprep.subr.mxu0 0.0
        %1514 = vmatpush1.msra.mxu0 0.0
        %1515 = vmatprep.subr.mxu0 0.0
        %1516 = vmatpush1.msra.mxu0 0.0
        %1517 = vmatprep.subr.mxu0 0.0
        %1518 = vmatpush1.msra.mxu0 0.0
        %1519 = vmatprep.subr.mxu0 0.0
        %1520 = vmatpush1.msra.mxu0 0.0
        %1521 = vmatprep.subr.mxu0 0.0
        %1522 = vmatpush1.msra.mxu0 0.0
        %1523 = vmatprep.subr.mxu0 0.0
        %1524 = vmatpush1.msra.mxu0 0.0
        %1525 = vmatprep.subr.mxu0 0.0
        %1526 = vmatpush1.msra.mxu0 0.0
        %1527 = vmatprep.subr.mxu0 0.0
        %1528 = vmatpush1.msra.mxu0 0.0
        %1529 = vmatprep.subr.mxu0 0.0
        %1530 = vmatpush1.msra.mxu0 0.0
        %1531 = vmatprep.subr.mxu0 0.0
        %1532 = vmatpush1.msra.mxu0 0.0
        %1533 = vmatprep.subr.mxu0 0.0
        %1534 = vmatpush1.msra.mxu0 0.0
        %1535 = vmatprep.subr.mxu0 0.0
        %1536 = vmatpush1.msra.mxu0 0.0
        %1537 = vmatprep.subr.mxu0 0.0
        %1538 = vmatpush1.msra.mxu0 0.0
        %1539 = vmatprep.subr.mxu0 0.0
        %1540 = vmatpush1.msra.mxu0 0.0
        %1541 = vmatprep.subr.mxu0 0.0
        %1542 = vmatpush1.msra.mxu0 0.0
        %1543 = vmatprep.subr.mxu0 0.0
        %1544 = vmatpush1.msra.mxu0 0.0
        %1545 = vmatprep.subr.mxu0 0.0
        %1546 = vmatpush1.msra.mxu0 0.0
        %1547 = vmatprep.subr.mxu0 0.0
        %1548 = vmatpush1.msra.mxu0 0.0
        %1549 = vmatprep.subr.mxu0 0.0
        %1550 = vmatpush1.msra.mxu0 0.0
        %1551 = vmatprep.subr.mxu0 0.0
        %1552 = vmatpush1.msra.mxu0 0.0
        %1553 = vmatprep.subr.mxu0 0.0
        %1554 = vmatpush1.msra.mxu0 0.0
        %1555 = vmatprep.subr.mxu0 0.0
        %1556 = vmatpush1.msra.mxu0 0.0
        %1557 = vmatprep.subr.mxu0 0.0
        %1558 = vmatpush1.msra.mxu0 0.0
        %1559 = vmatprep.subr.mxu0 0.0
        %1560 = vmatpush1.msra.mxu0 0.0
        %1561 = vmatprep.subr.mxu0 0.0
        %1562 = vmatpush1.msra.mxu0 0.0
        %1563 = vmatprep.subr.mxu0 0.0
        %1564 = vmatpush1.msra.mxu0 0.0
        %1565 = vmatprep.mubr.f32.mxu0 0.0
        %1566 = vmatmul.mubr.f32.gmra.mrb[0].mxu0 %v1499
        %v1567 = vpop.f32.mrb[0].mxu0
        %v1568 = vadd.f32 %v1496, %v1567
        %v1569 = vpop.f32.mrb[0].mxu0
        %1570 = vdwg.mxu0
        %1571 = vst.msk [vmem:[%s513] sm:$0xff] %vm703, %v1568
        %s1572 = sand.u32 %s301, 1
        %s1573 = scalar_lea.sflag [#allocation8], %s1572
        %s1574 = sand.u32 %s301, 1
        %s1575 = smul.addr %s1574, 8
        %s1576 = scalar_lea.vmem [#allocation18], %s1575
        // Predicated region
        $region97: #{tpu_custom_call.1} parent=63 // pred_check
          %p1577 = pneg %p311
        $region98: #{tpu_custom_call.1} parent=63 // pred_check_branch
          %1579 = sbr.rel (%p1577) target = $region100
        $region99: #{tpu_custom_call.1} parent=63 // pred_region
          %s1581 = ssub.s32 128, 128
          %1582 = vsyncadd %s1573, %s1581
          %s1583 = sadd.s32 %s36, %s35
          %s1584 = smul.addr %s1583, 128
          %s1585 = scalar_lea.hbm %s11, %s1584
          %s1587 = sshll.u32 %s1576, 4
          %s1588 = int_to_ptr.vmem [resolvable:$true] %s1587
          %1590 = dma.vmem_to_hbm [thread:$0]  %s1588, 128, %s1585, %s1573
        $region100: #{tpu_custom_call.1} parent=63 // pred_fallthru
          _
      $region64: #{tpu_custom_call.1} parent=5 // pred_fallthru
        _
      %p1591 = scmp.le.s32.totalorder 2, %s26
      // Predicated region
      $region101: #{tpu_custom_call.1} parent=5 // pred_check
        %p1592 = pneg %p1591
      $region102: #{tpu_custom_call.1} parent=5 // pred_check_branch
        %1594 = sbr.rel (%p1592) target = $region104
      $region103: #{tpu_custom_call.1} parent=5 // pred_region
        %s1595 = ssub.s32 %s26, 2
        // Predicated region
        $region105: #{tpu_custom_call.1} parent=103 // pred_check
          %p1596 = pneg %p317
        $region106: #{tpu_custom_call.1} parent=103 // pred_check_branch
          %1598 = sbr.rel (%p1596) target = $region108
        $region107: #{tpu_custom_call.1} parent=103 // pred_region
          %s1599 = sand.u32 %s302, 1
          %s1600 = scalar_lea.sflag [#allocation8], %s1599
          %s1601 = sand.u32 %s302, 1
          %s1602 = smul.addr %s1601, 8
          %s1603 = scalar_lea.vmem [#allocation18], %s1602
          %1604 = dma.done %s1600, 128
        $region108: #{tpu_custom_call.1} parent=103 // pred_fallthru
          _
      $region104: #{tpu_custom_call.1} parent=5 // pred_fallthru
        _
    $region6: #{tpu_custom_call.1} parent=1 // loop_footer
      %s30 = sadd.s32 1, %s26
    $region7: #{tpu_custom_call.1} parent=1 // loop_footer_branch
      %25 = sbr.rel target = $region3
    $region8: #{tpu_custom_call.1} parent=1 // loop_exit
      _
    %1605 = vsyncpa [#allocation7], 1
    %s1606 = scalar_lea.sflag [#allocation7], 1
    %1607 = vsyncpa %s1606, 1
    %1608 = vsyncpa [#allocation10], 1
    %1609 = vsyncpa [#allocation13], 1
    %1610 = vsyncpa [#allocation16], 1
    %1611 = vsyncpa [#allocation8], 1
    %s1612 = scalar_lea.sflag [#allocation8], 1
    %1613 = vsyncpa %s1612, 1

// kernel: tpu_custom_call.1
$region0: #{tpu_custom_call.1}
  #allocation0 [shape = 'u32[]', space=smem, size = 0x4, offset = 0x4, fixed_abs, tag = 'smem constant byte address 0x4 - core index']
  #allocation1 [shape = 'u32[144,128]{1,0:T(1,128)}', space=vmem, size = 0x12000, scoped, tag = 'internal scratch']
  #allocation2 [shape = 'f32[8,32]{1,0:T(8,128)}', space=vmem, size = 0x1000, scoped, tag = 'scratch operand']
  #allocation3 [shape = 'f32[8,32]{1,0:T(8,128)}', space=vmem, size = 0x1000, scoped, tag = 'scratch operand']
  #allocation4 [shape = 'f32[8,32]{1,0:T(8,128)}', space=vmem, size = 0x1000, scoped, tag = 'scratch operand']
  #allocation5 [shape = 'f32[8,32]{1,0:T(8,128)}', space=vmem, size = 0x1000, scoped, tag = 'scratch operand']
  %s0 = inlined_call_operand.hbm [shape: f32[2,8,32], index: 0, kind: input, shape index: {}]
  %s1 = inlined_call_operand.hbm [shape: f32[2,8,32], index: 1, kind: input, shape index: {}]
  %s2 = inlined_call_operand.hbm [shape: f32[2,8,32], index: 2, kind: input, shape index: {}]
  %s3 = inlined_call_operand.hbm [shape: f32[32,32], index: 3, kind: input, shape index: {}]
  %s4 = inlined_call_operand.vmem [shape: f32[1,32], index: 4, kind: input, shape index: {}]
  %s5 = inlined_call_operand.hbm [shape: f32[32,32], index: 5, kind: input, shape index: {}]
  %s6 = inlined_call_operand.vmem [shape: f32[1,32], index: 6, kind: input, shape index: {}]
  %s7 = inlined_call_operand.hbm [shape: f32[32,32], index: 7, kind: input, shape index: {}]
  %s8 = inlined_call_operand.hbm [shape: f32[1,32], index: 8, kind: input, shape index: {}]
  %s9 = inlined_call_operand.vmem [shape: f32[32,32], index: 9, kind: input, shape index: {}]
  %s10 = inlined_call_operand.vmem [shape: f32[1,32], index: 10, kind: input, shape index: {}]
  %s11 = inlined_call_operand.hbm [shape: f32[2,8,32], index: 11, kind: output, shape index: {}]
  %s12 = sld [smem:[#allocation0]]
  $region109: #{tpu_custom_call.1} parent=0
    _
  %s14 = ssub.s32 1, %s12
  %s15 = scalar_select 0, %s14, %s12
  $region1: #{tpu_custom_call.1} parent=0
    #allocation6 [shape = 'u8[8192]{0}', space=vmem, size = 0x2000, scoped, tag = 'input window, operand 0']
    #allocation7 [shape = 's32[2]{0}', space=sflag, size = 0x8, scoped, tag = 'scoped memory for tpu_custom_call.1']
    #allocation8 [shape = 's32[2]{0}', space=sflag, size = 0x8, scoped, tag = 'scoped memory for tpu_custom_call.1']
    #allocation9 [shape = 'u8[8192]{0}', space=vmem, size = 0x2000, scoped, tag = 'input window, operand 1']
    #allocation10 [shape = 's32[2]{0}', space=sflag, size = 0x8, scoped, tag = 'scoped memory for tpu_custom_call.1']
    #allocation11 [shape = 'u8[8192]{0}', space=vmem, size = 0x2000, scoped, tag = 'input window, operand 2']
    #allocation12 [shape = 'u8[16384]{0}', space=vmem, size = 0x4000, scoped, tag = 'input window, operand 3, single buffered']
    #allocation13 [shape = 's32[1]{0}', space=sflag, size = 0x4, scoped, tag = 'scoped memory for tpu_custom_call.1']
    #allocation14 [shape = 'u8[16384]{0}', space=vmem, size = 0x4000, scoped, tag = 'input window, operand 5, single buffered']
    #allocation15 [shape = 'u8[16384]{0}', space=vmem, size = 0x4000, scoped, tag = 'input window, operand 7, single buffered']
    #allocation16 [shape = 's32[1]{0}', space=sflag, size = 0x4, scoped, tag = 'scoped memory for tpu_custom_call.1']
    #allocation17 [shape = 'u8[512]{0}', space=vmem, size = 0x400, scoped, tag = 'input window, operand 8, single buffered']
    #allocation18 [shape = 'u8[8192]{0}', space=vmem, size = 0x2000, scoped, tag = 'output window, operand 0']
    %16 = vsyncpa [#allocation7], 0
    %s17 = scalar_lea.sflag [#allocation7], 1
    %18 = vsyncpa %s17, 0
    %19 = vsyncpa [#allocation10], 0
    %s20 = scalar_lea.sflag [#allocation10], 1
    %21 = vsyncpa %s20, 0
    %22 = vsyncpa [#allocation13], 0
    %23 = vsyncpa [#allocation16], 0
    %24 = vsyncpa [#allocation8], 0
    %s25 = scalar_lea.sflag [#allocation8], 1
    %26 = vsyncpa %s25, 0
    loop: start=0, step=1, limit=4
    $region2: #{tpu_custom_call.1} parent=1 // loop_pre_header
      _
    $region3: #{tpu_custom_call.1} parent=1 // loop_header
      %s28 = sphi 0, %s32
      %p29 = scmp.ge.s32.totalorder %s28, 4
      %s35 = sphi 0, %s47
      %s36 = sphi 0, %s43
      %s37 = sphi 0, %s35
      %s38 = sphi 0, %s36
      %s39 = sphi 0, %s37
      %s40 = sphi 0, %s38
      %s52 = sphi 0, %s54
      %s55 = sphi 0, %s52
      %s56 = sphi 0, %s55
      %s72 = sphi 0, %s56
      %s78 = sphi 0, %s80
      %s81 = sphi 0, %s78
      %s82 = sphi 0, %s81
      %s98 = sphi 0, %s82
      %s104 = sphi 0, %s106
      %s107 = sphi 0, %s104
      %s108 = sphi 0, %s107
      %s124 = sphi 0, %s108
      %s128 = sphi 0, %s128
      %s130 = sphi 0, %s128
      %s131 = sphi 0, %s130
      %s145 = sphi 0, %s131
      %s149 = sphi 0, %s149
      %s151 = sphi 0, %s149
      %s152 = sphi 0, %s151
      %s166 = sphi 0, %s152
      %s170 = sphi 0, %s170
      %s172 = sphi 0, %s170
      %s173 = sphi 0, %s172
      %s187 = sphi 0, %s173
      %s191 = sphi 0, %s191
      %s193 = sphi 0, %s191
      %s194 = sphi 0, %s193
      %s208 = sphi 0, %s194
      %s212 = sphi 0, %s212
      %s214 = sphi 0, %s212
      %s215 = sphi 0, %s214
      %s229 = sphi 0, %s215
      %s233 = sphi 0, %s233
      %s235 = sphi 0, %s233
      %s236 = sphi 0, %s235
      %s250 = sphi 0, %s236
      %s254 = sphi 0, %s254
      %s256 = sphi 0, %s254
      %s257 = sphi 0, %s256
      %s271 = sphi 0, %s257
      %s275 = sphi 0, %s275
      %s277 = sphi 0, %s275
      %s278 = sphi 0, %s277
      %s292 = sphi 0, %s278
      %s300 = sphi 0, %s302
      %s303 = sphi 0, %s300
      %s304 = sphi 0, %s303
      %s320 = sphi 0, %s304
    $region4: #{tpu_custom_call.1} parent=1 // loop_header_branch
      %31 = sbr.rel (%p29) target = $region8
    $region5: #{tpu_custom_call.1} parent=1 // loop_body
      %s33 = ssub.s32 %s28, 1
      %s34 = ssub.s32 %s28, 2
      %s41 = sadd.s32 1, %s36
      %p42 = scmp.ge.s32.totalorder %s41, 1
      %s43 = scalar_select %p42, 0, %s41
      %s44 = sadd.s32 1, %s35
      %s45 = scalar_select %p42, %s44, %s35
      %p46 = scmp.ge.s32.totalorder %s45, 2
      %s47 = scalar_select %p46, 0, %s45
      %s48 = ssub.s32 %s35, %s47
      %s49 = ssub.s32 %s36, %s43
      %s50 = sor.u32 %s48, %s49
      %p51 = scmp.eq.s32.totalorder %s50, 0
      %s53 = sadd.s32 %s52, 1
      %s54 = scalar_select %p51, %s52, %s53
      %p57 = pneg %p51
      %p58 = scmp.eq.s32.totalorder %s28, 1
      %p59 = por %p57, %p58
      %p60 = scmp.ne.s32.totalorder %s52, %s55
      %p61 = scmp.eq.s32.totalorder %s28, 0
      %p62 = por %p60, %p61
      %p63 = scmp.ne.s32.totalorder %s52, %s55
      %p64 = scmp.eq.s32.totalorder %s33, 1
      %p65 = por %p63, %p64
      %p66 = scmp.ne.s32.totalorder %s55, %s56
      %p67 = scmp.eq.s32.totalorder %s33, 0
      %p68 = por %p66, %p67
      %p69 = scmp.ne.s32.totalorder %s55, %s56
      %p70 = scmp.eq.s32.totalorder %s34, 1
      %p71 = por %p69, %p70
      %p73 = scmp.ne.s32.totalorder %s56, %s72
      %p74 = scmp.eq.s32.totalorder %s34, 0
      %p75 = por %p73, %p74
      %s76 = ssub.s32 %s35, %s47
      %p77 = scmp.eq.s32.totalorder %s76, 0
      %s79 = sadd.s32 %s78, 1
      %s80 = scalar_select %p77, %s78, %s79
      %p83 = pneg %p77
      %p84 = scmp.eq.s32.totalorder %s28, 1
      %p85 = por %p83, %p84
      %p86 = scmp.ne.s32.totalorder %s78, %s81
      %p87 = scmp.eq.s32.totalorder %s28, 0
      %p88 = por %p86, %p87
      %p89 = scmp.ne.s32.totalorder %s78, %s81
      %p90 = scmp.eq.s32.totalorder %s33, 1
      %p91 = por %p89, %p90
      %p92 = scmp.ne.s32.totalorder %s81, %s82
      %p93 = scmp.eq.s32.totalorder %s33, 0
      %p94 = por %p92, %p93
      %p95 = scmp.ne.s32.totalorder %s81, %s82
      %p96 = scmp.eq.s32.totalorder %s34, 1
      %p97 = por %p95, %p96
      %p99 = scmp.ne.s32.totalorder %s82, %s98
      %p100 = scmp.eq.s32.totalorder %s34, 0
      %p101 = por %p99, %p100
      %s102 = ssub.s32 %s35, %s47
      %p103 = scmp.eq.s32.totalorder %s102, 0
      %s105 = sadd.s32 %s104, 1
      %s106 = scalar_select %p103, %s104, %s105
      %p109 = pneg %p103
      %p110 = scmp.eq.s32.totalorder %s28, 1
      %p111 = por %p109, %p110
      %p112 = scmp.ne.s32.totalorder %s104, %s107
      %p113 = scmp.eq.s32.totalorder %s28, 0
      %p114 = por %p112, %p113
      %p115 = scmp.ne.s32.totalorder %s104, %s107
      %p116 = scmp.eq.s32.totalorder %s33, 1
      %p117 = por %p115, %p116
      %p118 = scmp.ne.s32.totalorder %s107, %s108
      %p119 = scmp.eq.s32.totalorder %s33, 0
      %p120 = por %p118, %p119
      %p121 = scmp.ne.s32.totalorder %s107, %s108
      %p122 = scmp.eq.s32.totalorder %s34, 1
      %p123 = por %p121, %p122
      %p125 = scmp.ne.s32.totalorder %s108, %s124
      %p126 = scmp.eq.s32.totalorder %s34, 0
      %p127 = por %p125, %p126
      %s129 = sadd.s32 %s128, 1
      %p132 = scmp.eq.s32.totalorder %s28, 1
      %p133 = scmp.ne.s32.totalorder %s128, %s130
      %p134 = scmp.eq.s32.totalorder %s28, 0
      %p135 = por %p133, %p134
      %p136 = scmp.ne.s32.totalorder %s128, %s130
      %p137 = scmp.eq.s32.totalorder %s33, 1
      %p138 = por %p136, %p137
      %p139 = scmp.ne.s32.totalorder %s130, %s131
      %p140 = scmp.eq.s32.totalorder %s33, 0
      %p141 = por %p139, %p140
      %p142 = scmp.ne.s32.totalorder %s130, %s131
      %p143 = scmp.eq.s32.totalorder %s34, 1
      %p144 = por %p142, %p143
      %p146 = scmp.ne.s32.totalorder %s131, %s145
      %p147 = scmp.eq.s32.totalorder %s34, 0
      %p148 = por %p146, %p147
      %s150 = sadd.s32 %s149, 1
      %p153 = scmp.eq.s32.totalorder %s28, 1
      %p154 = scmp.ne.s32.totalorder %s149, %s151
      %p155 = scmp.eq.s32.totalorder %s28, 0
      %p156 = por %p154, %p155
      %p157 = scmp.ne.s32.totalorder %s149, %s151
      %p158 = scmp.eq.s32.totalorder %s33, 1
      %p159 = por %p157, %p158
      %p160 = scmp.ne.s32.totalorder %s151, %s152
      %p161 = scmp.eq.s32.totalorder %s33, 0
      %p162 = por %p160, %p161
      %p163 = scmp.ne.s32.totalorder %s151, %s152
      %p164 = scmp.eq.s32.totalorder %s34, 1
      %p165 = por %p163, %p164
      %p167 = scmp.ne.s32.totalorder %s152, %s166
      %p168 = scmp.eq.s32.totalorder %s34, 0
      %p169 = por %p167, %p168
      %s171 = sadd.s32 %s170, 1
      %p174 = scmp.eq.s32.totalorder %s28, 1
      %p175 = scmp.ne.s32.totalorder %s170, %s172
      %p176 = scmp.eq.s32.totalorder %s28, 0
      %p177 = por %p175, %p176
      %p178 = scmp.ne.s32.totalorder %s170, %s172
      %p179 = scmp.eq.s32.totalorder %s33, 1
      %p180 = por %p178, %p179
      %p181 = scmp.ne.s32.totalorder %s172, %s173
      %p182 = scmp.eq.s32.totalorder %s33, 0
      %p183 = por %p181, %p182
      %p184 = scmp.ne.s32.totalorder %s172, %s173
      %p185 = scmp.eq.s32.totalorder %s34, 1
      %p186 = por %p184, %p185
      %p188 = scmp.ne.s32.totalorder %s173, %s187
      %p189 = scmp.eq.s32.totalorder %s34, 0
      %p190 = por %p188, %p189
      %s192 = sadd.s32 %s191, 1
      %p195 = scmp.eq.s32.totalorder %s28, 1
      %p196 = scmp.ne.s32.totalorder %s191, %s193
      %p197 = scmp.eq.s32.totalorder %s28, 0
      %p198 = por %p196, %p197
      %p199 = scmp.ne.s32.totalorder %s191, %s193
      %p200 = scmp.eq.s32.totalorder %s33, 1
      %p201 = por %p199, %p200
      %p202 = scmp.ne.s32.totalorder %s193, %s194
      %p203 = scmp.eq.s32.totalorder %s33, 0
      %p204 = por %p202, %p203
      %p205 = scmp.ne.s32.totalorder %s193, %s194
      %p206 = scmp.eq.s32.totalorder %s34, 1
      %p207 = por %p205, %p206
      %p209 = scmp.ne.s32.totalorder %s194, %s208
      %p210 = scmp.eq.s32.totalorder %s34, 0
      %p211 = por %p209, %p210
      %s213 = sadd.s32 %s212, 1
      %p216 = scmp.eq.s32.totalorder %s28, 1
      %p217 = scmp.ne.s32.totalorder %s212, %s214
      %p218 = scmp.eq.s32.totalorder %s28, 0
      %p219 = por %p217, %p218
      %p220 = scmp.ne.s32.totalorder %s212, %s214
      %p221 = scmp.eq.s32.totalorder %s33, 1
      %p222 = por %p220, %p221
      %p223 = scmp.ne.s32.totalorder %s214, %s215
      %p224 = scmp.eq.s32.totalorder %s33, 0
      %p225 = por %p223, %p224
      %p226 = scmp.ne.s32.totalorder %s214, %s215
      %p227 = scmp.eq.s32.totalorder %s34, 1
      %p228 = por %p226, %p227
      %p230 = scmp.ne.s32.totalorder %s215, %s229
      %p231 = scmp.eq.s32.totalorder %s34, 0
      %p232 = por %p230, %p231
      %s234 = sadd.s32 %s233, 1
      %p237 = scmp.eq.s32.totalorder %s28, 1
      %p238 = scmp.ne.s32.totalorder %s233, %s235
      %p239 = scmp.eq.s32.totalorder %s28, 0
      %p240 = por %p238, %p239
      %p241 = scmp.ne.s32.totalorder %s233, %s235
      %p242 = scmp.eq.s32.totalorder %s33, 1
      %p243 = por %p241, %p242
      %p244 = scmp.ne.s32.totalorder %s235, %s236
      %p245 = scmp.eq.s32.totalorder %s33, 0
      %p246 = por %p244, %p245
      %p247 = scmp.ne.s32.totalorder %s235, %s236
      %p248 = scmp.eq.s32.totalorder %s34, 1
      %p249 = por %p247, %p248
      %p251 = scmp.ne.s32.totalorder %s236, %s250
      %p252 = scmp.eq.s32.totalorder %s34, 0
      %p253 = por %p251, %p252
      %s255 = sadd.s32 %s254, 1
      %p258 = scmp.eq.s32.totalorder %s28, 1
      %p259 = scmp.ne.s32.totalorder %s254, %s256
      %p260 = scmp.eq.s32.totalorder %s28, 0
      %p261 = por %p259, %p260
      %p262 = scmp.ne.s32.totalorder %s254, %s256
      %p263 = scmp.eq.s32.totalorder %s33, 1
      %p264 = por %p262, %p263
      %p265 = scmp.ne.s32.totalorder %s256, %s257
      %p266 = scmp.eq.s32.totalorder %s33, 0
      %p267 = por %p265, %p266
      %p268 = scmp.ne.s32.totalorder %s256, %s257
      %p269 = scmp.eq.s32.totalorder %s34, 1
      %p270 = por %p268, %p269
      %p272 = scmp.ne.s32.totalorder %s257, %s271
      %p273 = scmp.eq.s32.totalorder %s34, 0
      %p274 = por %p272, %p273
      %s276 = sadd.s32 %s275, 1
      %p279 = scmp.eq.s32.totalorder %s28, 1
      %p280 = scmp.ne.s32.totalorder %s275, %s277
      %p281 = scmp.eq.s32.totalorder %s28, 0
      %p282 = por %p280, %p281
      %p283 = scmp.ne.s32.totalorder %s275, %s277
      %p284 = scmp.eq.s32.totalorder %s33, 1
      %p285 = por %p283, %p284
      %p286 = scmp.ne.s32.totalorder %s277, %s278
      %p287 = scmp.eq.s32.totalorder %s33, 0
      %p288 = por %p286, %p287
      %p289 = scmp.ne.s32.totalorder %s277, %s278
      %p290 = scmp.eq.s32.totalorder %s34, 1
      %p291 = por %p289, %p290
      %p293 = scmp.ne.s32.totalorder %s278, %s292
      %p294 = scmp.eq.s32.totalorder %s34, 0
      %p295 = por %p293, %p294
      %s296 = ssub.s32 %s35, %s47
      %s297 = ssub.s32 %s36, %s43
      %s298 = sor.u32 %s296, %s297
      %p299 = scmp.eq.s32.totalorder %s298, 0
      %s301 = sadd.s32 %s300, 1
      %s302 = scalar_select %p299, %s300, %s301
      %p305 = pneg %p299
      %p306 = scmp.eq.s32.totalorder %s28, 1
      %p307 = por %p305, %p306
      %p308 = scmp.ne.s32.totalorder %s300, %s303
      %p309 = scmp.eq.s32.totalorder %s28, 0
      %p310 = por %p308, %p309
      %p311 = scmp.ne.s32.totalorder %s300, %s303
      %p312 = scmp.eq.s32.totalorder %s33, 1
      %p313 = por %p311, %p312
      %p314 = scmp.ne.s32.totalorder %s303, %s304
      %p315 = scmp.eq.s32.totalorder %s33, 0
      %p316 = por %p314, %p315
      %p317 = scmp.ne.s32.totalorder %s303, %s304
      %p318 = scmp.eq.s32.totalorder %s34, 1
      %p319 = por %p317, %p318
      %p321 = scmp.ne.s32.totalorder %s304, %s320
      %p322 = scmp.eq.s32.totalorder %s34, 0
      %p323 = por %p321, %p322
      %p324 = scmp.le.s32.totalorder 1, %s28
      %p325 = scmp.lt.s32.totalorder %s28, 3
      %p326 = pnand %p324, %p325
      %p327 = pneg %p326
      // Predicated region
      $region9: #{tpu_custom_call.1} parent=5 // pred_check
        _
      $region10: #{tpu_custom_call.1} parent=5 // pred_check_branch
        %329 = sbr.rel (%p326) target = $region12
      $region11: #{tpu_custom_call.1} parent=5 // pred_region
        %s330 = ssub.s32 %s28, 1
        // Predicated region
        $region13: #{tpu_custom_call.1} parent=11 // pred_check
          %p331 = pneg %p141
        $region14: #{tpu_custom_call.1} parent=11 // pred_check_branch
          %333 = sbr.rel (%p331) target = $region16
        $region15: #{tpu_custom_call.1} parent=11 // pred_region
          %s335 = ssub.s32 512, 512
          %336 = vsyncadd [#allocation13], %s335
          %s337 = sshll.u32 [#allocation12], 4
          %s338 = int_to_ptr.vmem [resolvable:$true] %s337
          %343 = dma.hbm_to_vmem [thread:$0]  %s3, 512, %s338, [#allocation13], 128, 128, 8
        $region16: #{tpu_custom_call.1} parent=11 // pred_fallthru
          _
        // Predicated region
        $region17: #{tpu_custom_call.1} parent=11 // pred_check
          %p344 = pneg %p162
        $region18: #{tpu_custom_call.1} parent=11 // pred_check_branch
          %346 = sbr.rel (%p344) target = $region20
        $region19: #{tpu_custom_call.1} parent=11 // pred_region
          _
        $region20: #{tpu_custom_call.1} parent=11 // pred_fallthru
          _
        // Predicated region
        $region21: #{tpu_custom_call.1} parent=11 // pred_check
          %p347 = pneg %p183
        $region22: #{tpu_custom_call.1} parent=11 // pred_check_branch
          %349 = sbr.rel (%p347) target = $region24
        $region23: #{tpu_custom_call.1} parent=11 // pred_region
          %s351 = ssub.s32 512, 512
          %352 = vsyncadd [#allocation13], %s351
          %s353 = sshll.u32 [#allocation14], 4
          %s354 = int_to_ptr.vmem [resolvable:$true] %s353
          %359 = dma.hbm_to_vmem [thread:$0]  %s5, 512, %s354, [#allocation13], 128, 128, 8
        $region24: #{tpu_custom_call.1} parent=11 // pred_fallthru
          _
        // Predicated region
        $region25: #{tpu_custom_call.1} parent=11 // pred_check
          %p360 = pneg %p204
        $region26: #{tpu_custom_call.1} parent=11 // pred_check_branch
          %362 = sbr.rel (%p360) target = $region28
        $region27: #{tpu_custom_call.1} parent=11 // pred_region
          _
        $region28: #{tpu_custom_call.1} parent=11 // pred_fallthru
          _
        // Predicated region
        $region29: #{tpu_custom_call.1} parent=11 // pred_check
          %p363 = pneg %p225
        $region30: #{tpu_custom_call.1} parent=11 // pred_check_branch
          %365 = sbr.rel (%p363) target = $region32
        $region31: #{tpu_custom_call.1} parent=11 // pred_region
          %s367 = ssub.s32 512, 512
          %368 = vsyncadd [#allocation16], %s367
          %s369 = sshll.u32 [#allocation15], 4
          %s370 = int_to_ptr.vmem [resolvable:$true] %s369
          %375 = dma.hbm_to_vmem [thread:$0]  %s7, 512, %s370, [#allocation16], 128, 128, 8
        $region32: #{tpu_custom_call.1} parent=11 // pred_fallthru
          _
        // Predicated region
        $region33: #{tpu_custom_call.1} parent=11 // pred_check
          %p376 = pneg %p246
        $region34: #{tpu_custom_call.1} parent=11 // pred_check_branch
          %378 = sbr.rel (%p376) target = $region36
        $region35: #{tpu_custom_call.1} parent=11 // pred_region
          %s380 = ssub.s32 16, 16
          %381 = vsyncadd [#allocation16], %s380
          %s383 = sshll.u32 [#allocation17], 4
          %s384 = int_to_ptr.vmem [resolvable:$true] %s383
          %386 = dma.hbm_to_vmem [thread:$0]  %s8, 16, %s384, [#allocation16]
        $region36: #{tpu_custom_call.1} parent=11 // pred_fallthru
          _
        // Predicated region
        $region37: #{tpu_custom_call.1} parent=11 // pred_check
          %p387 = pneg %p267
        $region38: #{tpu_custom_call.1} parent=11 // pred_check_branch
          %389 = sbr.rel (%p387) target = $region40
        $region39: #{tpu_custom_call.1} parent=11 // pred_region
          _
        $region40: #{tpu_custom_call.1} parent=11 // pred_fallthru
          _
        // Predicated region
        $region41: #{tpu_custom_call.1} parent=11 // pred_check
          %p390 = pneg %p288
        $region42: #{tpu_custom_call.1} parent=11 // pred_check_branch
          %392 = sbr.rel (%p390) target = $region44
        $region43: #{tpu_custom_call.1} parent=11 // pred_region
          _
        $region44: #{tpu_custom_call.1} parent=11 // pred_fallthru
          _
      $region12: #{tpu_custom_call.1} parent=5 // pred_fallthru
        _
      %p393 = scmp.lt.s32.totalorder %s28, 2
      // Predicated region
      $region45: #{tpu_custom_call.1} parent=5 // pred_check
        %p394 = pneg %p393
      $region46: #{tpu_custom_call.1} parent=5 // pred_check_branch
        %396 = sbr.rel (%p394) target = $region48
      $region47: #{tpu_custom_call.1} parent=5 // pred_region
        // Predicated region
        $region49: #{tpu_custom_call.1} parent=47 // pred_check
          %p397 = pneg %p62
        $region50: #{tpu_custom_call.1} parent=47 // pred_check_branch
          %399 = sbr.rel (%p397) target = $region52
        $region51: #{tpu_custom_call.1} parent=47 // pred_region
          %s400 = sand.u32 %s52, 1
          %s401 = scalar_lea.sflag [#allocation7], %s400
          %s402 = sand.u32 %s52, 1
          %s403 = smul.addr %s402, 8
          %s404 = scalar_lea.vmem [#allocation6], %s403
          %s406 = ssub.s32 128, 128
          %407 = vsyncadd %s401, %s406
          %s408 = sadd.s32 %s36, %s35
          %s409 = smul.addr %s408, 128
          %s410 = scalar_lea.hbm %s0, %s409
          %s412 = sshll.u32 %s404, 4
          %s413 = int_to_ptr.vmem [resolvable:$true] %s412
          %415 = dma.hbm_to_vmem [thread:$0]  %s410, 128, %s413, %s401
        $region52: #{tpu_custom_call.1} parent=47 // pred_fallthru
          _
        // Predicated region
        $region53: #{tpu_custom_call.1} parent=47 // pred_check
          %p416 = pneg %p88
        $region54: #{tpu_custom_call.1} parent=47 // pred_check_branch
          %418 = sbr.rel (%p416) target = $region56
        $region55: #{tpu_custom_call.1} parent=47 // pred_region
          %s419 = sand.u32 %s28, 1
          %s420 = scalar_lea.sflag [#allocation10], %s419
          %s421 = sand.u32 %s78, 1
          %s422 = smul.addr %s421, 8
          %s423 = scalar_lea.vmem [#allocation9], %s422
          %s425 = ssub.s32 128, 128
          %426 = vsyncadd %s420, %s425
          %s427 = smul.addr %s35, 128
          %s428 = scalar_lea.hbm %s1, %s427
          %s430 = sshll.u32 %s423, 4
          %s431 = int_to_ptr.vmem [resolvable:$true] %s430
          %433 = dma.hbm_to_vmem [thread:$0]  %s428, 128, %s431, %s420
        $region56: #{tpu_custom_call.1} parent=47 // pred_fallthru
          _
        // Predicated region
        $region57: #{tpu_custom_call.1} parent=47 // pred_check
          %p434 = pneg %p114
        $region58: #{tpu_custom_call.1} parent=47 // pred_check_branch
          %436 = sbr.rel (%p434) target = $region60
        $region59: #{tpu_custom_call.1} parent=47 // pred_region
          %s437 = sand.u32 %s28, 1
          %s438 = scalar_lea.sflag [#allocation10], %s437
          %s439 = sand.u32 %s104, 1
          %s440 = smul.addr %s439, 8
          %s441 = scalar_lea.vmem [#allocation11], %s440
          %s443 = ssub.s32 128, 128
          %444 = vsyncadd %s438, %s443
          %s445 = smul.addr %s35, 128
          %s446 = scalar_lea.hbm %s2, %s445
          %s448 = sshll.u32 %s441, 4
          %s449 = int_to_ptr.vmem [resolvable:$true] %s448
          %451 = dma.hbm_to_vmem [thread:$0]  %s446, 128, %s449, %s438
        $region60: #{tpu_custom_call.1} parent=47 // pred_fallthru
          _
      $region48: #{tpu_custom_call.1} parent=5 // pred_fallthru
        _
      %p452 = scmp.le.s32.totalorder 1, %s28
      %p453 = scmp.lt.s32.totalorder %s28, 3
      %p454 = pnand %p452, %p453
      %p455 = pneg %p454
      // Predicated region
      $region61: #{tpu_custom_call.1} parent=5 // pred_check
        _
      $region62: #{tpu_custom_call.1} parent=5 // pred_check_branch
        %457 = sbr.rel (%p454) target = $region64
      $region63: #{tpu_custom_call.1} parent=5 // pred_region
        %s458 = ssub.s32 %s28, 1
        %s459 = sand.u32 %s55, 1
        %s460 = scalar_lea.sflag [#allocation7], %s459
        %s461 = sand.u32 %s55, 1
        %s462 = smul.addr %s461, 8
        %s463 = scalar_lea.vmem [#allocation6], %s462
        // Predicated region
        $region65: #{tpu_custom_call.1} parent=63 // pred_check
          %p464 = pneg %p68
        $region66: #{tpu_custom_call.1} parent=63 // pred_check_branch
          %466 = sbr.rel (%p464) target = $region68
        $region67: #{tpu_custom_call.1} parent=63 // pred_region
          %467 = dma.done %s460, 128
        $region68: #{tpu_custom_call.1} parent=63 // pred_fallthru
          _
        %s468 = sand.u32 %s33, 1
        %s469 = scalar_lea.sflag [#allocation10], %s468
        %s470 = sand.u32 %s81, 1
        %s471 = smul.addr %s470, 8
        %s472 = scalar_lea.vmem [#allocation9], %s471
        // Predicated region
        $region69: #{tpu_custom_call.1} parent=63 // pred_check
          %p473 = pneg %p94
        $region70: #{tpu_custom_call.1} parent=63 // pred_check_branch
          %475 = sbr.rel (%p473) target = $region72
        $region71: #{tpu_custom_call.1} parent=63 // pred_region
          %476 = dma.done %s469, 128
        $region72: #{tpu_custom_call.1} parent=63 // pred_fallthru
          _
        %s477 = sand.u32 %s33, 1
        %s478 = scalar_lea.sflag [#allocation10], %s477
        %s479 = sand.u32 %s107, 1
        %s480 = smul.addr %s479, 8
        %s481 = scalar_lea.vmem [#allocation11], %s480
        // Predicated region
        $region73: #{tpu_custom_call.1} parent=63 // pred_check
          %p482 = pneg %p120
        $region74: #{tpu_custom_call.1} parent=63 // pred_check_branch
          %484 = sbr.rel (%p482) target = $region76
        $region75: #{tpu_custom_call.1} parent=63 // pred_region
          %485 = dma.done %s478, 128
        $region76: #{tpu_custom_call.1} parent=63 // pred_fallthru
          _
        // Predicated region
        $region77: #{tpu_custom_call.1} parent=63 // pred_check
          %p486 = pneg %p141
        $region78: #{tpu_custom_call.1} parent=63 // pred_check_branch
          %488 = sbr.rel (%p486) target = $region80
        $region79: #{tpu_custom_call.1} parent=63 // pred_region
          %489 = dma.done [#allocation13], 512
        $region80: #{tpu_custom_call.1} parent=63 // pred_fallthru
          _
        // Predicated region
        $region81: #{tpu_custom_call.1} parent=63 // pred_check
          %p490 = pneg %p183
        $region82: #{tpu_custom_call.1} parent=63 // pred_check_branch
          %492 = sbr.rel (%p490) target = $region84
        $region83: #{tpu_custom_call.1} parent=63 // pred_region
          %493 = dma.done [#allocation13], 512
        $region84: #{tpu_custom_call.1} parent=63 // pred_fallthru
          _
        // Predicated region
        $region85: #{tpu_custom_call.1} parent=63 // pred_check
          %p494 = pneg %p225
        $region86: #{tpu_custom_call.1} parent=63 // pred_check_branch
          %496 = sbr.rel (%p494) target = $region88
        $region87: #{tpu_custom_call.1} parent=63 // pred_region
          %497 = dma.done [#allocation16], 512
        $region88: #{tpu_custom_call.1} parent=63 // pred_fallthru
          _
        // Predicated region
        $region89: #{tpu_custom_call.1} parent=63 // pred_check
          %p498 = pneg %p246
        $region90: #{tpu_custom_call.1} parent=63 // pred_check_branch
          %500 = sbr.rel (%p498) target = $region92
        $region91: #{tpu_custom_call.1} parent=63 // pred_region
          %501 = dma.done [#allocation16], 16
        $region92: #{tpu_custom_call.1} parent=63 // pred_fallthru
          _
        %s502 = sand.u32 %s55, 1
        %s503 = scalar_lea.sflag [#allocation7], %s502
        %s504 = sand.u32 %s55, 1
        %s505 = smul.addr %s504, 8
        %s506 = scalar_lea.vmem [#allocation6], %s505
        %p507 = pneg %p68
        %p508 = pneg %p65
        %s509 = sand.u32 %s33, 1
        %s510 = scalar_lea.sflag [#allocation10], %s509
        %s511 = sand.u32 %s81, 1
        %s512 = smul.addr %s511, 8
        %s513 = scalar_lea.vmem [#allocation9], %s512
        %p514 = pneg %p94
        %p515 = pneg %p91
        %s516 = sand.u32 %s33, 1
        %s517 = scalar_lea.sflag [#allocation10], %s516
        %s518 = sand.u32 %s107, 1
        %s519 = smul.addr %s518, 8
        %s520 = scalar_lea.vmem [#allocation11], %s519
        %p521 = pneg %p120
        %p522 = pneg %p117
        %p523 = pneg %p141
        %p524 = pneg %p138
        %p525 = pneg %p162
        %p526 = pneg %p159
        %p527 = pneg %p183
        %p528 = pneg %p180
        %p529 = pneg %p204
        %p530 = pneg %p201
        %p531 = pneg %p225
        %p532 = pneg %p222
        %p533 = pneg %p246
        %p534 = pneg %p243
        %p535 = pneg %p267
        %p536 = pneg %p264
        %p537 = pneg %p288
        %p538 = pneg %p285
        %p539 = pneg %p316
        %p540 = pneg %p313
        %s541 = sand.u32 %s303, 1
        %s542 = scalar_lea.sflag [#allocation8], %s541
        %s543 = sand.u32 %s303, 1
        %s544 = smul.addr %s543, 8
        %s545 = scalar_lea.vmem [#allocation18], %s544
        %p546 = scmp.eq.s32.totalorder %s38, 0
        // Predicated region
        $region93: #{tpu_custom_call.1} parent=63 // pred_check
          %p547 = pneg %p546
        $region94: #{tpu_custom_call.1} parent=63 // pred_check_branch
          %549 = sbr.rel (%p547) target = $region96
        $region95: #{tpu_custom_call.1} parent=63 // pred_region
          %v550 = vld [vmem:[%s472] sm:$0xff]
          %v551 = vld [vmem:[#allocation14] sm:$0xff]
          %v552 = vld [vmem:[#allocation14 + $0x8] sm:$0xff]
          %v553 = vld [vmem:[#allocation14 + $0x10] sm:$0xff]
          %v554 = vld [vmem:[#allocation14 + $0x18] sm:$0xff]
          %v555 = vld [vmem:[%s6] sm:$0x1]
          %v557 = vlaneseq
          %v558 = vshrl.u32 %v557, 7
          %v559 = vsub.s32 0, %v558
          %v560 = vrot.slane %v555, %v559
          %vm562 = vcmask 261120
          %v564 = vsel %vm562, %v550, 0
          %566 = vmatprep.subr.mxu0 0.0
          %567 = vmatpush1.msra.mxu0 %v551
          %568 = vmatprep.subr.mxu0 0.0
          %569 = vmatpush1.msra.mxu0 %v552
          %570 = vmatprep.subr.mxu0 0.0
          %571 = vmatpush1.msra.mxu0 %v553
          %572 = vmatprep.subr.mxu0 0.0
          %573 = vmatpush1.msra.mxu0 %v554
          %574 = vmatprep.subr.mxu0 0.0
          %575 = vmatpush1.msra.mxu0 0.0
          %576 = vmatprep.subr.mxu0 0.0
          %577 = vmatpush1.msra.mxu0 0.0
          %578 = vmatprep.subr.mxu0 0.0
          %579 = vmatpush1.msra.mxu0 0.0
          %580 = vmatprep.subr.mxu0 0.0
          %581 = vmatpush1.msra.mxu0 0.0
          %582 = vmatprep.subr.mxu0 0.0
          %583 = vmatpush1.msra.mxu0 0.0
          %584 = vmatprep.subr.mxu0 0.0
          %585 = vmatpush1.msra.mxu0 0.0
          %586 = vmatprep.subr.mxu0 0.0
          %587 = vmatpush1.msra.mxu0 0.0
          %588 = vmatprep.subr.mxu0 0.0
          %589 = vmatpush1.msra.mxu0 0.0
          %590 = vmatprep.subr.mxu0 0.0
          %591 = vmatpush1.msra.mxu0 0.0
          %592 = vmatprep.subr.mxu0 0.0
          %593 = vmatpush1.msra.mxu0 0.0
          %594 = vmatprep.subr.mxu0 0.0
          %595 = vmatpush1.msra.mxu0 0.0
          %596 = vmatprep.subr.mxu0 0.0
          %597 = vmatpush1.msra.mxu0 0.0
          %598 = vmatprep.subr.mxu0 0.0
          %599 = vmatpush1.msra.mxu0 0.0
          %600 = vmatprep.subr.mxu0 0.0
          %601 = vmatpush1.msra.mxu0 0.0
          %602 = vmatprep.subr.mxu0 0.0
          %603 = vmatpush1.msra.mxu0 0.0
          %604 = vmatprep.subr.mxu0 0.0
          %605 = vmatpush1.msra.mxu0 0.0
          %606 = vmatprep.subr.mxu0 0.0
          %607 = vmatpush1.msra.mxu0 0.0
          %608 = vmatprep.subr.mxu0 0.0
          %609 = vmatpush1.msra.mxu0 0.0
          %610 = vmatprep.subr.mxu0 0.0
          %611 = vmatpush1.msra.mxu0 0.0
          %612 = vmatprep.subr.mxu0 0.0
          %613 = vmatpush1.msra.mxu0 0.0
          %614 = vmatprep.subr.mxu0 0.0
          %615 = vmatpush1.msra.mxu0 0.0
          %616 = vmatprep.subr.mxu0 0.0
          %617 = vmatpush1.msra.mxu0 0.0
          %618 = vmatprep.subr.mxu0 0.0
          %619 = vmatpush1.msra.mxu0 0.0
          %620 = vmatprep.subr.mxu0 0.0
          %621 = vmatpush1.msra.mxu0 0.0
          %622 = vmatprep.subr.mxu0 0.0
          %623 = vmatpush1.msra.mxu0 0.0
          %624 = vmatprep.subr.mxu0 0.0
          %625 = vmatpush1.msra.mxu0 0.0
          %626 = vmatprep.subr.mxu0 0.0
          %627 = vmatpush1.msra.mxu0 0.0
          %628 = vmatprep.subr.mxu0 0.0
          %629 = vmatpush1.msra.mxu0 0.0
          %630 = vmatprep.mubr.f32.mxu0 0.0
          %631 = vmatmul.mubr.f32.gmra.mrb[0].mxu0 %v564
          %v632 = vpop.f32.mrb[0].mxu0
          %v633 = vadd.f32 %v560, %v632
          %v634 = vpop.f32.mrb[0].mxu0
          %635 = vdwg.mxu0
          %636 = vst.msk [vmem:[#allocation2] sm:$0xff] %vm562, %v633
          %v637 = vld [vmem:[%s481] sm:$0xff]
          %v638 = vld [vmem:[#allocation15] sm:$0xff]
          %v639 = vld [vmem:[#allocation15 + $0x8] sm:$0xff]
          %v640 = vld [vmem:[#allocation15 + $0x10] sm:$0xff]
          %v641 = vld [vmem:[#allocation15 + $0x18] sm:$0xff]
          %v642 = vld [vmem:[#allocation17] sm:$0x1]
          %v644 = vlaneseq
          %v645 = vshrl.u32 %v644, 7
          %v646 = vsub.s32 0, %v645
          %v647 = vrot.slane %v642, %v646
          %v650 = vsel %vm562, %v637, 0
          %652 = vmatprep.subr.mxu0 0.0
          %653 = vmatpush1.msra.mxu0 %v638
          %654 = vmatprep.subr.mxu0 0.0
          %655 = vmatpush1.msra.mxu0 %v639
          %656 = vmatprep.subr.mxu0 0.0
          %657 = vmatpush1.msra.mxu0 %v640
          %658 = vmatprep.subr.mxu0 0.0
          %659 = vmatpush1.msra.mxu0 %v641
          %660 = vmatprep.subr.mxu0 0.0
          %661 = vmatpush1.msra.mxu0 0.0
          %662 = vmatprep.subr.mxu0 0.0
          %663 = vmatpush1.msra.mxu0 0.0
          %664 = vmatprep.subr.mxu0 0.0
          %665 = vmatpush1.msra.mxu0 0.0
          %666 = vmatprep.subr.mxu0 0.0
          %667 = vmatpush1.msra.mxu0 0.0
          %668 = vmatprep.subr.mxu0 0.0
          %669 = vmatpush1.msra.mxu0 0.0
          %670 = vmatprep.subr.mxu0 0.0
          %671 = vmatpush1.msra.mxu0 0.0
          %672 = vmatprep.subr.mxu0 0.0
          %673 = vmatpush1.msra.mxu0 0.0
          %674 = vmatprep.subr.mxu0 0.0
          %675 = vmatpush1.msra.mxu0 0.0
          %676 = vmatprep.subr.mxu0 0.0
          %677 = vmatpush1.msra.mxu0 0.0
          %678 = vmatprep.subr.mxu0 0.0
          %679 = vmatpush1.msra.mxu0 0.0
          %680 = vmatprep.subr.mxu0 0.0
          %681 = vmatpush1.msra.mxu0 0.0
          %682 = vmatprep.subr.mxu0 0.0
          %683 = vmatpush1.msra.mxu0 0.0
          %684 = vmatprep.subr.mxu0 0.0
          %685 = vmatpush1.msra.mxu0 0.0
          %686 = vmatprep.subr.mxu0 0.0
          %687 = vmatpush1.msra.mxu0 0.0
          %688 = vmatprep.subr.mxu0 0.0
          %689 = vmatpush1.msra.mxu0 0.0
          %690 = vmatprep.subr.mxu0 0.0
          %691 = vmatpush1.msra.mxu0 0.0
          %692 = vmatprep.subr.mxu0 0.0
          %693 = vmatpush1.msra.mxu0 0.0
          %694 = vmatprep.subr.mxu0 0.0
          %695 = vmatpush1.msra.mxu0 0.0
          %696 = vmatprep.subr.mxu0 0.0
          %697 = vmatpush1.msra.mxu0 0.0
          %698 = vmatprep.subr.mxu0 0.0
          %699 = vmatpush1.msra.mxu0 0.0
          %700 = vmatprep.subr.mxu0 0.0
          %701 = vmatpush1.msra.mxu0 0.0
          %702 = vmatprep.subr.mxu0 0.0
          %703 = vmatpush1.msra.mxu0 0.0
          %704 = vmatprep.subr.mxu0 0.0
          %705 = vmatpush1.msra.mxu0 0.0
          %706 = vmatprep.subr.mxu0 0.0
          %707 = vmatpush1.msra.mxu0 0.0
          %708 = vmatprep.subr.mxu0 0.0
          %709 = vmatpush1.msra.mxu0 0.0
          %710 = vmatprep.subr.mxu0 0.0
          %711 = vmatpush1.msra.mxu0 0.0
          %712 = vmatprep.subr.mxu0 0.0
          %713 = vmatpush1.msra.mxu0 0.0
          %714 = vmatprep.subr.mxu0 0.0
          %715 = vmatpush1.msra.mxu0 0.0
          %716 = vmatprep.mubr.f32.mxu0 0.0
          %717 = vmatmul.mubr.f32.gmra.mrb[0].mxu0 %v650
          %v718 = vpop.f32.mrb[0].mxu0
          %v719 = vadd.f32 %v647, %v718
          %v720 = vpop.f32.mrb[0].mxu0
          %721 = vdwg.mxu0
          %722 = vst.msk [vmem:[#allocation3] sm:$0xff] %vm562, %v719
        $region96: #{tpu_custom_call.1} parent=63 // pred_fallthru
          _
        %v723 = vld [vmem:[%s463] sm:$0xff]
        %v724 = vld [vmem:[#allocation12] sm:$0xff]
        %v725 = vld [vmem:[#allocation12 + $0x8] sm:$0xff]
        %v726 = vld [vmem:[#allocation12 + $0x10] sm:$0xff]
        %v727 = vld [vmem:[#allocation12 + $0x18] sm:$0xff]
        %v728 = vld [vmem:[%s4] sm:$0x1]
        %v730 = vlaneseq
        %v731 = vshrl.u32 %v730, 7
        %v732 = vsub.s32 0, %v731
        %v733 = vrot.slane %v728, %v732
        %vm735 = vcmask 261120
        %v737 = vsel %vm735, %v723, 0
        %739 = vmatprep.subr.mxu0 0.0
        %740 = vmatpush1.msra.mxu0 %v724
        %741 = vmatprep.subr.mxu0 0.0
        %742 = vmatpush1.msra.mxu0 %v725
        %743 = vmatprep.subr.mxu0 0.0
        %744 = vmatpush1.msra.mxu0 %v726
        %745 = vmatprep.subr.mxu0 0.0
        %746 = vmatpush1.msra.mxu0 %v727
        %747 = vmatprep.subr.mxu0 0.0
        %748 = vmatpush1.msra.mxu0 0.0
        %749 = vmatprep.subr.mxu0 0.0
        %750 = vmatpush1.msra.mxu0 0.0
        %751 = vmatprep.subr.mxu0 0.0
        %752 = vmatpush1.msra.mxu0 0.0
        %753 = vmatprep.subr.mxu0 0.0
        %754 = vmatpush1.msra.mxu0 0.0
        %755 = vmatprep.subr.mxu0 0.0
        %756 = vmatpush1.msra.mxu0 0.0
        %757 = vmatprep.subr.mxu0 0.0
        %758 = vmatpush1.msra.mxu0 0.0
        %759 = vmatprep.subr.mxu0 0.0
        %760 = vmatpush1.msra.mxu0 0.0
        %761 = vmatprep.subr.mxu0 0.0
        %762 = vmatpush1.msra.mxu0 0.0
        %763 = vmatprep.subr.mxu0 0.0
        %764 = vmatpush1.msra.mxu0 0.0
        %765 = vmatprep.subr.mxu0 0.0
        %766 = vmatpush1.msra.mxu0 0.0
        %767 = vmatprep.subr.mxu0 0.0
        %768 = vmatpush1.msra.mxu0 0.0
        %769 = vmatprep.subr.mxu0 0.0
        %770 = vmatpush1.msra.mxu0 0.0
        %771 = vmatprep.subr.mxu0 0.0
        %772 = vmatpush1.msra.mxu0 0.0
        %773 = vmatprep.subr.mxu0 0.0
        %774 = vmatpush1.msra.mxu0 0.0
        %775 = vmatprep.subr.mxu0 0.0
        %776 = vmatpush1.msra.mxu0 0.0
        %777 = vmatprep.subr.mxu0 0.0
        %778 = vmatpush1.msra.mxu0 0.0
        %779 = vmatprep.subr.mxu0 0.0
        %780 = vmatpush1.msra.mxu0 0.0
        %781 = vmatprep.subr.mxu0 0.0
        %782 = vmatpush1.msra.mxu0 0.0
        %783 = vmatprep.subr.mxu0 0.0
        %784 = vmatpush1.msra.mxu0 0.0
        %785 = vmatprep.subr.mxu0 0.0
        %786 = vmatpush1.msra.mxu0 0.0
        %787 = vmatprep.subr.mxu0 0.0
        %788 = vmatpush1.msra.mxu0 0.0
        %789 = vmatprep.subr.mxu0 0.0
        %790 = vmatpush1.msra.mxu0 0.0
        %791 = vmatprep.subr.mxu0 0.0
        %792 = vmatpush1.msra.mxu0 0.0
        %793 = vmatprep.subr.mxu0 0.0
        %794 = vmatpush1.msra.mxu0 0.0
        %795 = vmatprep.subr.mxu0 0.0
        %796 = vmatpush1.msra.mxu0 0.0
        %797 = vmatprep.subr.mxu0 0.0
        %798 = vmatpush1.msra.mxu0 0.0
        %799 = vmatprep.subr.mxu0 0.0
        %800 = vmatpush1.msra.mxu0 0.0
        %801 = vmatprep.subr.mxu0 0.0
        %802 = vmatpush1.msra.mxu0 0.0
        %803 = vmatprep.mubr.f32.mxu0 0.0
        %804 = vmatmul.mubr.f32.gmra.mrb[0].mxu0 %v737
        %v805 = vpop.f32.mrb[0].mxu0
        %v806 = vadd.f32 %v733, %v805
        %v807 = vpop.f32.mrb[0].mxu0
        %808 = vdwg.mxu0
        %809 = vst.msk [vmem:[#allocation4] sm:$0xff] %vm735, %v806
        %v810 = vld [vmem:[#allocation4] sm:$0xff]
        %v811 = vld [vmem:[#allocation2] sm:$0xff]
        %v812 = vld [vmem:[#allocation3] sm:$0xff]
        %vm813 = vcmask 64512
        %v815 = vsel %vm813, %v810, 0
        %v818 = vsel %vm813, %v811, 0
        %820 = vmatprep.subr.mxu0 0.0
        %821 = vmatpush1.xpose.msra.mxu0 %v818
        %822 = vmatprep.subr.mxu0 0.0
        %823 = vmatpush1.xpose.msra.mxu0 0.0
        %824 = vmatprep.subr.mxu0 0.0
        %825 = vmatpush1.xpose.msra.mxu0 0.0
        %826 = vmatprep.subr.mxu0 0.0
        %827 = vmatpush1.xpose.msra.mxu0 0.0
        %828 = vmatprep.subr.mxu0 0.0
        %829 = vmatpush1.xpose.msra.mxu0 0.0
        %830 = vmatprep.subr.mxu0 0.0
        %831 = vmatpush1.xpose.msra.mxu0 0.0
        %832 = vmatprep.subr.mxu0 0.0
        %833 = vmatpush1.xpose.msra.mxu0 0.0
        %834 = vmatprep.subr.mxu0 0.0
        %835 = vmatpush1.xpose.msra.mxu0 0.0
        %836 = vmatprep.subr.mxu0 0.0
        %837 = vmatpush1.xpose.msra.mxu0 0.0
        %838 = vmatprep.subr.mxu0 0.0
        %839 = vmatpush1.xpose.msra.mxu0 0.0
        %840 = vmatprep.subr.mxu0 0.0
        %841 = vmatpush1.xpose.msra.mxu0 0.0
        %842 = vmatprep.subr.mxu0 0.0
        %843 = vmatpush1.xpose.msra.mxu0 0.0
        %844 = vmatprep.subr.mxu0 0.0
        %845 = vmatpush1.xpose.msra.mxu0 0.0
        %846 = vmatprep.subr.mxu0 0.0
        %847 = vmatpush1.xpose.msra.mxu0 0.0
        %848 = vmatprep.subr.mxu0 0.0
        %849 = vmatpush1.xpose.msra.mxu0 0.0
        %850 = vmatprep.subr.mxu0 0.0
        %851 = vmatpush1.xpose.msra.mxu0 0.0
        %852 = vmatprep.subr.mxu0 0.0
        %853 = vmatpush1.xpose.msra.mxu0 0.0
        %854 = vmatprep.subr.mxu0 0.0
        %855 = vmatpush1.xpose.msra.mxu0 0.0
        %856 = vmatprep.subr.mxu0 0.0
        %857 = vmatpush1.xpose.msra.mxu0 0.0
        %858 = vmatprep.subr.mxu0 0.0
        %859 = vmatpush1.xpose.msra.mxu0 0.0
        %860 = vmatprep.subr.mxu0 0.0
        %861 = vmatpush1.xpose.msra.mxu0 0.0
        %862 = vmatprep.subr.mxu0 0.0
        %863 = vmatpush1.xpose.msra.mxu0 0.0
        %864 = vmatprep.subr.mxu0 0.0
        %865 = vmatpush1.xpose.msra.mxu0 0.0
        %866 = vmatprep.subr.mxu0 0.0
        %867 = vmatpush1.xpose.msra.mxu0 0.0
        %868 = vmatprep.subr.mxu0 0.0
        %869 = vmatpush1.xpose.msra.mxu0 0.0
        %870 = vmatprep.subr.mxu0 0.0
        %871 = vmatpush1.xpose.msra.mxu0 0.0
        %872 = vmatprep.subr.mxu0 0.0
        %873 = vmatpush1.xpose.msra.mxu0 0.0
        %874 = vmatprep.subr.mxu0 0.0
        %875 = vmatpush1.xpose.msra.mxu0 0.0
        %876 = vmatprep.subr.mxu0 0.0
        %877 = vmatpush1.xpose.msra.mxu0 0.0
        %878 = vmatprep.subr.mxu0 0.0
        %879 = vmatpush1.xpose.msra.mxu0 0.0
        %880 = vmatprep.subr.mxu0 0.0
        %881 = vmatpush1.xpose.msra.mxu0 0.0
        %882 = vmatprep.subr.mxu0 0.0
        %883 = vmatpush1.xpose.msra.mxu0 0.0
        %884 = vmatprep.mubr.f32.mxu0 0.0
        %885 = vmatmul.mubr.f32.gmra.mrb[0].mxu0 %v815
        %v886 = vpop.f32.mrb[0].mxu0
        %v887 = vadd.f32 0.0, %v886
        %v888 = vpop.f32.mrb[0].mxu0
        %889 = vdwg.mxu0
        %v890 = vsel %vm813, %v887, -inf
        %891 = vmax.xlane.f32.xlu0 %v890
        %v892 = vpop.xlane.xlu0 %891
        %v893 = vsub.f32 %v887, %v892
        %v894 = vmul.f32 %v893, 1.442695
        %v895 = vpow.pop %v894
        %v896 = vsel %vm813, %v895, 0.0
        %897 = vadd.xlane.f32.xlu0 %v896
        %v898 = vpop.xlane.xlu0 %897
        %v899 = vrcp.pop %v898
        %v900 = vmul.f32 %v898, %v899
        %v901 = vsub.f32 2.0, %v900
        %v902 = vmul.f32 %v899, %v901
        %v903 = vmul.f32 %v895, %v902
        %v905 = vsel %vm813, %v903, 0
        %907 = vmatprep.subr.mxu0 0.0
        %908 = vmatpush1.msra.mxu0 %v812
        %909 = vmatprep.subr.mxu0 0.0
        %910 = vmatpush1.msra.mxu0 0.0
        %911 = vmatprep.subr.mxu0 0.0
        %912 = vmatpush1.msra.mxu0 0.0
        %913 = vmatprep.subr.mxu0 0.0
        %914 = vmatpush1.msra.mxu0 0.0
        %915 = vmatprep.subr.mxu0 0.0
        %916 = vmatpush1.msra.mxu0 0.0
        %917 = vmatprep.subr.mxu0 0.0
        %918 = vmatpush1.msra.mxu0 0.0
        %919 = vmatprep.subr.mxu0 0.0
        %920 = vmatpush1.msra.mxu0 0.0
        %921 = vmatprep.subr.mxu0 0.0
        %922 = vmatpush1.msra.mxu0 0.0
        %923 = vmatprep.subr.mxu0 0.0
        %924 = vmatpush1.msra.mxu0 0.0
        %925 = vmatprep.subr.mxu0 0.0
        %926 = vmatpush1.msra.mxu0 0.0
        %927 = vmatprep.subr.mxu0 0.0
        %928 = vmatpush1.msra.mxu0 0.0
        %929 = vmatprep.subr.mxu0 0.0
        %930 = vmatpush1.msra.mxu0 0.0
        %931 = vmatprep.subr.mxu0 0.0
        %932 = vmatpush1.msra.mxu0 0.0
        %933 = vmatprep.subr.mxu0 0.0
        %934 = vmatpush1.msra.mxu0 0.0
        %935 = vmatprep.subr.mxu0 0.0
        %936 = vmatpush1.msra.mxu0 0.0
        %937 = vmatprep.subr.mxu0 0.0
        %938 = vmatpush1.msra.mxu0 0.0
        %939 = vmatprep.subr.mxu0 0.0
        %940 = vmatpush1.msra.mxu0 0.0
        %941 = vmatprep.subr.mxu0 0.0
        %942 = vmatpush1.msra.mxu0 0.0
        %943 = vmatprep.subr.mxu0 0.0
        %944 = vmatpush1.msra.mxu0 0.0
        %945 = vmatprep.subr.mxu0 0.0
        %946 = vmatpush1.msra.mxu0 0.0
        %947 = vmatprep.subr.mxu0 0.0
        %948 = vmatpush1.msra.mxu0 0.0
        %949 = vmatprep.subr.mxu0 0.0
        %950 = vmatpush1.msra.mxu0 0.0
        %951 = vmatprep.subr.mxu0 0.0
        %952 = vmatpush1.msra.mxu0 0.0
        %953 = vmatprep.subr.mxu0 0.0
        %954 = vmatpush1.msra.mxu0 0.0
        %955 = vmatprep.subr.mxu0 0.0
        %956 = vmatpush1.msra.mxu0 0.0
        %957 = vmatprep.subr.mxu0 0.0
        %958 = vmatpush1.msra.mxu0 0.0
        %959 = vmatprep.subr.mxu0 0.0
        %960 = vmatpush1.msra.mxu0 0.0
        %961 = vmatprep.subr.mxu0 0.0
        %962 = vmatpush1.msra.mxu0 0.0
        %963 = vmatprep.subr.mxu0 0.0
        %964 = vmatpush1.msra.mxu0 0.0
        %965 = vmatprep.subr.mxu0 0.0
        %966 = vmatpush1.msra.mxu0 0.0
        %967 = vmatprep.subr.mxu0 0.0
        %968 = vmatpush1.msra.mxu0 0.0
        %969 = vmatprep.subr.mxu0 0.0
        %970 = vmatpush1.msra.mxu0 0.0
        %971 = vmatprep.mubr.f32.mxu0 0.0
        %972 = vmatmul.mubr.f32.gmra.mrb[0].mxu0 %v905
        %v973 = vpop.f32.mrb[0].mxu0
        %v974 = vadd.f32 0.0, %v973
        %v975 = vpop.f32.mrb[0].mxu0
        %976 = vdwg.mxu0
        %977 = vst.msk [vmem:[#allocation5] sm:$0xff] %vm813, %v974
        %v978 = vld [vmem:[#allocation4] sm:$0xff]
        %v979 = vld [vmem:[#allocation2] sm:$0xff]
        %v980 = vld [vmem:[#allocation3] sm:$0xff]
        %982 = vrot.lane.b32.xlu0 %v978, 120
        %v983 = vpop.permute.xlu0 %982
        %985 = vrot.lane.b32.xlu0 %v979, 120
        %v986 = vpop.permute.xlu0 %985
        %v987 = vsel %vm813, %v983, 0
        %v989 = vsel %vm813, %v986, 0
        %991 = vmatprep.subr.mxu0 0.0
        %992 = vmatpush1.xpose.msra.mxu0 %v989
        %993 = vmatprep.subr.mxu0 0.0
        %994 = vmatpush1.xpose.msra.mxu0 0.0
        %995 = vmatprep.subr.mxu0 0.0
        %996 = vmatpush1.xpose.msra.mxu0 0.0
        %997 = vmatprep.subr.mxu0 0.0
        %998 = vmatpush1.xpose.msra.mxu0 0.0
        %999 = vmatprep.subr.mxu0 0.0
        %1000 = vmatpush1.xpose.msra.mxu0 0.0
        %1001 = vmatprep.subr.mxu0 0.0
        %1002 = vmatpush1.xpose.msra.mxu0 0.0
        %1003 = vmatprep.subr.mxu0 0.0
        %1004 = vmatpush1.xpose.msra.mxu0 0.0
        %1005 = vmatprep.subr.mxu0 0.0
        %1006 = vmatpush1.xpose.msra.mxu0 0.0
        %1007 = vmatprep.subr.mxu0 0.0
        %1008 = vmatpush1.xpose.msra.mxu0 0.0
        %1009 = vmatprep.subr.mxu0 0.0
        %1010 = vmatpush1.xpose.msra.mxu0 0.0
        %1011 = vmatprep.subr.mxu0 0.0
        %1012 = vmatpush1.xpose.msra.mxu0 0.0
        %1013 = vmatprep.subr.mxu0 0.0
        %1014 = vmatpush1.xpose.msra.mxu0 0.0
        %1015 = vmatprep.subr.mxu0 0.0
        %1016 = vmatpush1.xpose.msra.mxu0 0.0
        %1017 = vmatprep.subr.mxu0 0.0
        %1018 = vmatpush1.xpose.msra.mxu0 0.0
        %1019 = vmatprep.subr.mxu0 0.0
        %1020 = vmatpush1.xpose.msra.mxu0 0.0
        %1021 = vmatprep.subr.mxu0 0.0
        %1022 = vmatpush1.xpose.msra.mxu0 0.0
        %1023 = vmatprep.subr.mxu0 0.0
        %1024 = vmatpush1.xpose.msra.mxu0 0.0
        %1025 = vmatprep.subr.mxu0 0.0
        %1026 = vmatpush1.xpose.msra.mxu0 0.0
        %1027 = vmatprep.subr.mxu0 0.0
        %1028 = vmatpush1.xpose.msra.mxu0 0.0
        %1029 = vmatprep.subr.mxu0 0.0
        %1030 = vmatpush1.xpose.msra.mxu0 0.0
        %1031 = vmatprep.subr.mxu0 0.0
        %1032 = vmatpush1.xpose.msra.mxu0 0.0
        %1033 = vmatprep.subr.mxu0 0.0
        %1034 = vmatpush1.xpose.msra.mxu0 0.0
        %1035 = vmatprep.subr.mxu0 0.0
        %1036 = vmatpush1.xpose.msra.mxu0 0.0
        %1037 = vmatprep.subr.mxu0 0.0
        %1038 = vmatpush1.xpose.msra.mxu0 0.0
        %1039 = vmatprep.subr.mxu0 0.0
        %1040 = vmatpush1.xpose.msra.mxu0 0.0
        %1041 = vmatprep.subr.mxu0 0.0
        %1042 = vmatpush1.xpose.msra.mxu0 0.0
        %1043 = vmatprep.subr.mxu0 0.0
        %1044 = vmatpush1.xpose.msra.mxu0 0.0
        %1045 = vmatprep.subr.mxu0 0.0
        %1046 = vmatpush1.xpose.msra.mxu0 0.0
        %1047 = vmatprep.subr.mxu0 0.0
        %1048 = vmatpush1.xpose.msra.mxu0 0.0
        %1049 = vmatprep.subr.mxu0 0.0
        %1050 = vmatpush1.xpose.msra.mxu0 0.0
        %1051 = vmatprep.subr.mxu0 0.0
        %1052 = vmatpush1.xpose.msra.mxu0 0.0
        %1053 = vmatprep.subr.mxu0 0.0
        %1054 = vmatpush1.xpose.msra.mxu0 0.0
        %1055 = vmatprep.mubr.f32.mxu0 0.0
        %1056 = vmatmul.mubr.f32.gmra.mrb[0].mxu0 %v987
        %v1057 = vpop.f32.mrb[0].mxu0
        %v1058 = vadd.f32 0.0, %v1057
        %v1059 = vpop.f32.mrb[0].mxu0
        %1060 = vdwg.mxu0
        %v1061 = vsel %vm813, %v1058, -inf
        %1062 = vmax.xlane.f32.xlu0 %v1061
        %v1063 = vpop.xlane.xlu0 %1062
        %v1064 = vsub.f32 %v1058, %v1063
        %v1065 = vmul.f32 %v1064, 1.442695
        %v1066 = vpow.pop %v1065
        %v1067 = vsel %vm813, %v1066, 0.0
        %1068 = vadd.xlane.f32.xlu0 %v1067
        %v1069 = vpop.xlane.xlu0 %1068
        %v1070 = vrcp.pop %v1069
        %v1071 = vmul.f32 %v1069, %v1070
        %v1072 = vsub.f32 2.0, %v1071
        %v1073 = vmul.f32 %v1070, %v1072
        %v1074 = vmul.f32 %v1066, %v1073
        %1076 = vrot.lane.b32.xlu0 %v980, 120
        %v1077 = vpop.permute.xlu0 %1076
        %v1080 = vsel %vm813, %v1074, 0
        %1082 = vmatprep.subr.mxu0 0.0
        %1083 = vmatpush1.msra.mxu0 %v1077
        %1084 = vmatprep.subr.mxu0 0.0
        %1085 = vmatpush1.msra.mxu0 0.0
        %1086 = vmatprep.subr.mxu0 0.0
        %1087 = vmatpush1.msra.mxu0 0.0
        %1088 = vmatprep.subr.mxu0 0.0
        %1089 = vmatpush1.msra.mxu0 0.0
        %1090 = vmatprep.subr.mxu0 0.0
        %1091 = vmatpush1.msra.mxu0 0.0
        %1092 = vmatprep.subr.mxu0 0.0
        %1093 = vmatpush1.msra.mxu0 0.0
        %1094 = vmatprep.subr.mxu0 0.0
        %1095 = vmatpush1.msra.mxu0 0.0
        %1096 = vmatprep.subr.mxu0 0.0
        %1097 = vmatpush1.msra.mxu0 0.0
        %1098 = vmatprep.subr.mxu0 0.0
        %1099 = vmatpush1.msra.mxu0 0.0
        %1100 = vmatprep.subr.mxu0 0.0
        %1101 = vmatpush1.msra.mxu0 0.0
        %1102 = vmatprep.subr.mxu0 0.0
        %1103 = vmatpush1.msra.mxu0 0.0
        %1104 = vmatprep.subr.mxu0 0.0
        %1105 = vmatpush1.msra.mxu0 0.0
        %1106 = vmatprep.subr.mxu0 0.0
        %1107 = vmatpush1.msra.mxu0 0.0
        %1108 = vmatprep.subr.mxu0 0.0
        %1109 = vmatpush1.msra.mxu0 0.0
        %1110 = vmatprep.subr.mxu0 0.0
        %1111 = vmatpush1.msra.mxu0 0.0
        %1112 = vmatprep.subr.mxu0 0.0
        %1113 = vmatpush1.msra.mxu0 0.0
        %1114 = vmatprep.subr.mxu0 0.0
        %1115 = vmatpush1.msra.mxu0 0.0
        %1116 = vmatprep.subr.mxu0 0.0
        %1117 = vmatpush1.msra.mxu0 0.0
        %1118 = vmatprep.subr.mxu0 0.0
        %1119 = vmatpush1.msra.mxu0 0.0
        %1120 = vmatprep.subr.mxu0 0.0
        %1121 = vmatpush1.msra.mxu0 0.0
        %1122 = vmatprep.subr.mxu0 0.0
        %1123 = vmatpush1.msra.mxu0 0.0
        %1124 = vmatprep.subr.mxu0 0.0
        %1125 = vmatpush1.msra.mxu0 0.0
        %1126 = vmatprep.subr.mxu0 0.0
        %1127 = vmatpush1.msra.mxu0 0.0
        %1128 = vmatprep.subr.mxu0 0.0
        %1129 = vmatpush1.msra.mxu0 0.0
        %1130 = vmatprep.subr.mxu0 0.0
        %1131 = vmatpush1.msra.mxu0 0.0
        %1132 = vmatprep.subr.mxu0 0.0
        %1133 = vmatpush1.msra.mxu0 0.0
        %1134 = vmatprep.subr.mxu0 0.0
        %1135 = vmatpush1.msra.mxu0 0.0
        %1136 = vmatprep.subr.mxu0 0.0
        %1137 = vmatpush1.msra.mxu0 0.0
        %1138 = vmatprep.subr.mxu0 0.0
        %1139 = vmatpush1.msra.mxu0 0.0
        %1140 = vmatprep.subr.mxu0 0.0
        %1141 = vmatpush1.msra.mxu0 0.0
        %1142 = vmatprep.subr.mxu0 0.0
        %1143 = vmatpush1.msra.mxu0 0.0
        %1144 = vmatprep.subr.mxu0 0.0
        %1145 = vmatpush1.msra.mxu0 0.0
        %1146 = vmatprep.mubr.f32.mxu0 0.0
        %1147 = vmatmul.mubr.f32.gmra.mrb[0].mxu0 %v1080
        %v1148 = vpop.f32.mrb[0].mxu0
        %v1149 = vadd.f32 0.0, %v1148
        %v1150 = vpop.f32.mrb[0].mxu0
        %1151 = vdwg.mxu0
        %1153 = vrot.lane.b32.xlu0 %v1149, 8
        %v1154 = vpop.permute.xlu0 %1153
        %vm1156 = vcmask 130112
        %1157 = vst.msk [vmem:[#allocation5] sm:$0xff] %vm1156, %v1154
        %v1158 = vld [vmem:[#allocation4] sm:$0xff]
        %v1159 = vld [vmem:[#allocation2] sm:$0xff]
        %v1160 = vld [vmem:[#allocation3] sm:$0xff]
        %1162 = vrot.lane.b32.xlu0 %v1158, 112
        %v1163 = vpop.permute.xlu0 %1162
        %1165 = vrot.lane.b32.xlu0 %v1159, 112
        %v1166 = vpop.permute.xlu0 %1165
        %v1167 = vsel %vm813, %v1163, 0
        %v1169 = vsel %vm813, %v1166, 0
        %1171 = vmatprep.subr.mxu0 0.0
        %1172 = vmatpush1.xpose.msra.mxu0 %v1169
        %1173 = vmatprep.subr.mxu0 0.0
        %1174 = vmatpush1.xpose.msra.mxu0 0.0
        %1175 = vmatprep.subr.mxu0 0.0
        %1176 = vmatpush1.xpose.msra.mxu0 0.0
        %1177 = vmatprep.subr.mxu0 0.0
        %1178 = vmatpush1.xpose.msra.mxu0 0.0
        %1179 = vmatprep.subr.mxu0 0.0
        %1180 = vmatpush1.xpose.msra.mxu0 0.0
        %1181 = vmatprep.subr.mxu0 0.0
        %1182 = vmatpush1.xpose.msra.mxu0 0.0
        %1183 = vmatprep.subr.mxu0 0.0
        %1184 = vmatpush1.xpose.msra.mxu0 0.0
        %1185 = vmatprep.subr.mxu0 0.0
        %1186 = vmatpush1.xpose.msra.mxu0 0.0
        %1187 = vmatprep.subr.mxu0 0.0
        %1188 = vmatpush1.xpose.msra.mxu0 0.0
        %1189 = vmatprep.subr.mxu0 0.0
        %1190 = vmatpush1.xpose.msra.mxu0 0.0
        %1191 = vmatprep.subr.mxu0 0.0
        %1192 = vmatpush1.xpose.msra.mxu0 0.0
        %1193 = vmatprep.subr.mxu0 0.0
        %1194 = vmatpush1.xpose.msra.mxu0 0.0
        %1195 = vmatprep.subr.mxu0 0.0
        %1196 = vmatpush1.xpose.msra.mxu0 0.0
        %1197 = vmatprep.subr.mxu0 0.0
        %1198 = vmatpush1.xpose.msra.mxu0 0.0
        %1199 = vmatprep.subr.mxu0 0.0
        %1200 = vmatpush1.xpose.msra.mxu0 0.0
        %1201 = vmatprep.subr.mxu0 0.0
        %1202 = vmatpush1.xpose.msra.mxu0 0.0
        %1203 = vmatprep.subr.mxu0 0.0
        %1204 = vmatpush1.xpose.msra.mxu0 0.0
        %1205 = vmatprep.subr.mxu0 0.0
        %1206 = vmatpush1.xpose.msra.mxu0 0.0
        %1207 = vmatprep.subr.mxu0 0.0
        %1208 = vmatpush1.xpose.msra.mxu0 0.0
        %1209 = vmatprep.subr.mxu0 0.0
        %1210 = vmatpush1.xpose.msra.mxu0 0.0
        %1211 = vmatprep.subr.mxu0 0.0
        %1212 = vmatpush1.xpose.msra.mxu0 0.0
        %1213 = vmatprep.subr.mxu0 0.0
        %1214 = vmatpush1.xpose.msra.mxu0 0.0
        %1215 = vmatprep.subr.mxu0 0.0
        %1216 = vmatpush1.xpose.msra.mxu0 0.0
        %1217 = vmatprep.subr.mxu0 0.0
        %1218 = vmatpush1.xpose.msra.mxu0 0.0
        %1219 = vmatprep.subr.mxu0 0.0
        %1220 = vmatpush1.xpose.msra.mxu0 0.0
        %1221 = vmatprep.subr.mxu0 0.0
        %1222 = vmatpush1.xpose.msra.mxu0 0.0
        %1223 = vmatprep.subr.mxu0 0.0
        %1224 = vmatpush1.xpose.msra.mxu0 0.0
        %1225 = vmatprep.subr.mxu0 0.0
        %1226 = vmatpush1.xpose.msra.mxu0 0.0
        %1227 = vmatprep.subr.mxu0 0.0
        %1228 = vmatpush1.xpose.msra.mxu0 0.0
        %1229 = vmatprep.subr.mxu0 0.0
        %1230 = vmatpush1.xpose.msra.mxu0 0.0
        %1231 = vmatprep.subr.mxu0 0.0
        %1232 = vmatpush1.xpose.msra.mxu0 0.0
        %1233 = vmatprep.subr.mxu0 0.0
        %1234 = vmatpush1.xpose.msra.mxu0 0.0
        %1235 = vmatprep.mubr.f32.mxu0 0.0
        %1236 = vmatmul.mubr.f32.gmra.mrb[0].mxu0 %v1167
        %v1237 = vpop.f32.mrb[0].mxu0
        %v1238 = vadd.f32 0.0, %v1237
        %v1239 = vpop.f32.mrb[0].mxu0
        %1240 = vdwg.mxu0
        %v1241 = vsel %vm813, %v1238, -inf
        %1242 = vmax.xlane.f32.xlu0 %v1241
        %v1243 = vpop.xlane.xlu0 %1242
        %v1244 = vsub.f32 %v1238, %v1243
        %v1245 = vmul.f32 %v1244, 1.442695
        %v1246 = vpow.pop %v1245
        %v1247 = vsel %vm813, %v1246, 0.0
        %1248 = vadd.xlane.f32.xlu0 %v1247
        %v1249 = vpop.xlane.xlu0 %1248
        %v1250 = vrcp.pop %v1249
        %v1251 = vmul.f32 %v1249, %v1250
        %v1252 = vsub.f32 2.0, %v1251
        %v1253 = vmul.f32 %v1250, %v1252
        %v1254 = vmul.f32 %v1246, %v1253
        %1256 = vrot.lane.b32.xlu0 %v1160, 112
        %v1257 = vpop.permute.xlu0 %1256
        %v1260 = vsel %vm813, %v1254, 0
        %1262 = vmatprep.subr.mxu0 0.0
        %1263 = vmatpush1.msra.mxu0 %v1257
        %1264 = vmatprep.subr.mxu0 0.0
        %1265 = vmatpush1.msra.mxu0 0.0
        %1266 = vmatprep.subr.mxu0 0.0
        %1267 = vmatpush1.msra.mxu0 0.0
        %1268 = vmatprep.subr.mxu0 0.0
        %1269 = vmatpush1.msra.mxu0 0.0
        %1270 = vmatprep.subr.mxu0 0.0
        %1271 = vmatpush1.msra.mxu0 0.0
        %1272 = vmatprep.subr.mxu0 0.0
        %1273 = vmatpush1.msra.mxu0 0.0
        %1274 = vmatprep.subr.mxu0 0.0
        %1275 = vmatpush1.msra.mxu0 0.0
        %1276 = vmatprep.subr.mxu0 0.0
        %1277 = vmatpush1.msra.mxu0 0.0
        %1278 = vmatprep.subr.mxu0 0.0
        %1279 = vmatpush1.msra.mxu0 0.0
        %1280 = vmatprep.subr.mxu0 0.0
        %1281 = vmatpush1.msra.mxu0 0.0
        %1282 = vmatprep.subr.mxu0 0.0
        %1283 = vmatpush1.msra.mxu0 0.0
        %1284 = vmatprep.subr.mxu0 0.0
        %1285 = vmatpush1.msra.mxu0 0.0
        %1286 = vmatprep.subr.mxu0 0.0
        %1287 = vmatpush1.msra.mxu0 0.0
        %1288 = vmatprep.subr.mxu0 0.0
        %1289 = vmatpush1.msra.mxu0 0.0
        %1290 = vmatprep.subr.mxu0 0.0
        %1291 = vmatpush1.msra.mxu0 0.0
        %1292 = vmatprep.subr.mxu0 0.0
        %1293 = vmatpush1.msra.mxu0 0.0
        %1294 = vmatprep.subr.mxu0 0.0
        %1295 = vmatpush1.msra.mxu0 0.0
        %1296 = vmatprep.subr.mxu0 0.0
        %1297 = vmatpush1.msra.mxu0 0.0
        %1298 = vmatprep.subr.mxu0 0.0
        %1299 = vmatpush1.msra.mxu0 0.0
        %1300 = vmatprep.subr.mxu0 0.0
        %1301 = vmatpush1.msra.mxu0 0.0
        %1302 = vmatprep.subr.mxu0 0.0
        %1303 = vmatpush1.msra.mxu0 0.0
        %1304 = vmatprep.subr.mxu0 0.0
        %1305 = vmatpush1.msra.mxu0 0.0
        %1306 = vmatprep.subr.mxu0 0.0
        %1307 = vmatpush1.msra.mxu0 0.0
        %1308 = vmatprep.subr.mxu0 0.0
        %1309 = vmatpush1.msra.mxu0 0.0
        %1310 = vmatprep.subr.mxu0 0.0
        %1311 = vmatpush1.msra.mxu0 0.0
        %1312 = vmatprep.subr.mxu0 0.0
        %1313 = vmatpush1.msra.mxu0 0.0
        %1314 = vmatprep.subr.mxu0 0.0
        %1315 = vmatpush1.msra.mxu0 0.0
        %1316 = vmatprep.subr.mxu0 0.0
        %1317 = vmatpush1.msra.mxu0 0.0
        %1318 = vmatprep.subr.mxu0 0.0
        %1319 = vmatpush1.msra.mxu0 0.0
        %1320 = vmatprep.subr.mxu0 0.0
        %1321 = vmatpush1.msra.mxu0 0.0
        %1322 = vmatprep.subr.mxu0 0.0
        %1323 = vmatpush1.msra.mxu0 0.0
        %1324 = vmatprep.subr.mxu0 0.0
        %1325 = vmatpush1.msra.mxu0 0.0
        %1326 = vmatprep.mubr.f32.mxu0 0.0
        %1327 = vmatmul.mubr.f32.gmra.mrb[0].mxu0 %v1260
        %v1328 = vpop.f32.mrb[0].mxu0
        %v1329 = vadd.f32 0.0, %v1328
        %v1330 = vpop.f32.mrb[0].mxu0
        %1331 = vdwg.mxu0
        %1333 = vrot.lane.b32.xlu0 %v1329, 16
        %v1334 = vpop.permute.xlu0 %1333
        %vm1336 = vcmask 195712
        %1337 = vst.msk [vmem:[#allocation5] sm:$0xff] %vm1336, %v1334
        %v1338 = vld [vmem:[#allocation4] sm:$0xff]
        %v1339 = vld [vmem:[#allocation2] sm:$0xff]
        %v1340 = vld [vmem:[#allocation3] sm:$0xff]
        %1342 = vrot.lane.b32.xlu0 %v1338, 104
        %v1343 = vpop.permute.xlu0 %1342
        %1345 = vrot.lane.b32.xlu0 %v1339, 104
        %v1346 = vpop.permute.xlu0 %1345
        %v1347 = vsel %vm813, %v1343, 0
        %v1349 = vsel %vm813, %v1346, 0
        %1351 = vmatprep.subr.mxu0 0.0
        %1352 = vmatpush1.xpose.msra.mxu0 %v1349
        %1353 = vmatprep.subr.mxu0 0.0
        %1354 = vmatpush1.xpose.msra.mxu0 0.0
        %1355 = vmatprep.subr.mxu0 0.0
        %1356 = vmatpush1.xpose.msra.mxu0 0.0
        %1357 = vmatprep.subr.mxu0 0.0
        %1358 = vmatpush1.xpose.msra.mxu0 0.0
        %1359 = vmatprep.subr.mxu0 0.0
        %1360 = vmatpush1.xpose.msra.mxu0 0.0
        %1361 = vmatprep.subr.mxu0 0.0
        %1362 = vmatpush1.xpose.msra.mxu0 0.0
        %1363 = vmatprep.subr.mxu0 0.0
        %1364 = vmatpush1.xpose.msra.mxu0 0.0
        %1365 = vmatprep.subr.mxu0 0.0
        %1366 = vmatpush1.xpose.msra.mxu0 0.0
        %1367 = vmatprep.subr.mxu0 0.0
        %1368 = vmatpush1.xpose.msra.mxu0 0.0
        %1369 = vmatprep.subr.mxu0 0.0
        %1370 = vmatpush1.xpose.msra.mxu0 0.0
        %1371 = vmatprep.subr.mxu0 0.0
        %1372 = vmatpush1.xpose.msra.mxu0 0.0
        %1373 = vmatprep.subr.mxu0 0.0
        %1374 = vmatpush1.xpose.msra.mxu0 0.0
        %1375 = vmatprep.subr.mxu0 0.0
        %1376 = vmatpush1.xpose.msra.mxu0 0.0
        %1377 = vmatprep.subr.mxu0 0.0
        %1378 = vmatpush1.xpose.msra.mxu0 0.0
        %1379 = vmatprep.subr.mxu0 0.0
        %1380 = vmatpush1.xpose.msra.mxu0 0.0
        %1381 = vmatprep.subr.mxu0 0.0
        %1382 = vmatpush1.xpose.msra.mxu0 0.0
        %1383 = vmatprep.subr.mxu0 0.0
        %1384 = vmatpush1.xpose.msra.mxu0 0.0
        %1385 = vmatprep.subr.mxu0 0.0
        %1386 = vmatpush1.xpose.msra.mxu0 0.0
        %1387 = vmatprep.subr.mxu0 0.0
        %1388 = vmatpush1.xpose.msra.mxu0 0.0
        %1389 = vmatprep.subr.mxu0 0.0
        %1390 = vmatpush1.xpose.msra.mxu0 0.0
        %1391 = vmatprep.subr.mxu0 0.0
        %1392 = vmatpush1.xpose.msra.mxu0 0.0
        %1393 = vmatprep.subr.mxu0 0.0
        %1394 = vmatpush1.xpose.msra.mxu0 0.0
        %1395 = vmatprep.subr.mxu0 0.0
        %1396 = vmatpush1.xpose.msra.mxu0 0.0
        %1397 = vmatprep.subr.mxu0 0.0
        %1398 = vmatpush1.xpose.msra.mxu0 0.0
        %1399 = vmatprep.subr.mxu0 0.0
        %1400 = vmatpush1.xpose.msra.mxu0 0.0
        %1401 = vmatprep.subr.mxu0 0.0
        %1402 = vmatpush1.xpose.msra.mxu0 0.0
        %1403 = vmatprep.subr.mxu0 0.0
        %1404 = vmatpush1.xpose.msra.mxu0 0.0
        %1405 = vmatprep.subr.mxu0 0.0
        %1406 = vmatpush1.xpose.msra.mxu0 0.0
        %1407 = vmatprep.subr.mxu0 0.0
        %1408 = vmatpush1.xpose.msra.mxu0 0.0
        %1409 = vmatprep.subr.mxu0 0.0
        %1410 = vmatpush1.xpose.msra.mxu0 0.0
        %1411 = vmatprep.subr.mxu0 0.0
        %1412 = vmatpush1.xpose.msra.mxu0 0.0
        %1413 = vmatprep.subr.mxu0 0.0
        %1414 = vmatpush1.xpose.msra.mxu0 0.0
        %1415 = vmatprep.mubr.f32.mxu0 0.0
        %1416 = vmatmul.mubr.f32.gmra.mrb[0].mxu0 %v1347
        %v1417 = vpop.f32.mrb[0].mxu0
        %v1418 = vadd.f32 0.0, %v1417
        %v1419 = vpop.f32.mrb[0].mxu0
        %1420 = vdwg.mxu0
        %v1421 = vsel %vm813, %v1418, -inf
        %1422 = vmax.xlane.f32.xlu0 %v1421
        %v1423 = vpop.xlane.xlu0 %1422
        %v1424 = vsub.f32 %v1418, %v1423
        %v1425 = vmul.f32 %v1424, 1.442695
        %v1426 = vpow.pop %v1425
        %v1427 = vsel %vm813, %v1426, 0.0
        %1428 = vadd.xlane.f32.xlu0 %v1427
        %v1429 = vpop.xlane.xlu0 %1428
        %v1430 = vrcp.pop %v1429
        %v1431 = vmul.f32 %v1429, %v1430
        %v1432 = vsub.f32 2.0, %v1431
        %v1433 = vmul.f32 %v1430, %v1432
        %v1434 = vmul.f32 %v1426, %v1433
        %1436 = vrot.lane.b32.xlu0 %v1340, 104
        %v1437 = vpop.permute.xlu0 %1436
        %v1440 = vsel %vm813, %v1434, 0
        %1442 = vmatprep.subr.mxu0 0.0
        %1443 = vmatpush1.msra.mxu0 %v1437
        %1444 = vmatprep.subr.mxu0 0.0
        %1445 = vmatpush1.msra.mxu0 0.0
        %1446 = vmatprep.subr.mxu0 0.0
        %1447 = vmatpush1.msra.mxu0 0.0
        %1448 = vmatprep.subr.mxu0 0.0
        %1449 = vmatpush1.msra.mxu0 0.0
        %1450 = vmatprep.subr.mxu0 0.0
        %1451 = vmatpush1.msra.mxu0 0.0
        %1452 = vmatprep.subr.mxu0 0.0
        %1453 = vmatpush1.msra.mxu0 0.0
        %1454 = vmatprep.subr.mxu0 0.0
        %1455 = vmatpush1.msra.mxu0 0.0
        %1456 = vmatprep.subr.mxu0 0.0
        %1457 = vmatpush1.msra.mxu0 0.0
        %1458 = vmatprep.subr.mxu0 0.0
        %1459 = vmatpush1.msra.mxu0 0.0
        %1460 = vmatprep.subr.mxu0 0.0
        %1461 = vmatpush1.msra.mxu0 0.0
        %1462 = vmatprep.subr.mxu0 0.0
        %1463 = vmatpush1.msra.mxu0 0.0
        %1464 = vmatprep.subr.mxu0 0.0
        %1465 = vmatpush1.msra.mxu0 0.0
        %1466 = vmatprep.subr.mxu0 0.0
        %1467 = vmatpush1.msra.mxu0 0.0
        %1468 = vmatprep.subr.mxu0 0.0
        %1469 = vmatpush1.msra.mxu0 0.0
        %1470 = vmatprep.subr.mxu0 0.0
        %1471 = vmatpush1.msra.mxu0 0.0
        %1472 = vmatprep.subr.mxu0 0.0
        %1473 = vmatpush1.msra.mxu0 0.0
        %1474 = vmatprep.subr.mxu0 0.0
        %1475 = vmatpush1.msra.mxu0 0.0
        %1476 = vmatprep.subr.mxu0 0.0
        %1477 = vmatpush1.msra.mxu0 0.0
        %1478 = vmatprep.subr.mxu0 0.0
        %1479 = vmatpush1.msra.mxu0 0.0
        %1480 = vmatprep.subr.mxu0 0.0
        %1481 = vmatpush1.msra.mxu0 0.0
        %1482 = vmatprep.subr.mxu0 0.0
        %1483 = vmatpush1.msra.mxu0 0.0
        %1484 = vmatprep.subr.mxu0 0.0
        %1485 = vmatpush1.msra.mxu0 0.0
        %1486 = vmatprep.subr.mxu0 0.0
        %1487 = vmatpush1.msra.mxu0 0.0
        %1488 = vmatprep.subr.mxu0 0.0
        %1489 = vmatpush1.msra.mxu0 0.0
        %1490 = vmatprep.subr.mxu0 0.0
        %1491 = vmatpush1.msra.mxu0 0.0
        %1492 = vmatprep.subr.mxu0 0.0
        %1493 = vmatpush1.msra.mxu0 0.0
        %1494 = vmatprep.subr.mxu0 0.0
        %1495 = vmatpush1.msra.mxu0 0.0
        %1496 = vmatprep.subr.mxu0 0.0
        %1497 = vmatpush1.msra.mxu0 0.0
        %1498 = vmatprep.subr.mxu0 0.0
        %1499 = vmatpush1.msra.mxu0 0.0
        %1500 = vmatprep.subr.mxu0 0.0
        %1501 = vmatpush1.msra.mxu0 0.0
        %1502 = vmatprep.subr.mxu0 0.0
        %1503 = vmatpush1.msra.mxu0 0.0
        %1504 = vmatprep.subr.mxu0 0.0
        %1505 = vmatpush1.msra.mxu0 0.0
        %1506 = vmatprep.mubr.f32.mxu0 0.0
        %1507 = vmatmul.mubr.f32.gmra.mrb[0].mxu0 %v1440
        %v1508 = vpop.f32.mrb[0].mxu0
        %v1509 = vadd.f32 0.0, %v1508
        %v1510 = vpop.f32.mrb[0].mxu0
        %1511 = vdwg.mxu0
        %1513 = vrot.lane.b32.xlu0 %v1509, 24
        %v1514 = vpop.permute.xlu0 %1513
        %vm1516 = vcmask 261312
        %1517 = vst.msk [vmem:[#allocation5] sm:$0xff] %vm1516, %v1514
        %v1518 = vld [vmem:[#allocation5] sm:$0xff]
        %v1519 = vld [vmem:[%s9] sm:$0xff]
        %v1520 = vld [vmem:[%s9 + $0x8] sm:$0xff]
        %v1521 = vld [vmem:[%s9 + $0x10] sm:$0xff]
        %v1522 = vld [vmem:[%s9 + $0x18] sm:$0xff]
        %v1523 = vld [vmem:[%s10] sm:$0x1]
        %v1525 = vlaneseq
        %v1526 = vshrl.u32 %v1525, 7
        %v1527 = vsub.s32 0, %v1526
        %v1528 = vrot.slane %v1523, %v1527
        %v1531 = vsel %vm735, %v1518, 0
        %1533 = vmatprep.subr.mxu0 0.0
        %1534 = vmatpush1.msra.mxu0 %v1519
        %1535 = vmatprep.subr.mxu0 0.0
        %1536 = vmatpush1.msra.mxu0 %v1520
        %1537 = vmatprep.subr.mxu0 0.0
        %1538 = vmatpush1.msra.mxu0 %v1521
        %1539 = vmatprep.subr.mxu0 0.0
        %1540 = vmatpush1.msra.mxu0 %v1522
        %1541 = vmatprep.subr.mxu0 0.0
        %1542 = vmatpush1.msra.mxu0 0.0
        %1543 = vmatprep.subr.mxu0 0.0
        %1544 = vmatpush1.msra.mxu0 0.0
        %1545 = vmatprep.subr.mxu0 0.0
        %1546 = vmatpush1.msra.mxu0 0.0
        %1547 = vmatprep.subr.mxu0 0.0
        %1548 = vmatpush1.msra.mxu0 0.0
        %1549 = vmatprep.subr.mxu0 0.0
        %1550 = vmatpush1.msra.mxu0 0.0
        %1551 = vmatprep.subr.mxu0 0.0
        %1552 = vmatpush1.msra.mxu0 0.0
        %1553 = vmatprep.subr.mxu0 0.0
        %1554 = vmatpush1.msra.mxu0 0.0
        %1555 = vmatprep.subr.mxu0 0.0
        %1556 = vmatpush1.msra.mxu0 0.0
        %1557 = vmatprep.subr.mxu0 0.0
        %1558 = vmatpush1.msra.mxu0 0.0
        %1559 = vmatprep.subr.mxu0 0.0
        %1560 = vmatpush1.msra.mxu0 0.0
        %1561 = vmatprep.subr.mxu0 0.0
        %1562 = vmatpush1.msra.mxu0 0.0
        %1563 = vmatprep.subr.mxu0 0.0
        %1564 = vmatpush1.msra.mxu0 0.0
        %1565 = vmatprep.subr.mxu0 0.0
        %1566 = vmatpush1.msra.mxu0 0.0
        %1567 = vmatprep.subr.mxu0 0.0
        %1568 = vmatpush1.msra.mxu0 0.0
        %1569 = vmatprep.subr.mxu0 0.0
        %1570 = vmatpush1.msra.mxu0 0.0
        %1571 = vmatprep.subr.mxu0 0.0
        %1572 = vmatpush1.msra.mxu0 0.0
        %1573 = vmatprep.subr.mxu0 0.0
        %1574 = vmatpush1.msra.mxu0 0.0
        %1575 = vmatprep.subr.mxu0 0.0
        %1576 = vmatpush1.msra.mxu0 0.0
        %1577 = vmatprep.subr.mxu0 0.0
        %1578 = vmatpush1.msra.mxu0 0.0
        %1579 = vmatprep.subr.mxu0 0.0
        %1580 = vmatpush1.msra.mxu0 0.0
        %1581 = vmatprep.subr.mxu0 0.0
        %1582 = vmatpush1.msra.mxu0 0.0
        %1583 = vmatprep.subr.mxu0 0.0
        %1584 = vmatpush1.msra.mxu0 0.0
        %1585 = vmatprep.subr.mxu0 0.0
        %1586 = vmatpush1.msra.mxu0 0.0
        %1587 = vmatprep.subr.mxu0 0.0
        %1588 = vmatpush1.msra.mxu0 0.0
        %1589 = vmatprep.subr.mxu0 0.0
        %1590 = vmatpush1.msra.mxu0 0.0
        %1591 = vmatprep.subr.mxu0 0.0
        %1592 = vmatpush1.msra.mxu0 0.0
        %1593 = vmatprep.subr.mxu0 0.0
        %1594 = vmatpush1.msra.mxu0 0.0
        %1595 = vmatprep.subr.mxu0 0.0
        %1596 = vmatpush1.msra.mxu0 0.0
        %1597 = vmatprep.mubr.f32.mxu0 0.0
        %1598 = vmatmul.mubr.f32.gmra.mrb[0].mxu0 %v1531
        %v1599 = vpop.f32.mrb[0].mxu0
        %v1600 = vadd.f32 %v1528, %v1599
        %v1601 = vpop.f32.mrb[0].mxu0
        %1602 = vdwg.mxu0
        %1603 = vst.msk [vmem:[%s545] sm:$0xff] %vm735, %v1600
        %s1604 = sand.u32 %s303, 1
        %s1605 = scalar_lea.sflag [#allocation8], %s1604
        %s1606 = sand.u32 %s303, 1
        %s1607 = smul.addr %s1606, 8
        %s1608 = scalar_lea.vmem [#allocation18], %s1607
        // Predicated region
        $region97: #{tpu_custom_call.1} parent=63 // pred_check
          %p1609 = pneg %p313
        $region98: #{tpu_custom_call.1} parent=63 // pred_check_branch
          %1611 = sbr.rel (%p1609) target = $region100
        $region99: #{tpu_custom_call.1} parent=63 // pred_region
          %s1613 = ssub.s32 128, 128
          %1614 = vsyncadd %s1605, %s1613
          %s1615 = sadd.s32 %s38, %s37
          %s1616 = smul.addr %s1615, 128
          %s1617 = scalar_lea.hbm %s11, %s1616
          %s1619 = sshll.u32 %s1608, 4
          %s1620 = int_to_ptr.vmem [resolvable:$true] %s1619
          %1622 = dma.vmem_to_hbm [thread:$0]  %s1620, 128, %s1617, %s1605
        $region100: #{tpu_custom_call.1} parent=63 // pred_fallthru
          _
      $region64: #{tpu_custom_call.1} parent=5 // pred_fallthru
        _
      %p1623 = scmp.le.s32.totalorder 2, %s28
      // Predicated region
      $region101: #{tpu_custom_call.1} parent=5 // pred_check
        %p1624 = pneg %p1623
      $region102: #{tpu_custom_call.1} parent=5 // pred_check_branch
        %1626 = sbr.rel (%p1624) target = $region104
      $region103: #{tpu_custom_call.1} parent=5 // pred_region
        %s1627 = ssub.s32 %s28, 2
        // Predicated region
        $region105: #{tpu_custom_call.1} parent=103 // pred_check
          %p1628 = pneg %p319
        $region106: #{tpu_custom_call.1} parent=103 // pred_check_branch
          %1630 = sbr.rel (%p1628) target = $region108
        $region107: #{tpu_custom_call.1} parent=103 // pred_region
          %s1631 = sand.u32 %s304, 1
          %s1632 = scalar_lea.sflag [#allocation8], %s1631
          %s1633 = sand.u32 %s304, 1
          %s1634 = smul.addr %s1633, 8
          %s1635 = scalar_lea.vmem [#allocation18], %s1634
          %1636 = dma.done %s1632, 128
        $region108: #{tpu_custom_call.1} parent=103 // pred_fallthru
          _
      $region104: #{tpu_custom_call.1} parent=5 // pred_fallthru
        _
    $region6: #{tpu_custom_call.1} parent=1 // loop_footer
      %s32 = sadd.s32 1, %s28
    $region7: #{tpu_custom_call.1} parent=1 // loop_footer_branch
      %27 = sbr.rel target = $region3
    $region8: #{tpu_custom_call.1} parent=1 // loop_exit
      _
    %1637 = vsyncpa [#allocation7], 1
    %s1638 = scalar_lea.sflag [#allocation7], 1
    %1639 = vsyncpa %s1638, 1
    %1640 = vsyncpa [#allocation10], 1
    %s1641 = scalar_lea.sflag [#allocation10], 1
    %1642 = vsyncpa %s1641, 1
    %1643 = vsyncpa [#allocation13], 1
    %1644 = vsyncpa [#allocation16], 1
    %1645 = vsyncpa [#allocation8], 1
    %s1646 = scalar_lea.sflag [#allocation8], 1
    %1647 = vsyncpa %s1646, 1

</llo_original>
